<compile_context>
chip_gen: v5e
topology: v5e:2x2
jax: 0.10.0
libtpu: 0.0.40
codegen_flags: <defaults>
</compile_context>

<pallas_src>
import functools
import numpy as np
import jax
import jax.numpy as jnp
from jax.experimental import pallas as pl
from jax.experimental.pallas import tpu as pltpu

# ----------------------- config (consistent with the module) ------------------
IMG_SIZE = 256          # signal length L
PATCH = 32              # patch_size
EMBED = 32              # encoder embed_dim
DEPTH = 2               # encoder depth
HEADS = 4               # encoder num_heads
DEC_EMBED = 16          # decoder embed_dim
DEC_DEPTH = 2           # decoder depth
DEC_HEADS = 4           # decoder num_heads
MLP_RATIO = 4.0
MASK_RATIO = 0.75
NUM_PATCHES = IMG_SIZE // PATCH   # 8

LN_EPS = 1e-5           # nn.LayerNorm default (transformer norms)
PE_EPS = 1e-6           # patchEmbed LayerNorm eps


# ----------------------------- in-kernel helpers ------------------------------
def _ln(x, g, b, eps):
    mean = jnp.mean(x, axis=-1, keepdims=True)
    var = jnp.mean((x - mean) ** 2, axis=-1, keepdims=True)
    return (x - mean) * jax.lax.rsqrt(var + eps) * g + b


def _erf(z):
    # Abramowitz & Stegun 7.1.26 (|err| < 1.5e-7); lax.erf has no Mosaic lowering.
    p = 0.3275911
    a1, a2, a3, a4, a5 = (0.254829592, -0.284496736, 1.421413741,
                          -1.453152027, 1.061405429)
    az = jnp.abs(z)
    t = 1.0 / (1.0 + p * az)
    poly = ((((a5 * t + a4) * t + a3) * t + a2) * t + a1) * t
    r = 1.0 - poly * jnp.exp(-az * az)
    return jnp.where(z >= 0.0, r, -r)


def _gelu(x):
    # nn.GELU() (exact erf form), evaluated via the polynomial erf above.
    return 0.5 * x * (1.0 + _erf(x * np.float32(1.0 / np.sqrt(2.0))))


def _softmax_rows(s):
    # Exact divide (scores are at most 9x9) for parity with torch.softmax.
    m = jnp.max(s, axis=-1, keepdims=True)
    p = jnp.exp(s - m)
    return p / jnp.sum(p, axis=-1, keepdims=True)


def _block_step(x, n1g, n1b, qkvw, qkvb, pw, pb, n2g, n2b, f1w, f1b, f2w, f2b,
                *, heads, tile_b, n_tok):
    """One pre-norm transformer block on a batch-folded (tile_b*n_tok, D) slab."""
    D = x.shape[-1]
    hd = D // heads
    scale = np.float32(hd) ** -0.5

    # Attention branch: one lane-dense QKV matmul over all folded rows.
    h = _ln(x, n1g, n1b, LN_EPS)
    qkv = jnp.dot(h, qkvw, preferred_element_type=jnp.float32) + qkvb   # (rows,3D)
    attn_parts = []
    for bb in range(tile_b):                       # static tiny batch-in-tile loop
        r0 = bb * n_tok
        qkv_b = qkv[r0:r0 + n_tok, :]
        acc = None
        for hh in range(heads):                    # static head loop
            q = qkv_b[:, hh * hd:(hh + 1) * hd] * scale      # scale folded into q
            k = qkv_b[:, D + hh * hd:D + (hh + 1) * hd]
            v = qkv_b[:, 2 * D + hh * hd:2 * D + (hh + 1) * hd]
            s = jax.lax.dot_general(q, k, (((1,), (1,)), ((), ())),
                                    preferred_element_type=jnp.float32)
            p = _softmax_rows(s)
            o_h = jnp.dot(p, v, preferred_element_type=jnp.float32)
            # concat(o_h) @ W_proj  ==  sum_h o_h @ W_proj[h]  (pw pre-split per head)
            c = jnp.dot(o_h, pw[hh], preferred_element_type=jnp.float32)
            acc = c if acc is None else acc + c
        attn_parts.append(acc)
    attn = attn_parts[0] if tile_b == 1 else jnp.concatenate(attn_parts, axis=0)
    x = x + attn + pb

    # MLP branch: full-slab matmuls.
    h2 = _ln(x, n2g, n2b, LN_EPS)
    h2 = jnp.dot(h2, f1w, preferred_element_type=jnp.float32) + f1b
    h2 = _gelu(h2)
    x = x + jnp.dot(h2, f2w, preferred_element_type=jnp.float32) + f2b
    return x


# ----------------------------- Pallas kernels ---------------------------------
def _stem_kernel(xp_ref, peg_ref, peb_ref, tw1w_ref, tw1b_ref, tw2w_ref, tw2b_ref,
                 fcw_ref, fcb_ref, ng_ref, nb_ref, pos_ref,
                 emb_ref, info_ref):
    """patchEmbed LN + TimeSeriesWeighting + fc + norm + pos-embed (one batch tile)."""
    xp = xp_ref[0]                                          # (rows, PATCH)
    xn = _ln(xp, peg_ref[...], peb_ref[...], PE_EPS)        # patchEmbed LayerNorm
    # TimeSeriesWeighting: Linear -> ReLU -> Linear(->1) as a lane reduction.
    h = jnp.dot(xn, tw1w_ref[...], preferred_element_type=jnp.float32) + tw1b_ref[...]
    h = jnp.maximum(h, 0.0)
    info = jnp.sum(h * tw2w_ref[...], axis=-1, keepdims=True) + tw2b_ref[...]
    info_ref[0] = info                                      # (rows, 1)
    # encoder embedding: fc -> norm -> + pos_embed[:, 1:, :]
    x = jnp.dot(xn, fcw_ref[...], preferred_element_type=jnp.float32) + fcb_ref[...]
    x = _ln(x, ng_ref[...], nb_ref[...], LN_EPS)
    emb_ref[0] = x + pos_ref[0]


def _encoder_kernel(x_ref,
                    n1g_ref, n1b_ref, qkvw_ref, qkvb_ref, pw_ref, pb_ref,
                    n2g_ref, n2b_ref, f1w_ref, f1b_ref, f2w_ref, f2b_ref,
                    ng_ref, nb_ref, dew_ref, deb_ref,
                    o_ref, acc_ref, *, heads, tile_b, n_tok):
    """All encoder blocks (depth on grid axis 1) + final norm + decoder_embed."""
    d = pl.program_id(1)

    @pl.when(d == 0)
    def _():
        acc_ref[...] = x_ref[0]                 # load activation into resident scratch

    x = _block_step(acc_ref[...],
                    n1g_ref[0], n1b_ref[0], qkvw_ref[0], qkvb_ref[0],
                    pw_ref[0], pb_ref[0], n2g_ref[0], n2b_ref[0],
                    f1w_ref[0], f1b_ref[0], f2w_ref[0], f2b_ref[0],
                    heads=heads, tile_b=tile_b, n_tok=n_tok)
    acc_ref[...] = x

    @pl.when(d == pl.num_programs(1) - 1)
    def _():
        xn = _ln(x, ng_ref[...], nb_ref[...], LN_EPS)
        o_ref[0] = (jnp.dot(xn, dew_ref[...], preferred_element_type=jnp.float32)
                    + deb_ref[...])


def _decoder_kernel(x_ref,
                    n1g_ref, n1b_ref, qkvw_ref, qkvb_ref, pw_ref, pb_ref,
                    n2g_ref, n2b_ref, f1w_ref, f1b_ref, f2w_ref, f2b_ref,
                    o_ref, *, heads, tile_b, n_tok):
    """All decoder blocks; the output block doubles as the resident accumulator."""
    d = pl.program_id(1)

    @pl.when(d == 0)
    def _():
        o_ref[0] = x_ref[0]

    x = _block_step(o_ref[0],
                    n1g_ref[0], n1b_ref[0], qkvw_ref[0], qkvb_ref[0],
                    pw_ref[0], pb_ref[0], n2g_ref[0], n2b_ref[0],
                    f1w_ref[0], f1b_ref[0], f2w_ref[0], f2b_ref[0],
                    heads=heads, tile_b=tile_b, n_tok=n_tok)
    o_ref[0] = x


def _head_kernel(x_ref, g_ref, b_ref, w_ref, wb_ref, tgt_ref, msk_ref,
                 pred_ref, loss_ref):
    """decoder_norm + decoder_pred + masked-MSE loss, vectorized over B*N rows."""
    xn = _ln(x_ref[...], g_ref[...], b_ref[...], LN_EPS)
    pr = jnp.dot(xn, w_ref[...], preferred_element_type=jnp.float32) + wb_ref[...]
    pred_ref[...] = pr                                       # (B*N, PATCH)
    d = pr - tgt_ref[...]
    per_patch = jnp.mean(d * d, axis=-1, keepdims=True)      # (B*N, 1)
    m = msk_ref[...]                                          # (B*N, 1)
    num = jnp.sum(per_patch * m)
    den = jnp.sum(m)
    loss_ref[0, 0] = num / jnp.maximum(den, 1e-6)            # scalar via SMEM


# ----------------------------- wrappers ---------------------------------------
def _rep(shape):
    """BlockSpec for a weight identical for every grid step (any grid arity)."""
    idx = tuple(0 for _ in shape)
    return pl.BlockSpec(shape, lambda *_, _idx=idx: _idx)


def _depth_spec(shape):
    """BlockSpec for a (DEPTH, ...)-stacked weight, indexed by the depth axis."""
    blk = (1,) + tuple(shape[1:])
    zeros = (0,) * (len(shape) - 1)
    return pl.BlockSpec(blk, lambda t, d, _z=zeros: (d,) + _z)


def _row(v):
    return jnp.asarray(v, jnp.float32).reshape(1, -1)


def _num_tiles(batch):
    # >=2-wide "parallel" axis so both v7x TensorCores get work; 1 TC chips: no-op.
    return 2 if (batch >= 2 and batch % 2 == 0) else 1


def _stack_block_weights(blocks, dim, heads):
    hd = dim // heads
    hidden = blocks[0]["fc1_w"].shape[1]

    def stk(key, shape=None):
        ws = [jnp.asarray(b[key], jnp.float32) for b in blocks]
        if shape is not None:
            ws = [w.reshape(shape) for w in ws]
        return jnp.stack(ws, axis=0)

    return (
        stk("norm1_g", (1, dim)), stk("norm1_b", (1, dim)),
        stk("qkv_w"), stk("qkv_b", (1, 3 * dim)),
        stk("proj_w", (heads, hd, dim)), stk("proj_b", (1, dim)),
        stk("norm2_g", (1, dim)), stk("norm2_b", (1, dim)),
        stk("fc1_w"), stk("fc1_b", (1, hidden)),
        stk("fc2_w"), stk("fc2_b", (1, dim)),
    )


def stem_forward(params, x_patch, tiles):
    B, N, P = x_patch.shape
    E = EMBED
    tile_b = B // tiles
    rows = tile_b * N
    xp = x_patch.astype(jnp.float32).reshape(tiles, rows, P)
    pos = jnp.tile(params["pos_embed"][:, 1:, :].astype(jnp.float32),
                   (1, tile_b, 1))                                   # (1, rows, E)
    wargs = (
        _row(params["pe_g"]), _row(params["pe_b"]),
        params["tw_w1"].astype(jnp.float32), _row(params["tw_b1"]),
        params["tw_w2"].astype(jnp.float32).reshape(1, -1), _row(params["tw_b2"]),
        params["fc_w"].astype(jnp.float32), _row(params["fc_b"]),
        _row(params["norm_g"]), _row(params["norm_b"]),
    )
    emb, info = pl.pallas_call(
        _stem_kernel,
        out_shape=(jax.ShapeDtypeStruct((tiles, rows, E), jnp.float32),
                   jax.ShapeDtypeStruct((tiles, rows, 1), jnp.float32)),
        grid=(tiles,),
        in_specs=[pl.BlockSpec((1, rows, P), lambda t: (t, 0, 0))]
                 + [_rep(a.shape) for a in wargs]
                 + [pl.BlockSpec((1, rows, E), lambda t: (0, 0, 0))],
        out_specs=(pl.BlockSpec((1, rows, E), lambda t: (t, 0, 0)),
                   pl.BlockSpec((1, rows, 1), lambda t: (t, 0, 0))),
        compiler_params=pltpu.CompilerParams(dimension_semantics=("parallel",)),
    )(xp, *wargs, pos)
    return emb.reshape(B, N, E), info.reshape(B, N)


def encoder_forward(params, x, tiles):
    """x: (B, T, E).  All encoder blocks + final norm + decoder_embed, one launch."""
    B, T, E = x.shape
    tile_b = B // tiles
    rows = tile_b * T
    Dd = DEC_EMBED
    stacked = _stack_block_weights(params["blocks"], E, HEADS)
    depth = len(params["blocks"])
    epi = (_row(params["norm_g"]), _row(params["norm_b"]),
           params["dec_embed_w"].astype(jnp.float32), _row(params["dec_embed_b"]))
    out = pl.pallas_call(
        functools.partial(_encoder_kernel, heads=HEADS, tile_b=tile_b, n_tok=T),
        out_shape=jax.ShapeDtypeStruct((tiles, rows, Dd), jnp.float32),
        grid=(tiles, depth),
        in_specs=[pl.BlockSpec((1, rows, E), lambda t, d: (t, 0, 0))]
                 + [_depth_spec(a.shape) for a in stacked]
                 + [_rep(a.shape) for a in epi],
        out_specs=pl.BlockSpec((1, rows, Dd), lambda t, d: (t, 0, 0)),
        scratch_shapes=[pltpu.VMEM((rows, E), jnp.float32)],
        compiler_params=pltpu.CompilerParams(
            dimension_semantics=("parallel", "arbitrary")),
    )(x.astype(jnp.float32).reshape(tiles, rows, E), *stacked, *epi)
    return out.reshape(B, T, Dd)


def decoder_forward(params, x, tiles):
    """x: (B, T, Dd).  All decoder blocks, one launch."""
    B, T, D = x.shape
    tile_b = B // tiles
    rows = tile_b * T
    stacked = _stack_block_weights(params["dec_blocks"], D, DEC_HEADS)
    depth = len(params["dec_blocks"])
    out = pl.pallas_call(
        functools.partial(_decoder_kernel, heads=DEC_HEADS, tile_b=tile_b, n_tok=T),
        out_shape=jax.ShapeDtypeStruct((tiles, rows, D), jnp.float32),
        grid=(tiles, depth),
        in_specs=[pl.BlockSpec((1, rows, D), lambda t, d: (t, 0, 0))]
                 + [_depth_spec(a.shape) for a in stacked],
        out_specs=pl.BlockSpec((1, rows, D), lambda t, d: (t, 0, 0)),
        compiler_params=pltpu.CompilerParams(
            dimension_semantics=("parallel", "arbitrary")),
    )(x.astype(jnp.float32).reshape(tiles, rows, D), *stacked)
    return out.reshape(B, T, D)


def decoder_head_and_loss(params, x_tokens, target, mask):
    B, N, Dd = x_tokens.shape
    P = PATCH
    rows = B * N
    wargs = (_row(params["dec_norm_g"]), _row(params["dec_norm_b"]),
             params["dec_pred_w"].astype(jnp.float32), _row(params["dec_pred_b"]))
    pred, loss = pl.pallas_call(
        _head_kernel,
        out_shape=(jax.ShapeDtypeStruct((rows, P), jnp.float32),
                   jax.ShapeDtypeStruct((1, 1), jnp.float32)),
        grid=(1,),
        in_specs=[pl.BlockSpec((rows, Dd), lambda i: (0, 0))]
                 + [_rep(a.shape) for a in wargs]
                 + [pl.BlockSpec((rows, P), lambda i: (0, 0)),
                    pl.BlockSpec((rows, 1), lambda i: (0, 0))],
        out_specs=(pl.BlockSpec((rows, P), lambda i: (0, 0)),
                   pl.BlockSpec(memory_space=pltpu.MemorySpace.SMEM)),
    )(x_tokens.astype(jnp.float32).reshape(rows, Dd), *wargs,
      target.astype(jnp.float32).reshape(rows, P),
      mask.astype(jnp.float32).reshape(rows, 1))
    return pred.reshape(B, N, P), loss[0, 0]


# ----------------------------- parameter init ---------------------------------
def get_1d_sincos_pos_embed(embed_dim, length, cls_token=False):
    pos = np.arange(length, dtype=np.float32)
    omega = np.arange(embed_dim // 2, dtype=np.float32) / (embed_dim / 2.0)
    omega = 1.0 / 10000 ** omega
    out = np.einsum("m,d->md", pos, omega)
    emb = np.concatenate([np.sin(out), np.cos(out)], axis=1)
    if cls_token:
        emb = np.concatenate([np.zeros([1, embed_dim], dtype=np.float32), emb],
                             axis=0)
    return emb.astype(np.float32)


def _xavier(key, fan_in, fan_out):
    lim = float(np.sqrt(6.0 / (fan_in + fan_out)))
    return jax.random.uniform(key, (fan_in, fan_out), jnp.float32, -lim, lim)


def _block_params(key, dim, mlp_ratio):
    ks = jax.random.split(key, 4)
    hidden = int(dim * mlp_ratio)
    return dict(
        norm1_g=jnp.ones((dim,), jnp.float32), norm1_b=jnp.zeros((dim,), jnp.float32),
        qkv_w=_xavier(ks[0], dim, 3 * dim), qkv_b=jnp.zeros((3 * dim,), jnp.float32),
        proj_w=_xavier(ks[1], dim, dim), proj_b=jnp.zeros((dim,), jnp.float32),
        norm2_g=jnp.ones((dim,), jnp.float32), norm2_b=jnp.zeros((dim,), jnp.float32),
        fc1_w=_xavier(ks[2], dim, hidden), fc1_b=jnp.zeros((hidden,), jnp.float32),
        fc2_w=_xavier(ks[3], hidden, dim), fc2_b=jnp.zeros((dim,), jnp.float32),
    )


def init_params(key):
    ks = iter(jax.random.split(key, 64))
    p = {}
    p["pe_g"] = jnp.ones((PATCH,), jnp.float32)
    p["pe_b"] = jnp.zeros((PATCH,), jnp.float32)
    p["tw_w1"] = _xavier(next(ks), PATCH, PATCH // 2)
    p["tw_b1"] = jnp.zeros((PATCH // 2,), jnp.float32)
    p["tw_w2"] = _xavier(next(ks), PATCH // 2, 1)
    p["tw_b2"] = jnp.zeros((1,), jnp.float32)
    p["fc_w"] = _xavier(next(ks), PATCH, EMBED)
    p["fc_b"] = jnp.zeros((EMBED,), jnp.float32)
    p["cls_token"] = 0.02 * jax.random.normal(next(ks), (1, 1, EMBED), jnp.float32)
    p["pos_embed"] = jnp.asarray(
        get_1d_sincos_pos_embed(EMBED, NUM_PATCHES, cls_token=True))[None]
    p["blocks"] = [_block_params(next(ks), EMBED, MLP_RATIO) for _ in range(DEPTH)]
    p["norm_g"] = jnp.ones((EMBED,), jnp.float32)
    p["norm_b"] = jnp.zeros((EMBED,), jnp.float32)
    p["dec_embed_w"] = _xavier(next(ks), EMBED, DEC_EMBED)
    p["dec_embed_b"] = jnp.zeros((DEC_EMBED,), jnp.float32)
    p["mask_token"] = 0.02 * jax.random.normal(next(ks), (1, 1, DEC_EMBED), jnp.float32)
    p["dec_pos_embed"] = jnp.asarray(
        get_1d_sincos_pos_embed(DEC_EMBED, NUM_PATCHES, cls_token=True))[None]
    p["dec_blocks"] = [_block_params(next(ks), DEC_EMBED, MLP_RATIO)
                       for _ in range(DEC_DEPTH)]
    p["dec_norm_g"] = jnp.ones((DEC_EMBED,), jnp.float32)
    p["dec_norm_b"] = jnp.zeros((DEC_EMBED,), jnp.float32)
    p["dec_pred_w"] = _xavier(next(ks), DEC_EMBED, PATCH)
    p["dec_pred_b"] = jnp.zeros((PATCH,), jnp.float32)
    # NOTE: fftWeight, alpha, fc_norm are unused in the reference forward().
    return p


# ----------------------------- model forward ----------------------------------
def forward(params, signals, mask_rng):
    """signals: (B, 1, L).  Returns (pred_img, loss, mask_probs, info_scores)."""
    B, C, L = signals.shape
    assert C == 1 and L == IMG_SIZE
    N = NUM_PATCHES
    tiles = _num_tiles(B)
    # --- fused stem: patchEmbed LN + TimeSeriesWeighting + fc + norm + pos ---
    x_patch_raw = signals.reshape(B, N, PATCH).astype(jnp.float32)
    x_emb, info_scores = stem_forward(params, x_patch_raw, tiles)   # (B,N,E),(B,N)
    mask_probs = jax.nn.sigmoid(info_scores)
    # --- random masking (data-dependent argsort/gather kept in plain JAX) ---
    len_keep = int(N * (1 - MASK_RATIO))
    noise = jax.random.uniform(mask_rng, (B, N))
    ids_shuffle = jnp.argsort(noise, axis=1)
    ids_restore = jnp.argsort(ids_shuffle, axis=1)
    ids_keep = ids_shuffle[:, :len_keep]
    x = jnp.take_along_axis(
        x_emb, jnp.broadcast_to(ids_keep[:, :, None], (B, len_keep, EMBED)), axis=1)
    mask = jnp.ones((B, N), jnp.float32).at[:, :len_keep].set(0.0)
    mask = jnp.take_along_axis(mask, ids_restore, axis=1)
    # --- cls token + fused encoder (all blocks + norm + decoder_embed) ---
    cls_tok = params["cls_token"] + params["pos_embed"][:, :1, :]
    x = jnp.concatenate([jnp.broadcast_to(cls_tok, (B, 1, EMBED)), x], axis=1)
    y = encoder_forward(params, x, tiles)                           # (B, K+1, Dd)
    # --- append mask tokens + unshuffle + pos embed (glue) ---
    n_mask_tok = N + 1 - y.shape[1]
    mask_tokens = jnp.broadcast_to(params["mask_token"], (B, n_mask_tok, DEC_EMBED))
    x_ = jnp.concatenate([y[:, 1:, :], mask_tokens], axis=1)        # (B, N, Dd)
    x_ = jnp.take_along_axis(
        x_, jnp.broadcast_to(ids_restore[:, :, None], (B, N, DEC_EMBED)), axis=1)
    xd = jnp.concatenate([y[:, :1, :], x_], axis=1) + params["dec_pos_embed"]
    # --- fused decoder blocks ---
    xd = decoder_forward(params, xd, tiles)                         # (B, N+1, Dd)
    # --- fused head: decoder_norm + decoder_pred + masked MSE (cls dropped) ---
    pred, loss = decoder_head_and_loss(params, xd[:, 1:, :], x_patch_raw, mask)
    pred_img = pred.reshape(B, 1, N * PATCH)
    return pred_img, loss, mask_probs, info_scores


# ----------------------------------- main --------------------------------------
if __name__ == "__main__":
    key = jax.random.PRNGKey(0)
    pkey, dkey, mkey = jax.random.split(key, 3)
    params = init_params(pkey)
    signals = jax.random.normal(dkey, (2, 1, IMG_SIZE), jnp.float32)   # (B, C, L)
    fwd = jax.jit(forward)
    pred_img, loss, mask_probs, info_scores = jax.block_until_ready(
        fwd(params, signals, mkey))
    assert pred_img.shape == (2, 1, IMG_SIZE)
    assert loss.shape == ()
    assert mask_probs.shape == (2, NUM_PATCHES)
    assert info_scores.shape == (2, NUM_PATCHES)
    assert bool(jnp.isfinite(loss))
    print("KERNEL_OK")
</pallas_src>

<mosaic_0001>
module attributes {stable_mosaic.version = 11 : i64} {
  func.func @_stem_kernel(%arg0: i32, %arg1: memref<1x8x32xf32, #tpu.memory_space<vmem>>, %arg2: memref<1x32xf32, #tpu.memory_space<vmem>>, %arg3: memref<1x32xf32, #tpu.memory_space<vmem>>, %arg4: memref<32x16xf32, #tpu.memory_space<vmem>>, %arg5: memref<1x16xf32, #tpu.memory_space<vmem>>, %arg6: memref<1x16xf32, #tpu.memory_space<vmem>>, %arg7: memref<1x1xf32, #tpu.memory_space<vmem>>, %arg8: memref<32x32xf32, #tpu.memory_space<vmem>>, %arg9: memref<1x32xf32, #tpu.memory_space<vmem>>, %arg10: memref<1x32xf32, #tpu.memory_space<vmem>>, %arg11: memref<1x32xf32, #tpu.memory_space<vmem>>, %arg12: memref<1x8x32xf32, #tpu.memory_space<vmem>>, %arg13: memref<1x8x32xf32, #tpu.memory_space<vmem>>, %arg14: memref<1x8x1xf32, #tpu.memory_space<vmem>>) attributes {dimension_semantics = [#tpu.dimension_semantics<parallel>], iteration_bounds = array<i64: 2>, scalar_prefetch = 0 : i64, scratch_operands = 0 : i64, tpu.core_type = #tpu.core_type<tc>, window_params = [{transform_indices = @transform_0, window_bounds = array<i64: 1, 8, 32>}, {pipeline_mode = #tpu.pipeline_mode<synchronous>, transform_indices = @transform_1, window_bounds = array<i64: 1, 32>}, {pipeline_mode = #tpu.pipeline_mode<synchronous>, transform_indices = @transform_2, window_bounds = array<i64: 1, 32>}, {pipeline_mode = #tpu.pipeline_mode<synchronous>, transform_indices = @transform_3, window_bounds = array<i64: 32, 16>}, {pipeline_mode = #tpu.pipeline_mode<synchronous>, transform_indices = @transform_4, window_bounds = array<i64: 1, 16>}, {pipeline_mode = #tpu.pipeline_mode<synchronous>, transform_indices = @transform_5, window_bounds = array<i64: 1, 16>}, {pipeline_mode = #tpu.pipeline_mode<synchronous>, transform_indices = @transform_6, window_bounds = array<i64: 1, 1>}, {pipeline_mode = #tpu.pipeline_mode<synchronous>, transform_indices = @transform_7, window_bounds = array<i64: 32, 32>}, {pipeline_mode = #tpu.pipeline_mode<synchronous>, transform_indices = @transform_8, window_bounds = array<i64: 1, 32>}, {pipeline_mode = #tpu.pipeline_mode<synchronous>, transform_indices = @transform_9, window_bounds = array<i64: 1, 32>}, {pipeline_mode = #tpu.pipeline_mode<synchronous>, transform_indices = @transform_10, window_bounds = array<i64: 1, 32>}, {pipeline_mode = #tpu.pipeline_mode<synchronous>, transform_indices = @transform_11, window_bounds = array<i64: 1, 8, 32>}, {transform_indices = @transform_12, window_bounds = array<i64: 1, 8, 32>}, {transform_indices = @transform_13, window_bounds = array<i64: 1, 8, 1>}]} {
    %c0 = arith.constant 0 : index
    %c0_0 = arith.constant 0 : index
    %c0_1 = arith.constant 0 : index
    %0 = vector.load %arg1[%c0, %c0_0, %c0_1] : memref<1x8x32xf32, #tpu.memory_space<vmem>>, vector<1x8x32xf32>
    %1 = vector.shape_cast %0 : vector<1x8x32xf32> to vector<8x32xf32>
    %c0_2 = arith.constant 0 : index
    %c0_3 = arith.constant 0 : index
    %2 = vector.load %arg2[%c0_2, %c0_3] : memref<1x32xf32, #tpu.memory_space<vmem>>, vector<1x32xf32>
    %c0_4 = arith.constant 0 : index
    %c0_5 = arith.constant 0 : index
    %3 = vector.load %arg3[%c0_4, %c0_5] : memref<1x32xf32, #tpu.memory_space<vmem>>, vector<1x32xf32>
    %cst = arith.constant dense<0.000000e+00> : vector<8xf32>
    %4 = vector.multi_reduction <add>, %1, %cst [1] : vector<8x32xf32> to vector<8xf32>
    %5 = vector.shape_cast %4 : vector<8xf32> to vector<8x1xf32>
    %cst_6 = arith.constant 3.200000e+01 : f32
    %6 = vector.broadcast %cst_6 : f32 to vector<8x1xf32>
    %7 = arith.divf %5, %6 : vector<8x1xf32>
    %8 = vector.broadcast %7 : vector<8x1xf32> to vector<8x32xf32>
    %9 = arith.subf %1, %8 : vector<8x32xf32>
    %10 = arith.mulf %9, %9 : vector<8x32xf32>
    %cst_7 = arith.constant dense<0.000000e+00> : vector<8xf32>
    %11 = vector.multi_reduction <add>, %10, %cst_7 [1] : vector<8x32xf32> to vector<8xf32>
    %12 = vector.shape_cast %11 : vector<8xf32> to vector<8x1xf32>
    %cst_8 = arith.constant 3.200000e+01 : f32
    %13 = vector.broadcast %cst_8 : f32 to vector<8x1xf32>
    %14 = arith.divf %12, %13 : vector<8x1xf32>
    %15 = vector.broadcast %7 : vector<8x1xf32> to vector<8x32xf32>
    %16 = arith.subf %1, %15 : vector<8x32xf32>
    %cst_9 = arith.constant 9.99999997E-7 : f32
    %17 = vector.broadcast %cst_9 : f32 to vector<8x1xf32>
    %18 = arith.addf %14, %17 : vector<8x1xf32>
    %19 = math.rsqrt %18 : vector<8x1xf32>
    %20 = vector.broadcast %19 : vector<8x1xf32> to vector<8x32xf32>
    %21 = arith.mulf %16, %20 : vector<8x32xf32>
    %22 = vector.broadcast %2 : vector<1x32xf32> to vector<8x32xf32>
    %23 = arith.mulf %21, %22 : vector<8x32xf32>
    %24 = vector.broadcast %3 : vector<1x32xf32> to vector<8x32xf32>
    %25 = arith.addf %23, %24 : vector<8x32xf32>
    %c0_10 = arith.constant 0 : index
    %c0_11 = arith.constant 0 : index
    %26 = vector.load %arg4[%c0_10, %c0_11] : memref<32x16xf32, #tpu.memory_space<vmem>>, vector<32x16xf32>
    %cst_12 = arith.constant dense<0.000000e+00> : vector<8x16xf32>
    %27 = tpu.matmul %25, %26, %cst_12 {dimension_numbers = #tpu.dot_dimension_numbers<[1], [0], [0], [1], [0, 0, 1, 1], [], []>} : vector<8x32xf32>, vector<32x16xf32>, vector<8x16xf32> -> vector<8x16xf32>
    %c0_13 = arith.constant 0 : index
    %c0_14 = arith.constant 0 : index
    %28 = vector.load %arg5[%c0_13, %c0_14] : memref<1x16xf32, #tpu.memory_space<vmem>>, vector<1x16xf32>
    %29 = vector.broadcast %28 : vector<1x16xf32> to vector<8x16xf32>
    %30 = arith.addf %27, %29 : vector<8x16xf32>
    %cst_15 = arith.constant 0.000000e+00 : f32
    %31 = vector.broadcast %cst_15 : f32 to vector<8x16xf32>
    %32 = arith.maximumf %30, %31 : vector<8x16xf32>
    %c0_16 = arith.constant 0 : index
    %c0_17 = arith.constant 0 : index
    %33 = vector.load %arg6[%c0_16, %c0_17] : memref<1x16xf32, #tpu.memory_space<vmem>>, vector<1x16xf32>
    %34 = vector.broadcast %33 : vector<1x16xf32> to vector<8x16xf32>
    %35 = arith.mulf %32, %34 : vector<8x16xf32>
    %cst_18 = arith.constant dense<0.000000e+00> : vector<8xf32>
    %36 = vector.multi_reduction <add>, %35, %cst_18 [1] : vector<8x16xf32> to vector<8xf32>
    %37 = vector.shape_cast %36 : vector<8xf32> to vector<8x1xf32>
    %c0_19 = arith.constant 0 : index
    %c0_20 = arith.constant 0 : index
    %38 = vector.load %arg7[%c0_19, %c0_20] : memref<1x1xf32, #tpu.memory_space<vmem>>, vector<1x1xf32>
    %39 = vector.broadcast %38 : vector<1x1xf32> to vector<8x1xf32>
    %40 = arith.addf %37, %39 : vector<8x1xf32>
    %c0_21 = arith.constant 0 : index
    %c0_22 = arith.constant 0 : index
    %c0_23 = arith.constant 0 : index
    %41 = vector.load %arg14[%c0_21, %c0_22, %c0_23] : memref<1x8x1xf32, #tpu.memory_space<vmem>>, vector<1x8x1xf32>
    %42 = vector.shape_cast %41 : vector<1x8x1xf32> to vector<8x1xf32>
    %43 = vector.shape_cast %40 : vector<8x1xf32> to vector<1x8x1xf32>
    tpu.vector_store %arg14[%c0_21, %c0_22, %c0_23], %43 {strides = array<i32>} : memref<1x8x1xf32, #tpu.memory_space<vmem>>, vector<1x8x1xf32>,
    %c0_24 = arith.constant 0 : index
    %c0_25 = arith.constant 0 : index
    %44 = vector.load %arg8[%c0_24, %c0_25] : memref<32x32xf32, #tpu.memory_space<vmem>>, vector<32x32xf32>
    %cst_26 = arith.constant dense<0.000000e+00> : vector<8x32xf32>
    %45 = tpu.matmul %25, %44, %cst_26 {dimension_numbers = #tpu.dot_dimension_numbers<[1], [0], [0], [1], [0, 0, 1, 1], [], []>} : vector<8x32xf32>, vector<32x32xf32>, vector<8x32xf32> -> vector<8x32xf32>
    %c0_27 = arith.constant 0 : index
    %c0_28 = arith.constant 0 : index
    %46 = vector.load %arg9[%c0_27, %c0_28] : memref<1x32xf32, #tpu.memory_space<vmem>>, vector<1x32xf32>
    %47 = vector.broadcast %46 : vector<1x32xf32> to vector<8x32xf32>
    %48 = arith.addf %45, %47 : vector<8x32xf32>
    %c0_29 = arith.constant 0 : index
    %c0_30 = arith.constant 0 : index
    %49 = vector.load %arg10[%c0_29, %c0_30] : memref<1x32xf32, #tpu.memory_space<vmem>>, vector<1x32xf32>
    %c0_31 = arith.constant 0 : index
    %c0_32 = arith.constant 0 : index
    %50 = vector.load %arg11[%c0_31, %c0_32] : memref<1x32xf32, #tpu.memory_space<vmem>>, vector<1x32xf32>
    %cst_33 = arith.constant dense<0.000000e+00> : vector<8xf32>
    %51 = vector.multi_reduction <add>, %48, %cst_33 [1] : vector<8x32xf32> to vector<8xf32>
    %52 = vector.shape_cast %51 : vector<8xf32> to vector<8x1xf32>
    %cst_34 = arith.constant 3.200000e+01 : f32
    %53 = vector.broadcast %cst_34 : f32 to vector<8x1xf32>
    %54 = arith.divf %52, %53 : vector<8x1xf32>
    %55 = vector.broadcast %54 : vector<8x1xf32> to vector<8x32xf32>
    %56 = arith.subf %48, %55 : vector<8x32xf32>
    %57 = arith.mulf %56, %56 : vector<8x32xf32>
    %cst_35 = arith.constant dense<0.000000e+00> : vector<8xf32>
    %58 = vector.multi_reduction <add>, %57, %cst_35 [1] : vector<8x32xf32> to vector<8xf32>
    %59 = vector.shape_cast %58 : vector<8xf32> to vector<8x1xf32>
    %cst_36 = arith.constant 3.200000e+01 : f32
    %60 = vector.broadcast %cst_36 : f32 to vector<8x1xf32>
    %61 = arith.divf %59, %60 : vector<8x1xf32>
    %62 = vector.broadcast %54 : vector<8x1xf32> to vector<8x32xf32>
    %63 = arith.subf %48, %62 : vector<8x32xf32>
    %cst_37 = arith.constant 9.99999974E-6 : f32
    %64 = vector.broadcast %cst_37 : f32 to vector<8x1xf32>
    %65 = arith.addf %61, %64 : vector<8x1xf32>
    %66 = math.rsqrt %65 : vector<8x1xf32>
    %67 = vector.broadcast %66 : vector<8x1xf32> to vector<8x32xf32>
    %68 = arith.mulf %63, %67 : vector<8x32xf32>
    %69 = vector.broadcast %49 : vector<1x32xf32> to vector<8x32xf32>
    %70 = arith.mulf %68, %69 : vector<8x32xf32>
    %71 = vector.broadcast %50 : vector<1x32xf32> to vector<8x32xf32>
    %72 = arith.addf %70, %71 : vector<8x32xf32>
    %c0_38 = arith.constant 0 : index
    %c0_39 = arith.constant 0 : index
    %c0_40 = arith.constant 0 : index
    %73 = vector.load %arg12[%c0_38, %c0_39, %c0_40] : memref<1x8x32xf32, #tpu.memory_space<vmem>>, vector<1x8x32xf32>
    %74 = vector.shape_cast %73 : vector<1x8x32xf32> to vector<8x32xf32>
    %75 = arith.addf %72, %74 : vector<8x32xf32>
    %c0_41 = arith.constant 0 : index
    %c0_42 = arith.constant 0 : index
    %c0_43 = arith.constant 0 : index
    %76 = vector.load %arg13[%c0_41, %c0_42, %c0_43] : memref<1x8x32xf32, #tpu.memory_space<vmem>>, vector<1x8x32xf32>
    %77 = vector.shape_cast %76 : vector<1x8x32xf32> to vector<8x32xf32>
    %78 = vector.shape_cast %75 : vector<8x32xf32> to vector<1x8x32xf32>
    tpu.vector_store %arg13[%c0_41, %c0_42, %c0_43], %78 {strides = array<i32>} : memref<1x8x32xf32, #tpu.memory_space<vmem>>, vector<1x8x32xf32>,
    return
  }
  func.func @transform_0(%arg0: i32) -> (i32, i32, i32) {
    %c0_i32 = arith.constant 0 : i32
    %c0_i32_0 = arith.constant 0 : i32
    %c0_i32_1 = arith.constant 0 : i32
    return %arg0, %c0_i32, %c0_i32_0 : i32, i32, i32
  }
  func.func @transform_1(%arg0: i32) -> (i32, i32) {
    %c0_i32 = arith.constant 0 : i32
    %c0_i32_0 = arith.constant 0 : i32
    %c0_i32_1 = arith.constant 0 : i32
    return %c0_i32, %c0_i32_0 : i32, i32
  }
  func.func @transform_2(%arg0: i32) -> (i32, i32) {
    %c0_i32 = arith.constant 0 : i32
    %c0_i32_0 = arith.constant 0 : i32
    %c0_i32_1 = arith.constant 0 : i32
    return %c0_i32, %c0_i32_0 : i32, i32
  }
  func.func @transform_3(%arg0: i32) -> (i32, i32) {
    %c0_i32 = arith.constant 0 : i32
    %c0_i32_0 = arith.constant 0 : i32
    %c0_i32_1 = arith.constant 0 : i32
    return %c0_i32, %c0_i32_0 : i32, i32
  }
  func.func @transform_4(%arg0: i32) -> (i32, i32) {
    %c0_i32 = arith.constant 0 : i32
    %c0_i32_0 = arith.constant 0 : i32
    %c0_i32_1 = arith.constant 0 : i32
    return %c0_i32, %c0_i32_0 : i32, i32
  }
  func.func @transform_5(%arg0: i32) -> (i32, i32) {
    %c0_i32 = arith.constant 0 : i32
    %c0_i32_0 = arith.constant 0 : i32
    %c0_i32_1 = arith.constant 0 : i32
    return %c0_i32, %c0_i32_0 : i32, i32
  }
  func.func @transform_6(%arg0: i32) -> (i32, i32) {
    %c0_i32 = arith.constant 0 : i32
    %c0_i32_0 = arith.constant 0 : i32
    %c0_i32_1 = arith.constant 0 : i32
    return %c0_i32, %c0_i32_0 : i32, i32
  }
  func.func @transform_7(%arg0: i32) -> (i32, i32) {
    %c0_i32 = arith.constant 0 : i32
    %c0_i32_0 = arith.constant 0 : i32
    %c0_i32_1 = arith.constant 0 : i32
    return %c0_i32, %c0_i32_0 : i32, i32
  }
  func.func @transform_8(%arg0: i32) -> (i32, i32) {
    %c0_i32 = arith.constant 0 : i32
    %c0_i32_0 = arith.constant 0 : i32
    %c0_i32_1 = arith.constant 0 : i32
    return %c0_i32, %c0_i32_0 : i32, i32
  }
  func.func @transform_9(%arg0: i32) -> (i32, i32) {
    %c0_i32 = arith.constant 0 : i32
    %c0_i32_0 = arith.constant 0 : i32
    %c0_i32_1 = arith.constant 0 : i32
    return %c0_i32, %c0_i32_0 : i32, i32
  }
  func.func @transform_10(%arg0: i32) -> (i32, i32) {
    %c0_i32 = arith.constant 0 : i32
    %c0_i32_0 = arith.constant 0 : i32
    %c0_i32_1 = arith.constant 0 : i32
    return %c0_i32, %c0_i32_0 : i32, i32
  }
  func.func @transform_11(%arg0: i32) -> (i32, i32, i32) {
    %c0_i32 = arith.constant 0 : i32
    %c0_i32_0 = arith.constant 0 : i32
    %c0_i32_1 = arith.constant 0 : i32
    %c0_i32_2 = arith.constant 0 : i32
    return %c0_i32, %c0_i32_0, %c0_i32_1 : i32, i32, i32
  }
  func.func @transform_12(%arg0: i32) -> (i32, i32, i32) {
    %c0_i32 = arith.constant 0 : i32
    %c0_i32_0 = arith.constant 0 : i32
    %c0_i32_1 = arith.constant 0 : i32
    return %arg0, %c0_i32, %c0_i32_0 : i32, i32, i32
  }
  func.func @transform_13(%arg0: i32) -> (i32, i32, i32) {
    %c0_i32 = arith.constant 0 : i32
    %c0_i32_0 = arith.constant 0 : i32
    %c0_i32_1 = arith.constant 0 : i32
    return %arg0, %c0_i32, %c0_i32_0 : i32, i32, i32
  }
}

module attributes {stable_mosaic.version = 11 : i64} {
  func.func @_encoder_kernel(%arg0: i32, %arg1: i32, %arg2: memref<1x3x32xf32, #tpu.memory_space<vmem>>, %arg3: memref<1x1x32xf32, #tpu.memory_space<vmem>>, %arg4: memref<1x1x32xf32, #tpu.memory_space<vmem>>, %arg5: memref<1x32x96xf32, #tpu.memory_space<vmem>>, %arg6: memref<1x1x96xf32, #tpu.memory_space<vmem>>, %arg7: memref<1x4x8x32xf32, #tpu.memory_space<vmem>>, %arg8: memref<1x1x32xf32, #tpu.memory_space<vmem>>, %arg9: memref<1x1x32xf32, #tpu.memory_space<vmem>>, %arg10: memref<1x1x32xf32, #tpu.memory_space<vmem>>, %arg11: memref<1x32x128xf32, #tpu.memory_space<vmem>>, %arg12: memref<1x1x128xf32, #tpu.memory_space<vmem>>, %arg13: memref<1x128x32xf32, #tpu.memory_space<vmem>>, %arg14: memref<1x1x32xf32, #tpu.memory_space<vmem>>, %arg15: memref<1x32xf32, #tpu.memory_space<vmem>>, %arg16: memref<1x32xf32, #tpu.memory_space<vmem>>, %arg17: memref<32x16xf32, #tpu.memory_space<vmem>>, %arg18: memref<1x16xf32, #tpu.memory_space<vmem>>, %arg19: memref<1x3x16xf32, #tpu.memory_space<vmem>>, %arg20: memref<3x32xf32, #tpu.memory_space<vmem>>) attributes {dimension_semantics = [#tpu.dimension_semantics<parallel>, #tpu.dimension_semantics<arbitrary>], iteration_bounds = array<i64: 2, 2>, scalar_prefetch = 0 : i64, scratch_operands = 1 : i64, tpu.core_type = #tpu.core_type<tc>, window_params = [{transform_indices = @transform_0, window_bounds = array<i64: 1, 3, 32>}, {transform_indices = @transform_1, window_bounds = array<i64: 1, 1, 32>}, {transform_indices = @transform_2, window_bounds = array<i64: 1, 1, 32>}, {transform_indices = @transform_3, window_bounds = array<i64: 1, 32, 96>}, {transform_indices = @transform_4, window_bounds = array<i64: 1, 1, 96>}, {transform_indices = @transform_5, window_bounds = array<i64: 1, 4, 8, 32>}, {transform_indices = @transform_6, window_bounds = array<i64: 1, 1, 32>}, {transform_indices = @transform_7, window_bounds = array<i64: 1, 1, 32>}, {transform_indices = @transform_8, window_bounds = array<i64: 1, 1, 32>}, {transform_indices = @transform_9, window_bounds = array<i64: 1, 32, 128>}, {transform_indices = @transform_10, window_bounds = array<i64: 1, 1, 128>}, {transform_indices = @transform_11, window_bounds = array<i64: 1, 128, 32>}, {transform_indices = @transform_12, window_bounds = array<i64: 1, 1, 32>}, {pipeline_mode = #tpu.pipeline_mode<synchronous>, transform_indices = @transform_13, window_bounds = array<i64: 1, 32>}, {pipeline_mode = #tpu.pipeline_mode<synchronous>, transform_indices = @transform_14, window_bounds = array<i64: 1, 32>}, {pipeline_mode = #tpu.pipeline_mode<synchronous>, transform_indices = @transform_15, window_bounds = array<i64: 32, 16>}, {pipeline_mode = #tpu.pipeline_mode<synchronous>, transform_indices = @transform_16, window_bounds = array<i64: 1, 16>}, {transform_indices = @transform_17, window_bounds = array<i64: 1, 3, 16>}]} {
    %c0_i32 = arith.constant 0 : i32
    %0 = arith.cmpi eq, %arg1, %c0_i32 : i32
    %1 = arith.extui %0 : i1 to i32
    %c0_i32_0 = arith.constant 0 : i32
    %2 = arith.cmpi ne, %1, %c0_i32_0 : i32
    scf.if %2 {
      %c0_93 = arith.constant 0 : index
      %c0_94 = arith.constant 0 : index
      %c0_95 = arith.constant 0 : index
      %208 = vector.load %arg2[%c0_93, %c0_94, %c0_95] : memref<1x3x32xf32, #tpu.memory_space<vmem>>, vector<1x3x32xf32>
      %209 = vector.shape_cast %208 : vector<1x3x32xf32> to vector<3x32xf32>
      %c0_96 = arith.constant 0 : index
      %c0_97 = arith.constant 0 : index
      %210 = vector.load %arg20[%c0_96, %c0_97] : memref<3x32xf32, #tpu.memory_space<vmem>>, vector<3x32xf32>
      tpu.vector_store %arg20[%c0_96, %c0_97], %209 {strides = array<i32>} : memref<3x32xf32, #tpu.memory_space<vmem>>, vector<3x32xf32>,
    } else {
    }
    %c0 = arith.constant 0 : index
    %c0_1 = arith.constant 0 : index
    %3 = vector.load %arg20[%c0, %c0_1] : memref<3x32xf32, #tpu.memory_space<vmem>>, vector<3x32xf32>
    %c0_2 = arith.constant 0 : index
    %c0_3 = arith.constant 0 : index
    %c0_4 = arith.constant 0 : index
    %4 = vector.load %arg3[%c0_2, %c0_3, %c0_4] : memref<1x1x32xf32, #tpu.memory_space<vmem>>, vector<1x1x32xf32>
    %5 = vector.shape_cast %4 : vector<1x1x32xf32> to vector<1x32xf32>
    %c0_5 = arith.constant 0 : index
    %c0_6 = arith.constant 0 : index
    %c0_7 = arith.constant 0 : index
    %6 = vector.load %arg4[%c0_5, %c0_6, %c0_7] : memref<1x1x32xf32, #tpu.memory_space<vmem>>, vector<1x1x32xf32>
    %7 = vector.shape_cast %6 : vector<1x1x32xf32> to vector<1x32xf32>
    %c0_8 = arith.constant 0 : index
    %c0_9 = arith.constant 0 : index
    %c0_10 = arith.constant 0 : index
    %8 = vector.load %arg5[%c0_8, %c0_9, %c0_10] : memref<1x32x96xf32, #tpu.memory_space<vmem>>, vector<1x32x96xf32>
    %9 = vector.shape_cast %8 : vector<1x32x96xf32> to vector<32x96xf32>
    %c0_11 = arith.constant 0 : index
    %c0_12 = arith.constant 0 : index
    %c0_13 = arith.constant 0 : index
    %10 = vector.load %arg6[%c0_11, %c0_12, %c0_13] : memref<1x1x96xf32, #tpu.memory_space<vmem>>, vector<1x1x96xf32>
    %11 = vector.shape_cast %10 : vector<1x1x96xf32> to vector<1x96xf32>
    %c0_14 = arith.constant 0 : index
    %c0_15 = arith.constant 0 : index
    %c0_16 = arith.constant 0 : index
    %c0_17 = arith.constant 0 : index
    %12 = vector.load %arg7[%c0_14, %c0_15, %c0_16, %c0_17] : memref<1x4x8x32xf32, #tpu.memory_space<vmem>>, vector<1x4x8x32xf32>
    %13 = vector.shape_cast %12 : vector<1x4x8x32xf32> to vector<4x8x32xf32>
    %c0_18 = arith.constant 0 : index
    %c0_19 = arith.constant 0 : index
    %c0_20 = arith.constant 0 : index
    %14 = vector.load %arg8[%c0_18, %c0_19, %c0_20] : memref<1x1x32xf32, #tpu.memory_space<vmem>>, vector<1x1x32xf32>
    %15 = vector.shape_cast %14 : vector<1x1x32xf32> to vector<1x32xf32>
    %c0_21 = arith.constant 0 : index
    %c0_22 = arith.constant 0 : index
    %c0_23 = arith.constant 0 : index
    %16 = vector.load %arg9[%c0_21, %c0_22, %c0_23] : memref<1x1x32xf32, #tpu.memory_space<vmem>>, vector<1x1x32xf32>
    %17 = vector.shape_cast %16 : vector<1x1x32xf32> to vector<1x32xf32>
    %c0_24 = arith.constant 0 : index
    %c0_25 = arith.constant 0 : index
    %c0_26 = arith.constant 0 : index
    %18 = vector.load %arg10[%c0_24, %c0_25, %c0_26] : memref<1x1x32xf32, #tpu.memory_space<vmem>>, vector<1x1x32xf32>
    %19 = vector.shape_cast %18 : vector<1x1x32xf32> to vector<1x32xf32>
    %c0_27 = arith.constant 0 : index
    %c0_28 = arith.constant 0 : index
    %c0_29 = arith.constant 0 : index
    %20 = vector.load %arg11[%c0_27, %c0_28, %c0_29] : memref<1x32x128xf32, #tpu.memory_space<vmem>>, vector<1x32x128xf32>
    %21 = vector.shape_cast %20 : vector<1x32x128xf32> to vector<32x128xf32>
    %c0_30 = arith.constant 0 : index
    %c0_31 = arith.constant 0 : index
    %c0_32 = arith.constant 0 : index
    %22 = vector.load %arg12[%c0_30, %c0_31, %c0_32] : memref<1x1x128xf32, #tpu.memory_space<vmem>>, vector<1x1x128xf32>
    %23 = vector.shape_cast %22 : vector<1x1x128xf32> to vector<1x128xf32>
    %c0_33 = arith.constant 0 : index
    %c0_34 = arith.constant 0 : index
    %c0_35 = arith.constant 0 : index
    %24 = vector.load %arg13[%c0_33, %c0_34, %c0_35] : memref<1x128x32xf32, #tpu.memory_space<vmem>>, vector<1x128x32xf32>
    %25 = vector.shape_cast %24 : vector<1x128x32xf32> to vector<128x32xf32>
    %c0_36 = arith.constant 0 : index
    %c0_37 = arith.constant 0 : index
    %c0_38 = arith.constant 0 : index
    %26 = vector.load %arg14[%c0_36, %c0_37, %c0_38] : memref<1x1x32xf32, #tpu.memory_space<vmem>>, vector<1x1x32xf32>
    %27 = vector.shape_cast %26 : vector<1x1x32xf32> to vector<1x32xf32>
    %cst = arith.constant dense<0.000000e+00> : vector<3xf32>
    %28 = vector.multi_reduction <add>, %3, %cst [1] : vector<3x32xf32> to vector<3xf32>
    %29 = vector.shape_cast %28 : vector<3xf32> to vector<3x1xf32>
    %cst_39 = arith.constant 3.200000e+01 : f32
    %30 = vector.broadcast %cst_39 : f32 to vector<3x1xf32>
    %31 = arith.divf %29, %30 : vector<3x1xf32>
    %32 = vector.broadcast %31 : vector<3x1xf32> to vector<3x32xf32>
    %33 = arith.subf %3, %32 : vector<3x32xf32>
    %34 = arith.mulf %33, %33 : vector<3x32xf32>
    %cst_40 = arith.constant dense<0.000000e+00> : vector<3xf32>
    %35 = vector.multi_reduction <add>, %34, %cst_40 [1] : vector<3x32xf32> to vector<3xf32>
    %36 = vector.shape_cast %35 : vector<3xf32> to vector<3x1xf32>
    %cst_41 = arith.constant 3.200000e+01 : f32
    %37 = vector.broadcast %cst_41 : f32 to vector<3x1xf32>
    %38 = arith.divf %36, %37 : vector<3x1xf32>
    %39 = vector.broadcast %31 : vector<3x1xf32> to vector<3x32xf32>
    %40 = arith.subf %3, %39 : vector<3x32xf32>
    %cst_42 = arith.constant 9.99999974E-6 : f32
    %41 = vector.broadcast %cst_42 : f32 to vector<3x1xf32>
    %42 = arith.addf %38, %41 : vector<3x1xf32>
    %43 = math.rsqrt %42 : vector<3x1xf32>
    %44 = vector.broadcast %43 : vector<3x1xf32> to vector<3x32xf32>
    %45 = arith.mulf %40, %44 : vector<3x32xf32>
    %46 = vector.broadcast %5 : vector<1x32xf32> to vector<3x32xf32>
    %47 = arith.mulf %45, %46 : vector<3x32xf32>
    %48 = vector.broadcast %7 : vector<1x32xf32> to vector<3x32xf32>
    %49 = arith.addf %47, %48 : vector<3x32xf32>
    %cst_43 = arith.constant dense<0.000000e+00> : vector<3x96xf32>
    %50 = tpu.matmul %49, %9, %cst_43 {dimension_numbers = #tpu.dot_dimension_numbers<[1], [0], [0], [1], [0, 0, 1, 1], [], []>} : vector<3x32xf32>, vector<32x96xf32>, vector<3x96xf32> -> vector<3x96xf32>
    %51 = vector.broadcast %11 : vector<1x96xf32> to vector<3x96xf32>
    %52 = arith.addf %50, %51 : vector<3x96xf32>
    %53 = vector.extract_strided_slice %52 {offsets = [0, 0], sizes = [3, 8], strides = [1, 1]} : vector<3x96xf32> to vector<3x8xf32>
    %cst_44 = arith.constant 0.353553385 : f32
    %54 = vector.broadcast %cst_44 : f32 to vector<3x8xf32>
    %55 = arith.mulf %53, %54 : vector<3x8xf32>
    %56 = vector.extract_strided_slice %52 {offsets = [0, 32], sizes = [3, 8], strides = [1, 1]} : vector<3x96xf32> to vector<3x8xf32>
    %57 = vector.extract_strided_slice %52 {offsets = [0, 64], sizes = [3, 8], strides = [1, 1]} : vector<3x96xf32> to vector<3x8xf32>
    %cst_45 = arith.constant dense<0.000000e+00> : vector<3x3xf32>
    %58 = tpu.matmul %55, %56, %cst_45 {dimension_numbers = #tpu.dot_dimension_numbers<[1], [1], [0], [0], [0, 0, 1, 0], [], []>} : vector<3x8xf32>, vector<3x8xf32>, vector<3x3xf32> -> vector<3x3xf32>
    %cst_46 = arith.constant dense<0xFF800000> : vector<3xf32>
    %59 = vector.multi_reduction <maximumf>, %58, %cst_46 [1] : vector<3x3xf32> to vector<3xf32>
    %60 = vector.shape_cast %59 : vector<3xf32> to vector<3x1xf32>
    %61 = vector.broadcast %60 : vector<3x1xf32> to vector<3x3xf32>
    %62 = arith.subf %58, %61 : vector<3x3xf32>
    %63 = math.exp %62 : vector<3x3xf32>
    %cst_47 = arith.constant dense<0.000000e+00> : vector<3xf32>
    %64 = vector.multi_reduction <add>, %63, %cst_47 [1] : vector<3x3xf32> to vector<3xf32>
    %65 = vector.shape_cast %64 : vector<3xf32> to vector<3x1xf32>
    %66 = vector.broadcast %65 : vector<3x1xf32> to vector<3x3xf32>
    %67 = arith.divf %63, %66 : vector<3x3xf32>
    %cst_48 = arith.constant dense<0.000000e+00> : vector<3x8xf32>
    %68 = tpu.matmul %67, %57, %cst_48 {dimension_numbers = #tpu.dot_dimension_numbers<[1], [0], [0], [1], [0, 0, 1, 1], [], []>} : vector<3x3xf32>, vector<3x8xf32>, vector<3x8xf32> -> vector<3x8xf32>
    %69 = vector.extract_strided_slice %13 {offsets = [0, 0, 0], sizes = [1, 8, 32], strides = [1, 1, 1]} : vector<4x8x32xf32> to vector<1x8x32xf32>
    %70 = vector.shape_cast %69 : vector<1x8x32xf32> to vector<8x32xf32>
    %cst_49 = arith.constant dense<0.000000e+00> : vector<3x32xf32>
    %71 = tpu.matmul %68, %70, %cst_49 {dimension_numbers = #tpu.dot_dimension_numbers<[1], [0], [0], [1], [0, 0, 1, 1], [], []>} : vector<3x8xf32>, vector<8x32xf32>, vector<3x32xf32> -> vector<3x32xf32>
    %72 = vector.extract_strided_slice %52 {offsets = [0, 8], sizes = [3, 8], strides = [1, 1]} : vector<3x96xf32> to vector<3x8xf32>
    %cst_50 = arith.constant 0.353553385 : f32
    %73 = vector.broadcast %cst_50 : f32 to vector<3x8xf32>
    %74 = arith.mulf %72, %73 : vector<3x8xf32>
    %75 = vector.extract_strided_slice %52 {offsets = [0, 40], sizes = [3, 8], strides = [1, 1]} : vector<3x96xf32> to vector<3x8xf32>
    %76 = vector.extract_strided_slice %52 {offsets = [0, 72], sizes = [3, 8], strides = [1, 1]} : vector<3x96xf32> to vector<3x8xf32>
    %cst_51 = arith.constant dense<0.000000e+00> : vector<3x3xf32>
    %77 = tpu.matmul %74, %75, %cst_51 {dimension_numbers = #tpu.dot_dimension_numbers<[1], [1], [0], [0], [0, 0, 1, 0], [], []>} : vector<3x8xf32>, vector<3x8xf32>, vector<3x3xf32> -> vector<3x3xf32>
    %cst_52 = arith.constant dense<0xFF800000> : vector<3xf32>
    %78 = vector.multi_reduction <maximumf>, %77, %cst_52 [1] : vector<3x3xf32> to vector<3xf32>
    %79 = vector.shape_cast %78 : vector<3xf32> to vector<3x1xf32>
    %80 = vector.broadcast %79 : vector<3x1xf32> to vector<3x3xf32>
    %81 = arith.subf %77, %80 : vector<3x3xf32>
    %82 = math.exp %81 : vector<3x3xf32>
    %cst_53 = arith.constant dense<0.000000e+00> : vector<3xf32>
    %83 = vector.multi_reduction <add>, %82, %cst_53 [1] : vector<3x3xf32> to vector<3xf32>
    %84 = vector.shape_cast %83 : vector<3xf32> to vector<3x1xf32>
    %85 = vector.broadcast %84 : vector<3x1xf32> to vector<3x3xf32>
    %86 = arith.divf %82, %85 : vector<3x3xf32>
    %cst_54 = arith.constant dense<0.000000e+00> : vector<3x8xf32>
    %87 = tpu.matmul %86, %76, %cst_54 {dimension_numbers = #tpu.dot_dimension_numbers<[1], [0], [0], [1], [0, 0, 1, 1], [], []>} : vector<3x3xf32>, vector<3x8xf32>, vector<3x8xf32> -> vector<3x8xf32>
    %88 = vector.extract_strided_slice %13 {offsets = [1, 0, 0], sizes = [1, 8, 32], strides = [1, 1, 1]} : vector<4x8x32xf32> to vector<1x8x32xf32>
    %89 = vector.shape_cast %88 : vector<1x8x32xf32> to vector<8x32xf32>
    %cst_55 = arith.constant dense<0.000000e+00> : vector<3x32xf32>
    %90 = tpu.matmul %87, %89, %cst_55 {dimension_numbers = #tpu.dot_dimension_numbers<[1], [0], [0], [1], [0, 0, 1, 1], [], []>} : vector<3x8xf32>, vector<8x32xf32>, vector<3x32xf32> -> vector<3x32xf32>
    %91 = arith.addf %71, %90 : vector<3x32xf32>
    %92 = vector.extract_strided_slice %52 {offsets = [0, 16], sizes = [3, 8], strides = [1, 1]} : vector<3x96xf32> to vector<3x8xf32>
    %cst_56 = arith.constant 0.353553385 : f32
    %93 = vector.broadcast %cst_56 : f32 to vector<3x8xf32>
    %94 = arith.mulf %92, %93 : vector<3x8xf32>
    %95 = vector.extract_strided_slice %52 {offsets = [0, 48], sizes = [3, 8], strides = [1, 1]} : vector<3x96xf32> to vector<3x8xf32>
    %96 = vector.extract_strided_slice %52 {offsets = [0, 80], sizes = [3, 8], strides = [1, 1]} : vector<3x96xf32> to vector<3x8xf32>
    %cst_57 = arith.constant dense<0.000000e+00> : vector<3x3xf32>
    %97 = tpu.matmul %94, %95, %cst_57 {dimension_numbers = #tpu.dot_dimension_numbers<[1], [1], [0], [0], [0, 0, 1, 0], [], []>} : vector<3x8xf32>, vector<3x8xf32>, vector<3x3xf32> -> vector<3x3xf32>
    %cst_58 = arith.constant dense<0xFF800000> : vector<3xf32>
    %98 = vector.multi_reduction <maximumf>, %97, %cst_58 [1] : vector<3x3xf32> to vector<3xf32>
    %99 = vector.shape_cast %98 : vector<3xf32> to vector<3x1xf32>
    %100 = vector.broadcast %99 : vector<3x1xf32> to vector<3x3xf32>
    %101 = arith.subf %97, %100 : vector<3x3xf32>
    %102 = math.exp %101 : vector<3x3xf32>
    %cst_59 = arith.constant dense<0.000000e+00> : vector<3xf32>
    %103 = vector.multi_reduction <add>, %102, %cst_59 [1] : vector<3x3xf32> to vector<3xf32>
    %104 = vector.shape_cast %103 : vector<3xf32> to vector<3x1xf32>
    %105 = vector.broadcast %104 : vector<3x1xf32> to vector<3x3xf32>
    %106 = arith.divf %102, %105 : vector<3x3xf32>
    %cst_60 = arith.constant dense<0.000000e+00> : vector<3x8xf32>
    %107 = tpu.matmul %106, %96, %cst_60 {dimension_numbers = #tpu.dot_dimension_numbers<[1], [0], [0], [1], [0, 0, 1, 1], [], []>} : vector<3x3xf32>, vector<3x8xf32>, vector<3x8xf32> -> vector<3x8xf32>
    %108 = vector.extract_strided_slice %13 {offsets = [2, 0, 0], sizes = [1, 8, 32], strides = [1, 1, 1]} : vector<4x8x32xf32> to vector<1x8x32xf32>
    %109 = vector.shape_cast %108 : vector<1x8x32xf32> to vector<8x32xf32>
    %cst_61 = arith.constant dense<0.000000e+00> : vector<3x32xf32>
    %110 = tpu.matmul %107, %109, %cst_61 {dimension_numbers = #tpu.dot_dimension_numbers<[1], [0], [0], [1], [0, 0, 1, 1], [], []>} : vector<3x8xf32>, vector<8x32xf32>, vector<3x32xf32> -> vector<3x32xf32>
    %111 = arith.addf %91, %110 : vector<3x32xf32>
    %112 = vector.extract_strided_slice %52 {offsets = [0, 24], sizes = [3, 8], strides = [1, 1]} : vector<3x96xf32> to vector<3x8xf32>
    %cst_62 = arith.constant 0.353553385 : f32
    %113 = vector.broadcast %cst_62 : f32 to vector<3x8xf32>
    %114 = arith.mulf %112, %113 : vector<3x8xf32>
    %115 = vector.extract_strided_slice %52 {offsets = [0, 56], sizes = [3, 8], strides = [1, 1]} : vector<3x96xf32> to vector<3x8xf32>
    %116 = vector.extract_strided_slice %52 {offsets = [0, 88], sizes = [3, 8], strides = [1, 1]} : vector<3x96xf32> to vector<3x8xf32>
    %cst_63 = arith.constant dense<0.000000e+00> : vector<3x3xf32>
    %117 = tpu.matmul %114, %115, %cst_63 {dimension_numbers = #tpu.dot_dimension_numbers<[1], [1], [0], [0], [0, 0, 1, 0], [], []>} : vector<3x8xf32>, vector<3x8xf32>, vector<3x3xf32> -> vector<3x3xf32>
    %cst_64 = arith.constant dense<0xFF800000> : vector<3xf32>
    %118 = vector.multi_reduction <maximumf>, %117, %cst_64 [1] : vector<3x3xf32> to vector<3xf32>
    %119 = vector.shape_cast %118 : vector<3xf32> to vector<3x1xf32>
    %120 = vector.broadcast %119 : vector<3x1xf32> to vector<3x3xf32>
    %121 = arith.subf %117, %120 : vector<3x3xf32>
    %122 = math.exp %121 : vector<3x3xf32>
    %cst_65 = arith.constant dense<0.000000e+00> : vector<3xf32>
    %123 = vector.multi_reduction <add>, %122, %cst_65 [1] : vector<3x3xf32> to vector<3xf32>
    %124 = vector.shape_cast %123 : vector<3xf32> to vector<3x1xf32>
    %125 = vector.broadcast %124 : vector<3x1xf32> to vector<3x3xf32>
    %126 = arith.divf %122, %125 : vector<3x3xf32>
    %cst_66 = arith.constant dense<0.000000e+00> : vector<3x8xf32>
    %127 = tpu.matmul %126, %116, %cst_66 {dimension_numbers = #tpu.dot_dimension_numbers<[1], [0], [0], [1], [0, 0, 1, 1], [], []>} : vector<3x3xf32>, vector<3x8xf32>, vector<3x8xf32> -> vector<3x8xf32>
    %128 = vector.extract_strided_slice %13 {offsets = [3, 0, 0], sizes = [1, 8, 32], strides = [1, 1, 1]} : vector<4x8x32xf32> to vector<1x8x32xf32>
    %129 = vector.shape_cast %128 : vector<1x8x32xf32> to vector<8x32xf32>
    %cst_67 = arith.constant dense<0.000000e+00> : vector<3x32xf32>
    %130 = tpu.matmul %127, %129, %cst_67 {dimension_numbers = #tpu.dot_dimension_numbers<[1], [0], [0], [1], [0, 0, 1, 1], [], []>} : vector<3x8xf32>, vector<8x32xf32>, vector<3x32xf32> -> vector<3x32xf32>
    %131 = arith.addf %111, %130 : vector<3x32xf32>
    %132 = arith.addf %3, %131 : vector<3x32xf32>
    %133 = vector.broadcast %15 : vector<1x32xf32> to vector<3x32xf32>
    %134 = arith.addf %132, %133 : vector<3x32xf32>
    %cst_68 = arith.constant dense<0.000000e+00> : vector<3xf32>
    %135 = vector.multi_reduction <add>, %134, %cst_68 [1] : vector<3x32xf32> to vector<3xf32>
    %136 = vector.shape_cast %135 : vector<3xf32> to vector<3x1xf32>
    %cst_69 = arith.constant 3.200000e+01 : f32
    %137 = vector.broadcast %cst_69 : f32 to vector<3x1xf32>
    %138 = arith.divf %136, %137 : vector<3x1xf32>
    %139 = vector.broadcast %138 : vector<3x1xf32> to vector<3x32xf32>
    %140 = arith.subf %134, %139 : vector<3x32xf32>
    %141 = arith.mulf %140, %140 : vector<3x32xf32>
    %cst_70 = arith.constant dense<0.000000e+00> : vector<3xf32>
    %142 = vector.multi_reduction <add>, %141, %cst_70 [1] : vector<3x32xf32> to vector<3xf32>
    %143 = vector.shape_cast %142 : vector<3xf32> to vector<3x1xf32>
    %cst_71 = arith.constant 3.200000e+01 : f32
    %144 = vector.broadcast %cst_71 : f32 to vector<3x1xf32>
    %145 = arith.divf %143, %144 : vector<3x1xf32>
    %146 = vector.broadcast %138 : vector<3x1xf32> to vector<3x32xf32>
    %147 = arith.subf %134, %146 : vector<3x32xf32>
    %cst_72 = arith.constant 9.99999974E-6 : f32
    %148 = vector.broadcast %cst_72 : f32 to vector<3x1xf32>
    %149 = arith.addf %145, %148 : vector<3x1xf32>
    %150 = math.rsqrt %149 : vector<3x1xf32>
    %151 = vector.broadcast %150 : vector<3x1xf32> to vector<3x32xf32>
    %152 = arith.mulf %147, %151 : vector<3x32xf32>
    %153 = vector.broadcast %17 : vector<1x32xf32> to vector<3x32xf32>
    %154 = arith.mulf %152, %153 : vector<3x32xf32>
    %155 = vector.broadcast %19 : vector<1x32xf32> to vector<3x32xf32>
    %156 = arith.addf %154, %155 : vector<3x32xf32>
    %cst_73 = arith.constant dense<0.000000e+00> : vector<3x128xf32>
    %157 = tpu.matmul %156, %21, %cst_73 {dimension_numbers = #tpu.dot_dimension_numbers<[1], [0], [0], [1], [0, 0, 1, 1], [], []>} : vector<3x32xf32>, vector<32x128xf32>, vector<3x128xf32> -> vector<3x128xf32>
    %158 = vector.broadcast %23 : vector<1x128xf32> to vector<3x128xf32>
    %159 = arith.addf %157, %158 : vector<3x128xf32>
    %cst_74 = arith.constant 5.000000e-01 : f32
    %160 = vector.broadcast %cst_74 : f32 to vector<3x128xf32>
    %161 = arith.mulf %160, %159 : vector<3x128xf32>
    %cst_75 = arith.constant 0.707106769 : f32
    %162 = vector.broadcast %cst_75 : f32 to vector<3x128xf32>
    %163 = arith.mulf %159, %162 : vector<3x128xf32>
    %164 = math.absf %163 : vector<3x128xf32>
    %cst_76 = arith.constant 0.327591091 : f32
    %165 = vector.broadcast %cst_76 : f32 to vector<3x128xf32>
    %166 = arith.mulf %165, %164 : vector<3x128xf32>
    %cst_77 = arith.constant 1.000000e+00 : f32
    %167 = vector.broadcast %cst_77 : f32 to vector<3x128xf32>
    %168 = arith.addf %167, %166 : vector<3x128xf32>
    %cst_78 = arith.constant 1.000000e+00 : f32
    %169 = vector.broadcast %cst_78 : f32 to vector<3x128xf32>
    %170 = arith.divf %169, %168 : vector<3x128xf32>
    %cst_79 = arith.constant 1.06140542 : f32
    %171 = vector.broadcast %cst_79 : f32 to vector<3x128xf32>
    %172 = arith.mulf %171, %170 : vector<3x128xf32>
    %cst_80 = arith.constant -1.45315206 : f32
    %173 = vector.broadcast %cst_80 : f32 to vector<3x128xf32>
    %174 = arith.addf %172, %173 : vector<3x128xf32>
    %175 = arith.mulf %174, %170 : vector<3x128xf32>
    %cst_81 = arith.constant 1.42141378 : f32
    %176 = vector.broadcast %cst_81 : f32 to vector<3x128xf32>
    %177 = arith.addf %175, %176 : vector<3x128xf32>
    %178 = arith.mulf %177, %170 : vector<3x128xf32>
    %cst_82 = arith.constant -0.284496725 : f32
    %179 = vector.broadcast %cst_82 : f32 to vector<3x128xf32>
    %180 = arith.addf %178, %179 : vector<3x128xf32>
    %181 = arith.mulf %180, %170 : vector<3x128xf32>
    %cst_83 = arith.constant 0.254829586 : f32
    %182 = vector.broadcast %cst_83 : f32 to vector<3x128xf32>
    %183 = arith.addf %181, %182 : vector<3x128xf32>
    %184 = arith.mulf %183, %170 : vector<3x128xf32>
    %cst_84 = arith.constant 0.000000e+00 : f32
    %185 = vector.broadcast %cst_84 : f32 to vector<3x128xf32>
    %186 = arith.subf %185, %164 : vector<3x128xf32>
    %187 = arith.mulf %186, %164 : vector<3x128xf32>
    %188 = math.exp %187 : vector<3x128xf32>
    %189 = arith.mulf %184, %188 : vector<3x128xf32>
    %cst_85 = arith.constant 1.000000e+00 : f32
    %190 = vector.broadcast %cst_85 : f32 to vector<3x128xf32>
    %191 = arith.subf %190, %189 : vector<3x128xf32>
    %cst_86 = arith.constant 0.000000e+00 : f32
    %192 = vector.broadcast %cst_86 : f32 to vector<3x128xf32>
    %193 = arith.cmpf oge, %163, %192 : vector<3x128xf32>
    %cst_87 = arith.constant 0.000000e+00 : f32
    %194 = vector.broadcast %cst_87 : f32 to vector<3x128xf32>
    %195 = arith.subf %194, %191 : vector<3x128xf32>
    %196 = arith.select %193, %191, %195 : vector<3x128xi1>, vector<3x128xf32>
    %cst_88 = arith.constant 1.000000e+00 : f32
    %197 = vector.broadcast %cst_88 : f32 to vector<3x128xf32>
    %198 = arith.addf %197, %196 : vector<3x128xf32>
    %199 = arith.mulf %161, %198 : vector<3x128xf32>
    %cst_89 = arith.constant dense<0.000000e+00> : vector<3x32xf32>
    %200 = tpu.matmul %199, %25, %cst_89 {dimension_numbers = #tpu.dot_dimension_numbers<[1], [0], [0], [1], [0, 0, 1, 1], [], []>} : vector<3x128xf32>, vector<128x32xf32>, vector<3x32xf32> -> vector<3x32xf32>
    %201 = arith.addf %134, %200 : vector<3x32xf32>
    %202 = vector.broadcast %27 : vector<1x32xf32> to vector<3x32xf32>
    %203 = arith.addf %201, %202 : vector<3x32xf32>
    %c0_90 = arith.constant 0 : index
    %c0_91 = arith.constant 0 : index
    %204 = vector.load %arg20[%c0_90, %c0_91] : memref<3x32xf32, #tpu.memory_space<vmem>>, vector<3x32xf32>
    tpu.vector_store %arg20[%c0_90, %c0_91], %203 {strides = array<i32>} : memref<3x32xf32, #tpu.memory_space<vmem>>, vector<3x32xf32>,
    %c1_i32 = arith.constant 1 : i32
    %205 = arith.cmpi eq, %arg1, %c1_i32 : i32
    %206 = arith.extui %205 : i1 to i32
    %c0_i32_92 = arith.constant 0 : i32
    %207 = arith.cmpi ne, %206, %c0_i32_92 : i32
    scf.if %207 {
      %c0_93 = arith.constant 0 : index
      %c0_94 = arith.constant 0 : index
      %208 = vector.load %arg15[%c0_93, %c0_94] : memref<1x32xf32, #tpu.memory_space<vmem>>, vector<1x32xf32>
      %c0_95 = arith.constant 0 : index
      %c0_96 = arith.constant 0 : index
      %209 = vector.load %arg16[%c0_95, %c0_96] : memref<1x32xf32, #tpu.memory_space<vmem>>, vector<1x32xf32>
      %cst_97 = arith.constant dense<0.000000e+00> : vector<3xf32>
      %210 = vector.multi_reduction <add>, %203, %cst_97 [1] : vector<3x32xf32> to vector<3xf32>
      %211 = vector.shape_cast %210 : vector<3xf32> to vector<3x1xf32>
      %cst_98 = arith.constant 3.200000e+01 : f32
      %212 = vector.broadcast %cst_98 : f32 to vector<3x1xf32>
      %213 = arith.divf %211, %212 : vector<3x1xf32>
      %214 = vector.broadcast %213 : vector<3x1xf32> to vector<3x32xf32>
      %215 = arith.subf %203, %214 : vector<3x32xf32>
      %216 = arith.mulf %215, %215 : vector<3x32xf32>
      %cst_99 = arith.constant dense<0.000000e+00> : vector<3xf32>
      %217 = vector.multi_reduction <add>, %216, %cst_99 [1] : vector<3x32xf32> to vector<3xf32>
      %218 = vector.shape_cast %217 : vector<3xf32> to vector<3x1xf32>
      %cst_100 = arith.constant 3.200000e+01 : f32
      %219 = vector.broadcast %cst_100 : f32 to vector<3x1xf32>
      %220 = arith.divf %218, %219 : vector<3x1xf32>
      %221 = vector.broadcast %213 : vector<3x1xf32> to vector<3x32xf32>
      %222 = arith.subf %203, %221 : vector<3x32xf32>
      %cst_101 = arith.constant 9.99999974E-6 : f32
      %223 = vector.broadcast %cst_101 : f32 to vector<3x1xf32>
      %224 = arith.addf %220, %223 : vector<3x1xf32>
      %225 = math.rsqrt %224 : vector<3x1xf32>
      %226 = vector.broadcast %225 : vector<3x1xf32> to vector<3x32xf32>
      %227 = arith.mulf %222, %226 : vector<3x32xf32>
      %228 = vector.broadcast %208 : vector<1x32xf32> to vector<3x32xf32>
      %229 = arith.mulf %227, %228 : vector<3x32xf32>
      %230 = vector.broadcast %209 : vector<1x32xf32> to vector<3x32xf32>
      %231 = arith.addf %229, %230 : vector<3x32xf32>
      %c0_102 = arith.constant 0 : index
      %c0_103 = arith.constant 0 : index
      %232 = vector.load %arg17[%c0_102, %c0_103] : memref<32x16xf32, #tpu.memory_space<vmem>>, vector<32x16xf32>
      %cst_104 = arith.constant dense<0.000000e+00> : vector<3x16xf32>
      %233 = tpu.matmul %231, %232, %cst_104 {dimension_numbers = #tpu.dot_dimension_numbers<[1], [0], [0], [1], [0, 0, 1, 1], [], []>} : vector<3x32xf32>, vector<32x16xf32>, vector<3x16xf32> -> vector<3x16xf32>
      %c0_105 = arith.constant 0 : index
      %c0_106 = arith.constant 0 : index
      %234 = vector.load %arg18[%c0_105, %c0_106] : memref<1x16xf32, #tpu.memory_space<vmem>>, vector<1x16xf32>
      %235 = vector.broadcast %234 : vector<1x16xf32> to vector<3x16xf32>
      %236 = arith.addf %233, %235 : vector<3x16xf32>
      %c0_107 = arith.constant 0 : index
      %c0_108 = arith.constant 0 : index
      %c0_109 = arith.constant 0 : index
      %237 = vector.load %arg19[%c0_107, %c0_108, %c0_109] : memref<1x3x16xf32, #tpu.memory_space<vmem>>, vector<1x3x16xf32>
      %238 = vector.shape_cast %237 : vector<1x3x16xf32> to vector<3x16xf32>
      %239 = vector.shape_cast %236 : vector<3x16xf32> to vector<1x3x16xf32>
      tpu.vector_store %arg19[%c0_107, %c0_108, %c0_109], %239 {strides = array<i32>} : memref<1x3x16xf32, #tpu.memory_space<vmem>>, vector<1x3x16xf32>,
    } else {
    }
    return
  }
  func.func @transform_0(%arg0: i32, %arg1: i32) -> (i32, i32, i32) {
    %c0_i32 = arith.constant 0 : i32
    %c0_i32_0 = arith.constant 0 : i32
    %c0_i32_1 = arith.constant 0 : i32
    return %arg0, %c0_i32, %c0_i32_0 : i32, i32, i32
  }
  func.func @transform_1(%arg0: i32, %arg1: i32) -> (i32, i32, i32) {
    %c0_i32 = arith.constant 0 : i32
    %c0_i32_0 = arith.constant 0 : i32
    %c0_i32_1 = arith.constant 0 : i32
    return %arg1, %c0_i32, %c0_i32_0 : i32, i32, i32
  }
  func.func @transform_2(%arg0: i32, %arg1: i32) -> (i32, i32, i32) {
    %c0_i32 = arith.constant 0 : i32
    %c0_i32_0 = arith.constant 0 : i32
    %c0_i32_1 = arith.constant 0 : i32
    return %arg1, %c0_i32, %c0_i32_0 : i32, i32, i32
  }
  func.func @transform_3(%arg0: i32, %arg1: i32) -> (i32, i32, i32) {
    %c0_i32 = arith.constant 0 : i32
    %c0_i32_0 = arith.constant 0 : i32
    %c0_i32_1 = arith.constant 0 : i32
    return %arg1, %c0_i32, %c0_i32_0 : i32, i32, i32
  }
  func.func @transform_4(%arg0: i32, %arg1: i32) -> (i32, i32, i32) {
    %c0_i32 = arith.constant 0 : i32
    %c0_i32_0 = arith.constant 0 : i32
    %c0_i32_1 = arith.constant 0 : i32
    return %arg1, %c0_i32, %c0_i32_0 : i32, i32, i32
  }
  func.func @transform_5(%arg0: i32, %arg1: i32) -> (i32, i32, i32, i32) {
    %c0_i32 = arith.constant 0 : i32
    %c0_i32_0 = arith.constant 0 : i32
    %c0_i32_1 = arith.constant 0 : i32
    %c0_i32_2 = arith.constant 0 : i32
    return %arg1, %c0_i32, %c0_i32_0, %c0_i32_1 : i32, i32, i32, i32
  }
  func.func @transform_6(%arg0: i32, %arg1: i32) -> (i32, i32, i32) {
    %c0_i32 = arith.constant 0 : i32
    %c0_i32_0 = arith.constant 0 : i32
    %c0_i32_1 = arith.constant 0 : i32
    return %arg1, %c0_i32, %c0_i32_0 : i32, i32, i32
  }
  func.func @transform_7(%arg0: i32, %arg1: i32) -> (i32, i32, i32) {
    %c0_i32 = arith.constant 0 : i32
    %c0_i32_0 = arith.constant 0 : i32
    %c0_i32_1 = arith.constant 0 : i32
    return %arg1, %c0_i32, %c0_i32_0 : i32, i32, i32
  }
  func.func @transform_8(%arg0: i32, %arg1: i32) -> (i32, i32, i32) {
    %c0_i32 = arith.constant 0 : i32
    %c0_i32_0 = arith.constant 0 : i32
    %c0_i32_1 = arith.constant 0 : i32
    return %arg1, %c0_i32, %c0_i32_0 : i32, i32, i32
  }
  func.func @transform_9(%arg0: i32, %arg1: i32) -> (i32, i32, i32) {
    %c0_i32 = arith.constant 0 : i32
    %c0_i32_0 = arith.constant 0 : i32
    %c0_i32_1 = arith.constant 0 : i32
    return %arg1, %c0_i32, %c0_i32_0 : i32, i32, i32
  }
  func.func @transform_10(%arg0: i32, %arg1: i32) -> (i32, i32, i32) {
    %c0_i32 = arith.constant 0 : i32
    %c0_i32_0 = arith.constant 0 : i32
    %c0_i32_1 = arith.constant 0 : i32
    return %arg1, %c0_i32, %c0_i32_0 : i32, i32, i32
  }
  func.func @transform_11(%arg0: i32, %arg1: i32) -> (i32, i32, i32) {
    %c0_i32 = arith.constant 0 : i32
    %c0_i32_0 = arith.constant 0 : i32
    %c0_i32_1 = arith.constant 0 : i32
    return %arg1, %c0_i32, %c0_i32_0 : i32, i32, i32
  }
  func.func @transform_12(%arg0: i32, %arg1: i32) -> (i32, i32, i32) {
    %c0_i32 = arith.constant 0 : i32
    %c0_i32_0 = arith.constant 0 : i32
    %c0_i32_1 = arith.constant 0 : i32
    return %arg1, %c0_i32, %c0_i32_0 : i32, i32, i32
  }
  func.func @transform_13(%arg0: i32, %arg1: i32) -> (i32, i32) {
    %c0_i32 = arith.constant 0 : i32
    %c0_i32_0 = arith.constant 0 : i32
    %c0_i32_1 = arith.constant 0 : i32
    return %c0_i32, %c0_i32_0 : i32, i32
  }
  func.func @transform_14(%arg0: i32, %arg1: i32) -> (i32, i32) {
    %c0_i32 = arith.constant 0 : i32
    %c0_i32_0 = arith.constant 0 : i32
    %c0_i32_1 = arith.constant 0 : i32
    return %c0_i32, %c0_i32_0 : i32, i32
  }
  func.func @transform_15(%arg0: i32, %arg1: i32) -> (i32, i32) {
    %c0_i32 = arith.constant 0 : i32
    %c0_i32_0 = arith.constant 0 : i32
    %c0_i32_1 = arith.constant 0 : i32
    return %c0_i32, %c0_i32_0 : i32, i32
  }
  func.func @transform_16(%arg0: i32, %arg1: i32) -> (i32, i32) {
    %c0_i32 = arith.constant 0 : i32
    %c0_i32_0 = arith.constant 0 : i32
    %c0_i32_1 = arith.constant 0 : i32
    return %c0_i32, %c0_i32_0 : i32, i32
  }
  func.func @transform_17(%arg0: i32, %arg1: i32) -> (i32, i32, i32) {
    %c0_i32 = arith.constant 0 : i32
    %c0_i32_0 = arith.constant 0 : i32
    %c0_i32_1 = arith.constant 0 : i32
    return %arg0, %c0_i32, %c0_i32_0 : i32, i32, i32
  }
}

module attributes {stable_mosaic.version = 11 : i64} {
  func.func @_decoder_kernel(%arg0: i32, %arg1: i32, %arg2: memref<1x9x16xf32, #tpu.memory_space<vmem>>, %arg3: memref<1x1x16xf32, #tpu.memory_space<vmem>>, %arg4: memref<1x1x16xf32, #tpu.memory_space<vmem>>, %arg5: memref<1x16x48xf32, #tpu.memory_space<vmem>>, %arg6: memref<1x1x48xf32, #tpu.memory_space<vmem>>, %arg7: memref<1x4x4x16xf32, #tpu.memory_space<vmem>>, %arg8: memref<1x1x16xf32, #tpu.memory_space<vmem>>, %arg9: memref<1x1x16xf32, #tpu.memory_space<vmem>>, %arg10: memref<1x1x16xf32, #tpu.memory_space<vmem>>, %arg11: memref<1x16x64xf32, #tpu.memory_space<vmem>>, %arg12: memref<1x1x64xf32, #tpu.memory_space<vmem>>, %arg13: memref<1x64x16xf32, #tpu.memory_space<vmem>>, %arg14: memref<1x1x16xf32, #tpu.memory_space<vmem>>, %arg15: memref<1x9x16xf32, #tpu.memory_space<vmem>>) attributes {dimension_semantics = [#tpu.dimension_semantics<parallel>, #tpu.dimension_semantics<arbitrary>], iteration_bounds = array<i64: 2, 2>, scalar_prefetch = 0 : i64, scratch_operands = 0 : i64, tpu.core_type = #tpu.core_type<tc>, window_params = [{transform_indices = @transform_0, window_bounds = array<i64: 1, 9, 16>}, {transform_indices = @transform_1, window_bounds = array<i64: 1, 1, 16>}, {transform_indices = @transform_2, window_bounds = array<i64: 1, 1, 16>}, {transform_indices = @transform_3, window_bounds = array<i64: 1, 16, 48>}, {transform_indices = @transform_4, window_bounds = array<i64: 1, 1, 48>}, {transform_indices = @transform_5, window_bounds = array<i64: 1, 4, 4, 16>}, {transform_indices = @transform_6, window_bounds = array<i64: 1, 1, 16>}, {transform_indices = @transform_7, window_bounds = array<i64: 1, 1, 16>}, {transform_indices = @transform_8, window_bounds = array<i64: 1, 1, 16>}, {transform_indices = @transform_9, window_bounds = array<i64: 1, 16, 64>}, {transform_indices = @transform_10, window_bounds = array<i64: 1, 1, 64>}, {transform_indices = @transform_11, window_bounds = array<i64: 1, 64, 16>}, {transform_indices = @transform_12, window_bounds = array<i64: 1, 1, 16>}, {transform_indices = @transform_13, window_bounds = array<i64: 1, 9, 16>}]} {
    %c0_i32 = arith.constant 0 : i32
    %0 = arith.cmpi eq, %arg1, %c0_i32 : i32
    %1 = arith.extui %0 : i1 to i32
    %c0_i32_0 = arith.constant 0 : i32
    %2 = arith.cmpi ne, %1, %c0_i32_0 : i32
    scf.if %2 {
      %c0_94 = arith.constant 0 : index
      %c0_95 = arith.constant 0 : index
      %c0_96 = arith.constant 0 : index
      %208 = vector.load %arg2[%c0_94, %c0_95, %c0_96] : memref<1x9x16xf32, #tpu.memory_space<vmem>>, vector<1x9x16xf32>
      %209 = vector.shape_cast %208 : vector<1x9x16xf32> to vector<9x16xf32>
      %c0_97 = arith.constant 0 : index
      %c0_98 = arith.constant 0 : index
      %c0_99 = arith.constant 0 : index
      %210 = vector.load %arg15[%c0_97, %c0_98, %c0_99] : memref<1x9x16xf32, #tpu.memory_space<vmem>>, vector<1x9x16xf32>
      %211 = vector.shape_cast %210 : vector<1x9x16xf32> to vector<9x16xf32>
      %212 = vector.shape_cast %209 : vector<9x16xf32> to vector<1x9x16xf32>
      tpu.vector_store %arg15[%c0_97, %c0_98, %c0_99], %212 {strides = array<i32>} : memref<1x9x16xf32, #tpu.memory_space<vmem>>, vector<1x9x16xf32>,
    } else {
    }
    %c0 = arith.constant 0 : index
    %c0_1 = arith.constant 0 : index
    %c0_2 = arith.constant 0 : index
    %3 = vector.load %arg15[%c0, %c0_1, %c0_2] : memref<1x9x16xf32, #tpu.memory_space<vmem>>, vector<1x9x16xf32>
    %4 = vector.shape_cast %3 : vector<1x9x16xf32> to vector<9x16xf32>
    %c0_3 = arith.constant 0 : index
    %c0_4 = arith.constant 0 : index
    %c0_5 = arith.constant 0 : index
    %5 = vector.load %arg3[%c0_3, %c0_4, %c0_5] : memref<1x1x16xf32, #tpu.memory_space<vmem>>, vector<1x1x16xf32>
    %6 = vector.shape_cast %5 : vector<1x1x16xf32> to vector<1x16xf32>
    %c0_6 = arith.constant 0 : index
    %c0_7 = arith.constant 0 : index
    %c0_8 = arith.constant 0 : index
    %7 = vector.load %arg4[%c0_6, %c0_7, %c0_8] : memref<1x1x16xf32, #tpu.memory_space<vmem>>, vector<1x1x16xf32>
    %8 = vector.shape_cast %7 : vector<1x1x16xf32> to vector<1x16xf32>
    %c0_9 = arith.constant 0 : index
    %c0_10 = arith.constant 0 : index
    %c0_11 = arith.constant 0 : index
    %9 = vector.load %arg5[%c0_9, %c0_10, %c0_11] : memref<1x16x48xf32, #tpu.memory_space<vmem>>, vector<1x16x48xf32>
    %10 = vector.shape_cast %9 : vector<1x16x48xf32> to vector<16x48xf32>
    %c0_12 = arith.constant 0 : index
    %c0_13 = arith.constant 0 : index
    %c0_14 = arith.constant 0 : index
    %11 = vector.load %arg6[%c0_12, %c0_13, %c0_14] : memref<1x1x48xf32, #tpu.memory_space<vmem>>, vector<1x1x48xf32>
    %12 = vector.shape_cast %11 : vector<1x1x48xf32> to vector<1x48xf32>
    %c0_15 = arith.constant 0 : index
    %c0_16 = arith.constant 0 : index
    %c0_17 = arith.constant 0 : index
    %c0_18 = arith.constant 0 : index
    %13 = vector.load %arg7[%c0_15, %c0_16, %c0_17, %c0_18] : memref<1x4x4x16xf32, #tpu.memory_space<vmem>>, vector<1x4x4x16xf32>
    %14 = vector.shape_cast %13 : vector<1x4x4x16xf32> to vector<4x4x16xf32>
    %c0_19 = arith.constant 0 : index
    %c0_20 = arith.constant 0 : index
    %c0_21 = arith.constant 0 : index
    %15 = vector.load %arg8[%c0_19, %c0_20, %c0_21] : memref<1x1x16xf32, #tpu.memory_space<vmem>>, vector<1x1x16xf32>
    %16 = vector.shape_cast %15 : vector<1x1x16xf32> to vector<1x16xf32>
    %c0_22 = arith.constant 0 : index
    %c0_23 = arith.constant 0 : index
    %c0_24 = arith.constant 0 : index
    %17 = vector.load %arg9[%c0_22, %c0_23, %c0_24] : memref<1x1x16xf32, #tpu.memory_space<vmem>>, vector<1x1x16xf32>
    %18 = vector.shape_cast %17 : vector<1x1x16xf32> to vector<1x16xf32>
    %c0_25 = arith.constant 0 : index
    %c0_26 = arith.constant 0 : index
    %c0_27 = arith.constant 0 : index
    %19 = vector.load %arg10[%c0_25, %c0_26, %c0_27] : memref<1x1x16xf32, #tpu.memory_space<vmem>>, vector<1x1x16xf32>
    %20 = vector.shape_cast %19 : vector<1x1x16xf32> to vector<1x16xf32>
    %c0_28 = arith.constant 0 : index
    %c0_29 = arith.constant 0 : index
    %c0_30 = arith.constant 0 : index
    %21 = vector.load %arg11[%c0_28, %c0_29, %c0_30] : memref<1x16x64xf32, #tpu.memory_space<vmem>>, vector<1x16x64xf32>
    %22 = vector.shape_cast %21 : vector<1x16x64xf32> to vector<16x64xf32>
    %c0_31 = arith.constant 0 : index
    %c0_32 = arith.constant 0 : index
    %c0_33 = arith.constant 0 : index
    %23 = vector.load %arg12[%c0_31, %c0_32, %c0_33] : memref<1x1x64xf32, #tpu.memory_space<vmem>>, vector<1x1x64xf32>
    %24 = vector.shape_cast %23 : vector<1x1x64xf32> to vector<1x64xf32>
    %c0_34 = arith.constant 0 : index
    %c0_35 = arith.constant 0 : index
    %c0_36 = arith.constant 0 : index
    %25 = vector.load %arg13[%c0_34, %c0_35, %c0_36] : memref<1x64x16xf32, #tpu.memory_space<vmem>>, vector<1x64x16xf32>
    %26 = vector.shape_cast %25 : vector<1x64x16xf32> to vector<64x16xf32>
    %c0_37 = arith.constant 0 : index
    %c0_38 = arith.constant 0 : index
    %c0_39 = arith.constant 0 : index
    %27 = vector.load %arg14[%c0_37, %c0_38, %c0_39] : memref<1x1x16xf32, #tpu.memory_space<vmem>>, vector<1x1x16xf32>
    %28 = vector.shape_cast %27 : vector<1x1x16xf32> to vector<1x16xf32>
    %cst = arith.constant dense<0.000000e+00> : vector<9xf32>
    %29 = vector.multi_reduction <add>, %4, %cst [1] : vector<9x16xf32> to vector<9xf32>
    %30 = vector.shape_cast %29 : vector<9xf32> to vector<9x1xf32>
    %cst_40 = arith.constant 1.600000e+01 : f32
    %31 = vector.broadcast %cst_40 : f32 to vector<9x1xf32>
    %32 = arith.divf %30, %31 : vector<9x1xf32>
    %33 = vector.broadcast %32 : vector<9x1xf32> to vector<9x16xf32>
    %34 = arith.subf %4, %33 : vector<9x16xf32>
    %35 = arith.mulf %34, %34 : vector<9x16xf32>
    %cst_41 = arith.constant dense<0.000000e+00> : vector<9xf32>
    %36 = vector.multi_reduction <add>, %35, %cst_41 [1] : vector<9x16xf32> to vector<9xf32>
    %37 = vector.shape_cast %36 : vector<9xf32> to vector<9x1xf32>
    %cst_42 = arith.constant 1.600000e+01 : f32
    %38 = vector.broadcast %cst_42 : f32 to vector<9x1xf32>
    %39 = arith.divf %37, %38 : vector<9x1xf32>
    %40 = vector.broadcast %32 : vector<9x1xf32> to vector<9x16xf32>
    %41 = arith.subf %4, %40 : vector<9x16xf32>
    %cst_43 = arith.constant 9.99999974E-6 : f32
    %42 = vector.broadcast %cst_43 : f32 to vector<9x1xf32>
    %43 = arith.addf %39, %42 : vector<9x1xf32>
    %44 = math.rsqrt %43 : vector<9x1xf32>
    %45 = vector.broadcast %44 : vector<9x1xf32> to vector<9x16xf32>
    %46 = arith.mulf %41, %45 : vector<9x16xf32>
    %47 = vector.broadcast %6 : vector<1x16xf32> to vector<9x16xf32>
    %48 = arith.mulf %46, %47 : vector<9x16xf32>
    %49 = vector.broadcast %8 : vector<1x16xf32> to vector<9x16xf32>
    %50 = arith.addf %48, %49 : vector<9x16xf32>
    %cst_44 = arith.constant dense<0.000000e+00> : vector<9x48xf32>
    %51 = tpu.matmul %50, %10, %cst_44 {dimension_numbers = #tpu.dot_dimension_numbers<[1], [0], [0], [1], [0, 0, 1, 1], [], []>} : vector<9x16xf32>, vector<16x48xf32>, vector<9x48xf32> -> vector<9x48xf32>
    %52 = vector.broadcast %12 : vector<1x48xf32> to vector<9x48xf32>
    %53 = arith.addf %51, %52 : vector<9x48xf32>
    %54 = vector.extract_strided_slice %53 {offsets = [0, 0], sizes = [9, 4], strides = [1, 1]} : vector<9x48xf32> to vector<9x4xf32>
    %cst_45 = arith.constant 5.000000e-01 : f32
    %55 = vector.broadcast %cst_45 : f32 to vector<9x4xf32>
    %56 = arith.mulf %54, %55 : vector<9x4xf32>
    %57 = vector.extract_strided_slice %53 {offsets = [0, 16], sizes = [9, 4], strides = [1, 1]} : vector<9x48xf32> to vector<9x4xf32>
    %58 = vector.extract_strided_slice %53 {offsets = [0, 32], sizes = [9, 4], strides = [1, 1]} : vector<9x48xf32> to vector<9x4xf32>
    %cst_46 = arith.constant dense<0.000000e+00> : vector<9x9xf32>
    %59 = tpu.matmul %56, %57, %cst_46 {dimension_numbers = #tpu.dot_dimension_numbers<[1], [1], [0], [0], [0, 0, 1, 0], [], []>} : vector<9x4xf32>, vector<9x4xf32>, vector<9x9xf32> -> vector<9x9xf32>
    %cst_47 = arith.constant dense<0xFF800000> : vector<9xf32>
    %60 = vector.multi_reduction <maximumf>, %59, %cst_47 [1] : vector<9x9xf32> to vector<9xf32>
    %61 = vector.shape_cast %60 : vector<9xf32> to vector<9x1xf32>
    %62 = vector.broadcast %61 : vector<9x1xf32> to vector<9x9xf32>
    %63 = arith.subf %59, %62 : vector<9x9xf32>
    %64 = math.exp %63 : vector<9x9xf32>
    %cst_48 = arith.constant dense<0.000000e+00> : vector<9xf32>
    %65 = vector.multi_reduction <add>, %64, %cst_48 [1] : vector<9x9xf32> to vector<9xf32>
    %66 = vector.shape_cast %65 : vector<9xf32> to vector<9x1xf32>
    %67 = vector.broadcast %66 : vector<9x1xf32> to vector<9x9xf32>
    %68 = arith.divf %64, %67 : vector<9x9xf32>
    %cst_49 = arith.constant dense<0.000000e+00> : vector<9x4xf32>
    %69 = tpu.matmul %68, %58, %cst_49 {dimension_numbers = #tpu.dot_dimension_numbers<[1], [0], [0], [1], [0, 0, 1, 1], [], []>} : vector<9x9xf32>, vector<9x4xf32>, vector<9x4xf32> -> vector<9x4xf32>
    %70 = vector.extract_strided_slice %14 {offsets = [0, 0, 0], sizes = [1, 4, 16], strides = [1, 1, 1]} : vector<4x4x16xf32> to vector<1x4x16xf32>
    %71 = vector.shape_cast %70 : vector<1x4x16xf32> to vector<4x16xf32>
    %cst_50 = arith.constant dense<0.000000e+00> : vector<9x16xf32>
    %72 = tpu.matmul %69, %71, %cst_50 {dimension_numbers = #tpu.dot_dimension_numbers<[1], [0], [0], [1], [0, 0, 1, 1], [], []>} : vector<9x4xf32>, vector<4x16xf32>, vector<9x16xf32> -> vector<9x16xf32>
    %73 = vector.extract_strided_slice %53 {offsets = [0, 4], sizes = [9, 4], strides = [1, 1]} : vector<9x48xf32> to vector<9x4xf32>
    %cst_51 = arith.constant 5.000000e-01 : f32
    %74 = vector.broadcast %cst_51 : f32 to vector<9x4xf32>
    %75 = arith.mulf %73, %74 : vector<9x4xf32>
    %76 = vector.extract_strided_slice %53 {offsets = [0, 20], sizes = [9, 4], strides = [1, 1]} : vector<9x48xf32> to vector<9x4xf32>
    %77 = vector.extract_strided_slice %53 {offsets = [0, 36], sizes = [9, 4], strides = [1, 1]} : vector<9x48xf32> to vector<9x4xf32>
    %cst_52 = arith.constant dense<0.000000e+00> : vector<9x9xf32>
    %78 = tpu.matmul %75, %76, %cst_52 {dimension_numbers = #tpu.dot_dimension_numbers<[1], [1], [0], [0], [0, 0, 1, 0], [], []>} : vector<9x4xf32>, vector<9x4xf32>, vector<9x9xf32> -> vector<9x9xf32>
    %cst_53 = arith.constant dense<0xFF800000> : vector<9xf32>
    %79 = vector.multi_reduction <maximumf>, %78, %cst_53 [1] : vector<9x9xf32> to vector<9xf32>
    %80 = vector.shape_cast %79 : vector<9xf32> to vector<9x1xf32>
    %81 = vector.broadcast %80 : vector<9x1xf32> to vector<9x9xf32>
    %82 = arith.subf %78, %81 : vector<9x9xf32>
    %83 = math.exp %82 : vector<9x9xf32>
    %cst_54 = arith.constant dense<0.000000e+00> : vector<9xf32>
    %84 = vector.multi_reduction <add>, %83, %cst_54 [1] : vector<9x9xf32> to vector<9xf32>
    %85 = vector.shape_cast %84 : vector<9xf32> to vector<9x1xf32>
    %86 = vector.broadcast %85 : vector<9x1xf32> to vector<9x9xf32>
    %87 = arith.divf %83, %86 : vector<9x9xf32>
    %cst_55 = arith.constant dense<0.000000e+00> : vector<9x4xf32>
    %88 = tpu.matmul %87, %77, %cst_55 {dimension_numbers = #tpu.dot_dimension_numbers<[1], [0], [0], [1], [0, 0, 1, 1], [], []>} : vector<9x9xf32>, vector<9x4xf32>, vector<9x4xf32> -> vector<9x4xf32>
    %89 = vector.extract_strided_slice %14 {offsets = [1, 0, 0], sizes = [1, 4, 16], strides = [1, 1, 1]} : vector<4x4x16xf32> to vector<1x4x16xf32>
    %90 = vector.shape_cast %89 : vector<1x4x16xf32> to vector<4x16xf32>
    %cst_56 = arith.constant dense<0.000000e+00> : vector<9x16xf32>
    %91 = tpu.matmul %88, %90, %cst_56 {dimension_numbers = #tpu.dot_dimension_numbers<[1], [0], [0], [1], [0, 0, 1, 1], [], []>} : vector<9x4xf32>, vector<4x16xf32>, vector<9x16xf32> -> vector<9x16xf32>
    %92 = arith.addf %72, %91 : vector<9x16xf32>
    %93 = vector.extract_strided_slice %53 {offsets = [0, 8], sizes = [9, 4], strides = [1, 1]} : vector<9x48xf32> to vector<9x4xf32>
    %cst_57 = arith.constant 5.000000e-01 : f32
    %94 = vector.broadcast %cst_57 : f32 to vector<9x4xf32>
    %95 = arith.mulf %93, %94 : vector<9x4xf32>
    %96 = vector.extract_strided_slice %53 {offsets = [0, 24], sizes = [9, 4], strides = [1, 1]} : vector<9x48xf32> to vector<9x4xf32>
    %97 = vector.extract_strided_slice %53 {offsets = [0, 40], sizes = [9, 4], strides = [1, 1]} : vector<9x48xf32> to vector<9x4xf32>
    %cst_58 = arith.constant dense<0.000000e+00> : vector<9x9xf32>
    %98 = tpu.matmul %95, %96, %cst_58 {dimension_numbers = #tpu.dot_dimension_numbers<[1], [1], [0], [0], [0, 0, 1, 0], [], []>} : vector<9x4xf32>, vector<9x4xf32>, vector<9x9xf32> -> vector<9x9xf32>
    %cst_59 = arith.constant dense<0xFF800000> : vector<9xf32>
    %99 = vector.multi_reduction <maximumf>, %98, %cst_59 [1] : vector<9x9xf32> to vector<9xf32>
    %100 = vector.shape_cast %99 : vector<9xf32> to vector<9x1xf32>
    %101 = vector.broadcast %100 : vector<9x1xf32> to vector<9x9xf32>
    %102 = arith.subf %98, %101 : vector<9x9xf32>
    %103 = math.exp %102 : vector<9x9xf32>
    %cst_60 = arith.constant dense<0.000000e+00> : vector<9xf32>
    %104 = vector.multi_reduction <add>, %103, %cst_60 [1] : vector<9x9xf32> to vector<9xf32>
    %105 = vector.shape_cast %104 : vector<9xf32> to vector<9x1xf32>
    %106 = vector.broadcast %105 : vector<9x1xf32> to vector<9x9xf32>
    %107 = arith.divf %103, %106 : vector<9x9xf32>
    %cst_61 = arith.constant dense<0.000000e+00> : vector<9x4xf32>
    %108 = tpu.matmul %107, %97, %cst_61 {dimension_numbers = #tpu.dot_dimension_numbers<[1], [0], [0], [1], [0, 0, 1, 1], [], []>} : vector<9x9xf32>, vector<9x4xf32>, vector<9x4xf32> -> vector<9x4xf32>
    %109 = vector.extract_strided_slice %14 {offsets = [2, 0, 0], sizes = [1, 4, 16], strides = [1, 1, 1]} : vector<4x4x16xf32> to vector<1x4x16xf32>
    %110 = vector.shape_cast %109 : vector<1x4x16xf32> to vector<4x16xf32>
    %cst_62 = arith.constant dense<0.000000e+00> : vector<9x16xf32>
    %111 = tpu.matmul %108, %110, %cst_62 {dimension_numbers = #tpu.dot_dimension_numbers<[1], [0], [0], [1], [0, 0, 1, 1], [], []>} : vector<9x4xf32>, vector<4x16xf32>, vector<9x16xf32> -> vector<9x16xf32>
    %112 = arith.addf %92, %111 : vector<9x16xf32>
    %113 = vector.extract_strided_slice %53 {offsets = [0, 12], sizes = [9, 4], strides = [1, 1]} : vector<9x48xf32> to vector<9x4xf32>
    %cst_63 = arith.constant 5.000000e-01 : f32
    %114 = vector.broadcast %cst_63 : f32 to vector<9x4xf32>
    %115 = arith.mulf %113, %114 : vector<9x4xf32>
    %116 = vector.extract_strided_slice %53 {offsets = [0, 28], sizes = [9, 4], strides = [1, 1]} : vector<9x48xf32> to vector<9x4xf32>
    %117 = vector.extract_strided_slice %53 {offsets = [0, 44], sizes = [9, 4], strides = [1, 1]} : vector<9x48xf32> to vector<9x4xf32>
    %cst_64 = arith.constant dense<0.000000e+00> : vector<9x9xf32>
    %118 = tpu.matmul %115, %116, %cst_64 {dimension_numbers = #tpu.dot_dimension_numbers<[1], [1], [0], [0], [0, 0, 1, 0], [], []>} : vector<9x4xf32>, vector<9x4xf32>, vector<9x9xf32> -> vector<9x9xf32>
    %cst_65 = arith.constant dense<0xFF800000> : vector<9xf32>
    %119 = vector.multi_reduction <maximumf>, %118, %cst_65 [1] : vector<9x9xf32> to vector<9xf32>
    %120 = vector.shape_cast %119 : vector<9xf32> to vector<9x1xf32>
    %121 = vector.broadcast %120 : vector<9x1xf32> to vector<9x9xf32>
    %122 = arith.subf %118, %121 : vector<9x9xf32>
    %123 = math.exp %122 : vector<9x9xf32>
    %cst_66 = arith.constant dense<0.000000e+00> : vector<9xf32>
    %124 = vector.multi_reduction <add>, %123, %cst_66 [1] : vector<9x9xf32> to vector<9xf32>
    %125 = vector.shape_cast %124 : vector<9xf32> to vector<9x1xf32>
    %126 = vector.broadcast %125 : vector<9x1xf32> to vector<9x9xf32>
    %127 = arith.divf %123, %126 : vector<9x9xf32>
    %cst_67 = arith.constant dense<0.000000e+00> : vector<9x4xf32>
    %128 = tpu.matmul %127, %117, %cst_67 {dimension_numbers = #tpu.dot_dimension_numbers<[1], [0], [0], [1], [0, 0, 1, 1], [], []>} : vector<9x9xf32>, vector<9x4xf32>, vector<9x4xf32> -> vector<9x4xf32>
    %129 = vector.extract_strided_slice %14 {offsets = [3, 0, 0], sizes = [1, 4, 16], strides = [1, 1, 1]} : vector<4x4x16xf32> to vector<1x4x16xf32>
    %130 = vector.shape_cast %129 : vector<1x4x16xf32> to vector<4x16xf32>
    %cst_68 = arith.constant dense<0.000000e+00> : vector<9x16xf32>
    %131 = tpu.matmul %128, %130, %cst_68 {dimension_numbers = #tpu.dot_dimension_numbers<[1], [0], [0], [1], [0, 0, 1, 1], [], []>} : vector<9x4xf32>, vector<4x16xf32>, vector<9x16xf32> -> vector<9x16xf32>
    %132 = arith.addf %112, %131 : vector<9x16xf32>
    %133 = arith.addf %4, %132 : vector<9x16xf32>
    %134 = vector.broadcast %16 : vector<1x16xf32> to vector<9x16xf32>
    %135 = arith.addf %133, %134 : vector<9x16xf32>
    %cst_69 = arith.constant dense<0.000000e+00> : vector<9xf32>
    %136 = vector.multi_reduction <add>, %135, %cst_69 [1] : vector<9x16xf32> to vector<9xf32>
    %137 = vector.shape_cast %136 : vector<9xf32> to vector<9x1xf32>
    %cst_70 = arith.constant 1.600000e+01 : f32
    %138 = vector.broadcast %cst_70 : f32 to vector<9x1xf32>
    %139 = arith.divf %137, %138 : vector<9x1xf32>
    %140 = vector.broadcast %139 : vector<9x1xf32> to vector<9x16xf32>
    %141 = arith.subf %135, %140 : vector<9x16xf32>
    %142 = arith.mulf %141, %141 : vector<9x16xf32>
    %cst_71 = arith.constant dense<0.000000e+00> : vector<9xf32>
    %143 = vector.multi_reduction <add>, %142, %cst_71 [1] : vector<9x16xf32> to vector<9xf32>
    %144 = vector.shape_cast %143 : vector<9xf32> to vector<9x1xf32>
    %cst_72 = arith.constant 1.600000e+01 : f32
    %145 = vector.broadcast %cst_72 : f32 to vector<9x1xf32>
    %146 = arith.divf %144, %145 : vector<9x1xf32>
    %147 = vector.broadcast %139 : vector<9x1xf32> to vector<9x16xf32>
    %148 = arith.subf %135, %147 : vector<9x16xf32>
    %cst_73 = arith.constant 9.99999974E-6 : f32
    %149 = vector.broadcast %cst_73 : f32 to vector<9x1xf32>
    %150 = arith.addf %146, %149 : vector<9x1xf32>
    %151 = math.rsqrt %150 : vector<9x1xf32>
    %152 = vector.broadcast %151 : vector<9x1xf32> to vector<9x16xf32>
    %153 = arith.mulf %148, %152 : vector<9x16xf32>
    %154 = vector.broadcast %18 : vector<1x16xf32> to vector<9x16xf32>
    %155 = arith.mulf %153, %154 : vector<9x16xf32>
    %156 = vector.broadcast %20 : vector<1x16xf32> to vector<9x16xf32>
    %157 = arith.addf %155, %156 : vector<9x16xf32>
    %cst_74 = arith.constant dense<0.000000e+00> : vector<9x64xf32>
    %158 = tpu.matmul %157, %22, %cst_74 {dimension_numbers = #tpu.dot_dimension_numbers<[1], [0], [0], [1], [0, 0, 1, 1], [], []>} : vector<9x16xf32>, vector<16x64xf32>, vector<9x64xf32> -> vector<9x64xf32>
    %159 = vector.broadcast %24 : vector<1x64xf32> to vector<9x64xf32>
    %160 = arith.addf %158, %159 : vector<9x64xf32>
    %cst_75 = arith.constant 5.000000e-01 : f32
    %161 = vector.broadcast %cst_75 : f32 to vector<9x64xf32>
    %162 = arith.mulf %161, %160 : vector<9x64xf32>
    %cst_76 = arith.constant 0.707106769 : f32
    %163 = vector.broadcast %cst_76 : f32 to vector<9x64xf32>
    %164 = arith.mulf %160, %163 : vector<9x64xf32>
    %165 = math.absf %164 : vector<9x64xf32>
    %cst_77 = arith.constant 0.327591091 : f32
    %166 = vector.broadcast %cst_77 : f32 to vector<9x64xf32>
    %167 = arith.mulf %166, %165 : vector<9x64xf32>
    %cst_78 = arith.constant 1.000000e+00 : f32
    %168 = vector.broadcast %cst_78 : f32 to vector<9x64xf32>
    %169 = arith.addf %168, %167 : vector<9x64xf32>
    %cst_79 = arith.constant 1.000000e+00 : f32
    %170 = vector.broadcast %cst_79 : f32 to vector<9x64xf32>
    %171 = arith.divf %170, %169 : vector<9x64xf32>
    %cst_80 = arith.constant 1.06140542 : f32
    %172 = vector.broadcast %cst_80 : f32 to vector<9x64xf32>
    %173 = arith.mulf %172, %171 : vector<9x64xf32>
    %cst_81 = arith.constant -1.45315206 : f32
    %174 = vector.broadcast %cst_81 : f32 to vector<9x64xf32>
    %175 = arith.addf %173, %174 : vector<9x64xf32>
    %176 = arith.mulf %175, %171 : vector<9x64xf32>
    %cst_82 = arith.constant 1.42141378 : f32
    %177 = vector.broadcast %cst_82 : f32 to vector<9x64xf32>
    %178 = arith.addf %176, %177 : vector<9x64xf32>
    %179 = arith.mulf %178, %171 : vector<9x64xf32>
    %cst_83 = arith.constant -0.284496725 : f32
    %180 = vector.broadcast %cst_83 : f32 to vector<9x64xf32>
    %181 = arith.addf %179, %180 : vector<9x64xf32>
    %182 = arith.mulf %181, %171 : vector<9x64xf32>
    %cst_84 = arith.constant 0.254829586 : f32
    %183 = vector.broadcast %cst_84 : f32 to vector<9x64xf32>
    %184 = arith.addf %182, %183 : vector<9x64xf32>
    %185 = arith.mulf %184, %171 : vector<9x64xf32>
    %cst_85 = arith.constant 0.000000e+00 : f32
    %186 = vector.broadcast %cst_85 : f32 to vector<9x64xf32>
    %187 = arith.subf %186, %165 : vector<9x64xf32>
    %188 = arith.mulf %187, %165 : vector<9x64xf32>
    %189 = math.exp %188 : vector<9x64xf32>
    %190 = arith.mulf %185, %189 : vector<9x64xf32>
    %cst_86 = arith.constant 1.000000e+00 : f32
    %191 = vector.broadcast %cst_86 : f32 to vector<9x64xf32>
    %192 = arith.subf %191, %190 : vector<9x64xf32>
    %cst_87 = arith.constant 0.000000e+00 : f32
    %193 = vector.broadcast %cst_87 : f32 to vector<9x64xf32>
    %194 = arith.cmpf oge, %164, %193 : vector<9x64xf32>
    %cst_88 = arith.constant 0.000000e+00 : f32
    %195 = vector.broadcast %cst_88 : f32 to vector<9x64xf32>
    %196 = arith.subf %195, %192 : vector<9x64xf32>
    %197 = arith.select %194, %192, %196 : vector<9x64xi1>, vector<9x64xf32>
    %cst_89 = arith.constant 1.000000e+00 : f32
    %198 = vector.broadcast %cst_89 : f32 to vector<9x64xf32>
    %199 = arith.addf %198, %197 : vector<9x64xf32>
    %200 = arith.mulf %162, %199 : vector<9x64xf32>
    %cst_90 = arith.constant dense<0.000000e+00> : vector<9x16xf32>
    %201 = tpu.matmul %200, %26, %cst_90 {dimension_numbers = #tpu.dot_dimension_numbers<[1], [0], [0], [1], [0, 0, 1, 1], [], []>} : vector<9x64xf32>, vector<64x16xf32>, vector<9x16xf32> -> vector<9x16xf32>
    %202 = arith.addf %135, %201 : vector<9x16xf32>
    %203 = vector.broadcast %28 : vector<1x16xf32> to vector<9x16xf32>
    %204 = arith.addf %202, %203 : vector<9x16xf32>
    %c0_91 = arith.constant 0 : index
    %c0_92 = arith.constant 0 : index
    %c0_93 = arith.constant 0 : index
    %205 = vector.load %arg15[%c0_91, %c0_92, %c0_93] : memref<1x9x16xf32, #tpu.memory_space<vmem>>, vector<1x9x16xf32>
    %206 = vector.shape_cast %205 : vector<1x9x16xf32> to vector<9x16xf32>
    %207 = vector.shape_cast %204 : vector<9x16xf32> to vector<1x9x16xf32>
    tpu.vector_store %arg15[%c0_91, %c0_92, %c0_93], %207 {strides = array<i32>} : memref<1x9x16xf32, #tpu.memory_space<vmem>>, vector<1x9x16xf32>,
    return
  }
  func.func @transform_0(%arg0: i32, %arg1: i32) -> (i32, i32, i32) {
    %c0_i32 = arith.constant 0 : i32
    %c0_i32_0 = arith.constant 0 : i32
    %c0_i32_1 = arith.constant 0 : i32
    return %arg0, %c0_i32, %c0_i32_0 : i32, i32, i32
  }
  func.func @transform_1(%arg0: i32, %arg1: i32) -> (i32, i32, i32) {
    %c0_i32 = arith.constant 0 : i32
    %c0_i32_0 = arith.constant 0 : i32
    %c0_i32_1 = arith.constant 0 : i32
    return %arg1, %c0_i32, %c0_i32_0 : i32, i32, i32
  }
  func.func @transform_2(%arg0: i32, %arg1: i32) -> (i32, i32, i32) {
    %c0_i32 = arith.constant 0 : i32
    %c0_i32_0 = arith.constant 0 : i32
    %c0_i32_1 = arith.constant 0 : i32
    return %arg1, %c0_i32, %c0_i32_0 : i32, i32, i32
  }
  func.func @transform_3(%arg0: i32, %arg1: i32) -> (i32, i32, i32) {
    %c0_i32 = arith.constant 0 : i32
    %c0_i32_0 = arith.constant 0 : i32
    %c0_i32_1 = arith.constant 0 : i32
    return %arg1, %c0_i32, %c0_i32_0 : i32, i32, i32
  }
  func.func @transform_4(%arg0: i32, %arg1: i32) -> (i32, i32, i32) {
    %c0_i32 = arith.constant 0 : i32
    %c0_i32_0 = arith.constant 0 : i32
    %c0_i32_1 = arith.constant 0 : i32
    return %arg1, %c0_i32, %c0_i32_0 : i32, i32, i32
  }
  func.func @transform_5(%arg0: i32, %arg1: i32) -> (i32, i32, i32, i32) {
    %c0_i32 = arith.constant 0 : i32
    %c0_i32_0 = arith.constant 0 : i32
    %c0_i32_1 = arith.constant 0 : i32
    %c0_i32_2 = arith.constant 0 : i32
    return %arg1, %c0_i32, %c0_i32_0, %c0_i32_1 : i32, i32, i32, i32
  }
  func.func @transform_6(%arg0: i32, %arg1: i32) -> (i32, i32, i32) {
    %c0_i32 = arith.constant 0 : i32
    %c0_i32_0 = arith.constant 0 : i32
    %c0_i32_1 = arith.constant 0 : i32
    return %arg1, %c0_i32, %c0_i32_0 : i32, i32, i32
  }
  func.func @transform_7(%arg0: i32, %arg1: i32) -> (i32, i32, i32) {
    %c0_i32 = arith.constant 0 : i32
    %c0_i32_0 = arith.constant 0 : i32
    %c0_i32_1 = arith.constant 0 : i32
    return %arg1, %c0_i32, %c0_i32_0 : i32, i32, i32
  }
  func.func @transform_8(%arg0: i32, %arg1: i32) -> (i32, i32, i32) {
    %c0_i32 = arith.constant 0 : i32
    %c0_i32_0 = arith.constant 0 : i32
    %c0_i32_1 = arith.constant 0 : i32
    return %arg1, %c0_i32, %c0_i32_0 : i32, i32, i32
  }
  func.func @transform_9(%arg0: i32, %arg1: i32) -> (i32, i32, i32) {
    %c0_i32 = arith.constant 0 : i32
    %c0_i32_0 = arith.constant 0 : i32
    %c0_i32_1 = arith.constant 0 : i32
    return %arg1, %c0_i32, %c0_i32_0 : i32, i32, i32
  }
  func.func @transform_10(%arg0: i32, %arg1: i32) -> (i32, i32, i32) {
    %c0_i32 = arith.constant 0 : i32
    %c0_i32_0 = arith.constant 0 : i32
    %c0_i32_1 = arith.constant 0 : i32
    return %arg1, %c0_i32, %c0_i32_0 : i32, i32, i32
  }
  func.func @transform_11(%arg0: i32, %arg1: i32) -> (i32, i32, i32) {
    %c0_i32 = arith.constant 0 : i32
    %c0_i32_0 = arith.constant 0 : i32
    %c0_i32_1 = arith.constant 0 : i32
    return %arg1, %c0_i32, %c0_i32_0 : i32, i32, i32
  }
  func.func @transform_12(%arg0: i32, %arg1: i32) -> (i32, i32, i32) {
    %c0_i32 = arith.constant 0 : i32
    %c0_i32_0 = arith.constant 0 : i32
    %c0_i32_1 = arith.constant 0 : i32
    return %arg1, %c0_i32, %c0_i32_0 : i32, i32, i32
  }
  func.func @transform_13(%arg0: i32, %arg1: i32) -> (i32, i32, i32) {
    %c0_i32 = arith.constant 0 : i32
    %c0_i32_0 = arith.constant 0 : i32
    %c0_i32_1 = arith.constant 0 : i32
    return %arg0, %c0_i32, %c0_i32_0 : i32, i32, i32
  }
}

module attributes {stable_mosaic.version = 11 : i64} {
  func.func @_head_kernel(%arg0: i32, %arg1: memref<16x16xf32, #tpu.memory_space<vmem>>, %arg2: memref<1x16xf32, #tpu.memory_space<vmem>>, %arg3: memref<1x16xf32, #tpu.memory_space<vmem>>, %arg4: memref<16x32xf32, #tpu.memory_space<vmem>>, %arg5: memref<1x32xf32, #tpu.memory_space<vmem>>, %arg6: memref<16x32xf32, #tpu.memory_space<vmem>>, %arg7: memref<16x1xf32, #tpu.memory_space<vmem>>, %arg8: memref<16x32xf32, #tpu.memory_space<vmem>>, %arg9: memref<1x1xf32, #tpu.memory_space<smem>>) attributes {dimension_semantics = [#tpu.dimension_semantics<arbitrary>], iteration_bounds = array<i64: 1>, scalar_prefetch = 0 : i64, scratch_operands = 0 : i64, tpu.core_type = #tpu.core_type<tc>, window_params = [{pipeline_mode = #tpu.pipeline_mode<synchronous>, transform_indices = @transform_0, window_bounds = array<i64: 16, 16>}, {pipeline_mode = #tpu.pipeline_mode<synchronous>, transform_indices = @transform_1, window_bounds = array<i64: 1, 16>}, {pipeline_mode = #tpu.pipeline_mode<synchronous>, transform_indices = @transform_2, window_bounds = array<i64: 1, 16>}, {pipeline_mode = #tpu.pipeline_mode<synchronous>, transform_indices = @transform_3, window_bounds = array<i64: 16, 32>}, {pipeline_mode = #tpu.pipeline_mode<synchronous>, transform_indices = @transform_4, window_bounds = array<i64: 1, 32>}, {pipeline_mode = #tpu.pipeline_mode<synchronous>, transform_indices = @transform_5, window_bounds = array<i64: 16, 32>}, {pipeline_mode = #tpu.pipeline_mode<synchronous>, transform_indices = @transform_6, window_bounds = array<i64: 16, 1>}, {pipeline_mode = #tpu.pipeline_mode<synchronous>, transform_indices = @transform_7, window_bounds = array<i64: 16, 32>}, {transform_indices = @transform_8, window_bounds = array<i64: 1, 1>}]} {
    %c0 = arith.constant 0 : index
    %c0_0 = arith.constant 0 : index
    %0 = vector.load %arg1[%c0, %c0_0] : memref<16x16xf32, #tpu.memory_space<vmem>>, vector<16x16xf32>
    %c0_1 = arith.constant 0 : index
    %c0_2 = arith.constant 0 : index
    %1 = vector.load %arg2[%c0_1, %c0_2] : memref<1x16xf32, #tpu.memory_space<vmem>>, vector<1x16xf32>
    %c0_3 = arith.constant 0 : index
    %c0_4 = arith.constant 0 : index
    %2 = vector.load %arg3[%c0_3, %c0_4] : memref<1x16xf32, #tpu.memory_space<vmem>>, vector<1x16xf32>
    %cst = arith.constant dense<0.000000e+00> : vector<16xf32>
    %3 = vector.multi_reduction <add>, %0, %cst [1] : vector<16x16xf32> to vector<16xf32>
    %4 = vector.shape_cast %3 : vector<16xf32> to vector<16x1xf32>
    %cst_5 = arith.constant 1.600000e+01 : f32
    %5 = vector.broadcast %cst_5 : f32 to vector<16x1xf32>
    %6 = arith.divf %4, %5 : vector<16x1xf32>
    %7 = vector.broadcast %6 : vector<16x1xf32> to vector<16x16xf32>
    %8 = arith.subf %0, %7 : vector<16x16xf32>
    %9 = arith.mulf %8, %8 : vector<16x16xf32>
    %cst_6 = arith.constant dense<0.000000e+00> : vector<16xf32>
    %10 = vector.multi_reduction <add>, %9, %cst_6 [1] : vector<16x16xf32> to vector<16xf32>
    %11 = vector.shape_cast %10 : vector<16xf32> to vector<16x1xf32>
    %cst_7 = arith.constant 1.600000e+01 : f32
    %12 = vector.broadcast %cst_7 : f32 to vector<16x1xf32>
    %13 = arith.divf %11, %12 : vector<16x1xf32>
    %14 = vector.broadcast %6 : vector<16x1xf32> to vector<16x16xf32>
    %15 = arith.subf %0, %14 : vector<16x16xf32>
    %cst_8 = arith.constant 9.99999974E-6 : f32
    %16 = vector.broadcast %cst_8 : f32 to vector<16x1xf32>
    %17 = arith.addf %13, %16 : vector<16x1xf32>
    %18 = math.rsqrt %17 : vector<16x1xf32>
    %19 = vector.broadcast %18 : vector<16x1xf32> to vector<16x16xf32>
    %20 = arith.mulf %15, %19 : vector<16x16xf32>
    %21 = vector.broadcast %1 : vector<1x16xf32> to vector<16x16xf32>
    %22 = arith.mulf %20, %21 : vector<16x16xf32>
    %23 = vector.broadcast %2 : vector<1x16xf32> to vector<16x16xf32>
    %24 = arith.addf %22, %23 : vector<16x16xf32>
    %c0_9 = arith.constant 0 : index
    %c0_10 = arith.constant 0 : index
    %25 = vector.load %arg4[%c0_9, %c0_10] : memref<16x32xf32, #tpu.memory_space<vmem>>, vector<16x32xf32>
    %cst_11 = arith.constant dense<0.000000e+00> : vector<16x32xf32>
    %26 = tpu.matmul %24, %25, %cst_11 {dimension_numbers = #tpu.dot_dimension_numbers<[1], [0], [0], [1], [0, 0, 1, 1], [], []>} : vector<16x16xf32>, vector<16x32xf32>, vector<16x32xf32> -> vector<16x32xf32>
    %c0_12 = arith.constant 0 : index
    %c0_13 = arith.constant 0 : index
    %27 = vector.load %arg5[%c0_12, %c0_13] : memref<1x32xf32, #tpu.memory_space<vmem>>, vector<1x32xf32>
    %28 = vector.broadcast %27 : vector<1x32xf32> to vector<16x32xf32>
    %29 = arith.addf %26, %28 : vector<16x32xf32>
    %c0_14 = arith.constant 0 : index
    %c0_15 = arith.constant 0 : index
    %30 = vector.load %arg8[%c0_14, %c0_15] : memref<16x32xf32, #tpu.memory_space<vmem>>, vector<16x32xf32>
    tpu.vector_store %arg8[%c0_14, %c0_15], %29 {strides = array<i32>} : memref<16x32xf32, #tpu.memory_space<vmem>>, vector<16x32xf32>,
    %c0_16 = arith.constant 0 : index
    %c0_17 = arith.constant 0 : index
    %31 = vector.load %arg6[%c0_16, %c0_17] : memref<16x32xf32, #tpu.memory_space<vmem>>, vector<16x32xf32>
    %32 = arith.subf %29, %31 : vector<16x32xf32>
    %33 = arith.mulf %32, %32 : vector<16x32xf32>
    %cst_18 = arith.constant dense<0.000000e+00> : vector<16xf32>
    %34 = vector.multi_reduction <add>, %33, %cst_18 [1] : vector<16x32xf32> to vector<16xf32>
    %35 = vector.shape_cast %34 : vector<16xf32> to vector<16x1xf32>
    %cst_19 = arith.constant 3.200000e+01 : f32
    %36 = vector.broadcast %cst_19 : f32 to vector<16x1xf32>
    %37 = arith.divf %35, %36 : vector<16x1xf32>
    %c0_20 = arith.constant 0 : index
    %c0_21 = arith.constant 0 : index
    %38 = vector.load %arg7[%c0_20, %c0_21] : memref<16x1xf32, #tpu.memory_space<vmem>>, vector<16x1xf32>
    %39 = arith.mulf %37, %38 : vector<16x1xf32>
    %40 = vector.shape_cast %39 : vector<16x1xf32> to vector<1x16x1xf32>
    %cst_22 = arith.constant dense<0.000000e+00> : vector<1xf32>
    %41 = vector.multi_reduction <add>, %40, %cst_22 [1, 2] : vector<1x16x1xf32> to vector<1xf32>
    %42 = vector.shape_cast %41 : vector<1xf32> to vector<1x1x1xf32>
    %43 = vector.extract %42[0, 0, 0] : f32 from vector<1x1x1xf32>
    %44 = vector.shape_cast %38 : vector<16x1xf32> to vector<1x16x1xf32>
    %cst_23 = arith.constant dense<0.000000e+00> : vector<1xf32>
    %45 = vector.multi_reduction <add>, %44, %cst_23 [1, 2] : vector<1x16x1xf32> to vector<1xf32>
    %46 = vector.shape_cast %45 : vector<1xf32> to vector<1x1x1xf32>
    %47 = vector.extract %46[0, 0, 0] : f32 from vector<1x1x1xf32>
    %cst_24 = arith.constant 9.99999997E-7 : f32
    %48 = arith.maximumf %47, %cst_24 : f32
    %49 = arith.divf %43, %48 : f32
    %c0_25 = arith.constant 0 : index
    %c0_26 = arith.constant 0 : index
    %50 = memref.load %arg9[%c0_25, %c0_26] : memref<1x1xf32, #tpu.memory_space<smem>>
    memref.store %49, %arg9[%c0_25, %c0_26] : memref<1x1xf32, #tpu.memory_space<smem>>
    return
  }
  func.func @transform_0(%arg0: i32) -> (i32, i32) {
    %c0_i32 = arith.constant 0 : i32
    %c0_i32_0 = arith.constant 0 : i32
    %c0_i32_1 = arith.constant 0 : i32
    return %c0_i32, %c0_i32_0 : i32, i32
  }
  func.func @transform_1(%arg0: i32) -> (i32, i32) {
    %c0_i32 = arith.constant 0 : i32
    %c0_i32_0 = arith.constant 0 : i32
    %c0_i32_1 = arith.constant 0 : i32
    return %c0_i32, %c0_i32_0 : i32, i32
  }
  func.func @transform_2(%arg0: i32) -> (i32, i32) {
    %c0_i32 = arith.constant 0 : i32
    %c0_i32_0 = arith.constant 0 : i32
    %c0_i32_1 = arith.constant 0 : i32
    return %c0_i32, %c0_i32_0 : i32, i32
  }
  func.func @transform_3(%arg0: i32) -> (i32, i32) {
    %c0_i32 = arith.constant 0 : i32
    %c0_i32_0 = arith.constant 0 : i32
    %c0_i32_1 = arith.constant 0 : i32
    return %c0_i32, %c0_i32_0 : i32, i32
  }
  func.func @transform_4(%arg0: i32) -> (i32, i32) {
    %c0_i32 = arith.constant 0 : i32
    %c0_i32_0 = arith.constant 0 : i32
    %c0_i32_1 = arith.constant 0 : i32
    return %c0_i32, %c0_i32_0 : i32, i32
  }
  func.func @transform_5(%arg0: i32) -> (i32, i32) {
    %c0_i32 = arith.constant 0 : i32
    %c0_i32_0 = arith.constant 0 : i32
    %c0_i32_1 = arith.constant 0 : i32
    return %c0_i32, %c0_i32_0 : i32, i32
  }
  func.func @transform_6(%arg0: i32) -> (i32, i32) {
    %c0_i32 = arith.constant 0 : i32
    %c0_i32_0 = arith.constant 0 : i32
    %c0_i32_1 = arith.constant 0 : i32
    return %c0_i32, %c0_i32_0 : i32, i32
  }
  func.func @transform_7(%arg0: i32) -> (i32, i32) {
    %c0_i32 = arith.constant 0 : i32
    %c0_i32_0 = arith.constant 0 : i32
    %c0_i32_1 = arith.constant 0 : i32
    return %c0_i32, %c0_i32_0 : i32, i32
  }
  func.func @transform_8(%arg0: i32) -> (i32, i32) {
    %c0_i32 = arith.constant 0 : i32
    %c0_i32_0 = arith.constant 0 : i32
    %c0_i32_1 = arith.constant 0 : i32
    return %c0_i32, %c0_i32_0 : i32, i32
  }
}

</mosaic_0001>

<llo_original>
// kernel: forward.4
$region0: #{forward.4}
  #allocation0 [shape = 'u32[]', space=smem, size = 0x4, offset = 0x4, fixed_abs, tag = 'smem constant byte address 0x4 - core index']
  #allocation1 [shape = 'u32[72,128]{1,0:T(1,128)}', space=vmem, size = 0x9000, scoped, tag = 'internal scratch']
  #allocation2 [shape = 'f32[1,1]{1,0:T(1,128)S(1)}', space=vmem, size = 0x200, scoped, tag = 'scoped memory for forward.4']
  %s0 = inlined_call_operand.vmem [shape: f32[2,8,32], index: 0, kind: input, shape index: {}]
  %s1 = inlined_call_operand.vmem [shape: f32[1,32], index: 1, kind: input, shape index: {}]
  %s2 = inlined_call_operand.vmem [shape: f32[1,32], index: 2, kind: input, shape index: {}]
  %s3 = inlined_call_operand.vmem [shape: f32[32,16], index: 3, kind: input, shape index: {}]
  %s4 = inlined_call_operand.vmem [shape: f32[1,16], index: 4, kind: input, shape index: {}]
  %s5 = inlined_call_operand.vmem [shape: f32[1,16], index: 5, kind: input, shape index: {}]
  %s6 = inlined_call_operand.<no memory space> [shape: f32[1,1], index: 6, kind: input, shape index: {}]
  %s7 = inlined_call_operand.vmem [shape: f32[32,32], index: 7, kind: input, shape index: {}]
  %s8 = inlined_call_operand.vmem [shape: f32[1,32], index: 8, kind: input, shape index: {}]
  %s9 = inlined_call_operand.vmem [shape: f32[1,32], index: 9, kind: input, shape index: {}]
  %s10 = inlined_call_operand.vmem [shape: f32[1,32], index: 10, kind: input, shape index: {}]
  %s11 = inlined_call_operand.vmem [shape: f32[1,8,32], index: 11, kind: input, shape index: {}]
  %s12 = inlined_call_operand.vmem [shape: f32[2,8,32], index: 12, kind: output, shape index: {0}]
  %s13 = inlined_call_operand.vmem [shape: f32[2,8,1], index: 13, kind: output, shape index: {1}]
  %14 = xla_tuple %s12, %s13
  %s15 = sld [smem:[#allocation0]]
  $region89: #{forward.4} parent=0
    _
  %s17 = ssub.s32 1, %s15
  %s18 = scalar_select 0, %s17, %s15
  %v19 = vstv %s6
  %20 = vst [vmem:[#allocation2] sm:$0x1] %v19
  loop: start=0, step=1, limit=4
  $region2: #{forward.4} parent=0 // loop_pre_header
    _
  $region3: #{forward.4} parent=0 // loop_header
    %s22 = sphi 0, %s26
    %p23 = scmp.ge.s32.totalorder %s22, 4
    %s32 = sphi 0, %s34
    %s35 = sphi 0, %s32
    %s36 = sphi 0, %s35
    %s52 = sphi 0, %s36
    %s56 = sphi 0, %s56
    %s58 = sphi 0, %s56
    %s59 = sphi 0, %s58
    %s73 = sphi 0, %s59
    %s77 = sphi 0, %s77
    %s79 = sphi 0, %s77
    %s80 = sphi 0, %s79
    %s94 = sphi 0, %s80
    %s98 = sphi 0, %s98
    %s100 = sphi 0, %s98
    %s101 = sphi 0, %s100
    %s115 = sphi 0, %s101
    %s119 = sphi 0, %s119
    %s121 = sphi 0, %s119
    %s122 = sphi 0, %s121
    %s136 = sphi 0, %s122
    %s140 = sphi 0, %s140
    %s142 = sphi 0, %s140
    %s143 = sphi 0, %s142
    %s157 = sphi 0, %s143
    %s161 = sphi 0, %s161
    %s163 = sphi 0, %s161
    %s164 = sphi 0, %s163
    %s178 = sphi 0, %s164
    %s182 = sphi 0, %s182
    %s184 = sphi 0, %s182
    %s185 = sphi 0, %s184
    %s199 = sphi 0, %s185
    %s203 = sphi 0, %s203
    %s205 = sphi 0, %s203
    %s206 = sphi 0, %s205
    %s220 = sphi 0, %s206
    %s224 = sphi 0, %s224
    %s226 = sphi 0, %s224
    %s227 = sphi 0, %s226
    %s241 = sphi 0, %s227
    %s245 = sphi 0, %s245
    %s247 = sphi 0, %s245
    %s248 = sphi 0, %s247
    %s262 = sphi 0, %s248
    %s266 = sphi 0, %s266
    %s268 = sphi 0, %s266
    %s269 = sphi 0, %s268
    %s283 = sphi 0, %s269
    %s289 = sphi 0, %s291
    %s292 = sphi 0, %s289
    %s293 = sphi 0, %s292
    %s309 = sphi 0, %s293
    %s315 = sphi 0, %s317
    %s318 = sphi 0, %s315
    %s319 = sphi 0, %s318
    %s335 = sphi 0, %s319
  $region4: #{forward.4} parent=0 // loop_header_branch
    %25 = sbr.rel (%p23) target = $region8
  $region5: #{forward.4} parent=0 // loop_body
    %s27 = ssub.s32 %s22, 1
    %s28 = ssub.s32 %s22, 2
    %s29 = sadd.s32 %s22, 1
    %s30 = ssub.s32 %s22, %s29
    %p31 = scmp.eq.s32.totalorder %s30, 0
    %s33 = sadd.s32 %s32, 1
    %s34 = scalar_select %p31, %s32, %s33
    %p37 = pneg %p31
    %p38 = scmp.eq.s32.totalorder %s22, 1
    %p39 = por %p37, %p38
    %p40 = scmp.ne.s32.totalorder %s32, %s35
    %p41 = scmp.eq.s32.totalorder %s22, 0
    %p42 = por %p40, %p41
    %p43 = scmp.ne.s32.totalorder %s32, %s35
    %p44 = scmp.eq.s32.totalorder %s27, 1
    %p45 = por %p43, %p44
    %p46 = scmp.ne.s32.totalorder %s35, %s36
    %p47 = scmp.eq.s32.totalorder %s27, 0
    %p48 = por %p46, %p47
    %p49 = scmp.ne.s32.totalorder %s35, %s36
    %p50 = scmp.eq.s32.totalorder %s28, 1
    %p51 = por %p49, %p50
    %p53 = scmp.ne.s32.totalorder %s36, %s52
    %p54 = scmp.eq.s32.totalorder %s28, 0
    %p55 = por %p53, %p54
    %s57 = sadd.s32 %s56, 1
    %p60 = scmp.eq.s32.totalorder %s22, 1
    %p61 = scmp.ne.s32.totalorder %s56, %s58
    %p62 = scmp.eq.s32.totalorder %s22, 0
    %p63 = por %p61, %p62
    %p64 = scmp.ne.s32.totalorder %s56, %s58
    %p65 = scmp.eq.s32.totalorder %s27, 1
    %p66 = por %p64, %p65
    %p67 = scmp.ne.s32.totalorder %s58, %s59
    %p68 = scmp.eq.s32.totalorder %s27, 0
    %p69 = por %p67, %p68
    %p70 = scmp.ne.s32.totalorder %s58, %s59
    %p71 = scmp.eq.s32.totalorder %s28, 1
    %p72 = por %p70, %p71
    %p74 = scmp.ne.s32.totalorder %s59, %s73
    %p75 = scmp.eq.s32.totalorder %s28, 0
    %p76 = por %p74, %p75
    %s78 = sadd.s32 %s77, 1
    %p81 = scmp.eq.s32.totalorder %s22, 1
    %p82 = scmp.ne.s32.totalorder %s77, %s79
    %p83 = scmp.eq.s32.totalorder %s22, 0
    %p84 = por %p82, %p83
    %p85 = scmp.ne.s32.totalorder %s77, %s79
    %p86 = scmp.eq.s32.totalorder %s27, 1
    %p87 = por %p85, %p86
    %p88 = scmp.ne.s32.totalorder %s79, %s80
    %p89 = scmp.eq.s32.totalorder %s27, 0
    %p90 = por %p88, %p89
    %p91 = scmp.ne.s32.totalorder %s79, %s80
    %p92 = scmp.eq.s32.totalorder %s28, 1
    %p93 = por %p91, %p92
    %p95 = scmp.ne.s32.totalorder %s80, %s94
    %p96 = scmp.eq.s32.totalorder %s28, 0
    %p97 = por %p95, %p96
    %s99 = sadd.s32 %s98, 1
    %p102 = scmp.eq.s32.totalorder %s22, 1
    %p103 = scmp.ne.s32.totalorder %s98, %s100
    %p104 = scmp.eq.s32.totalorder %s22, 0
    %p105 = por %p103, %p104
    %p106 = scmp.ne.s32.totalorder %s98, %s100
    %p107 = scmp.eq.s32.totalorder %s27, 1
    %p108 = por %p106, %p107
    %p109 = scmp.ne.s32.totalorder %s100, %s101
    %p110 = scmp.eq.s32.totalorder %s27, 0
    %p111 = por %p109, %p110
    %p112 = scmp.ne.s32.totalorder %s100, %s101
    %p113 = scmp.eq.s32.totalorder %s28, 1
    %p114 = por %p112, %p113
    %p116 = scmp.ne.s32.totalorder %s101, %s115
    %p117 = scmp.eq.s32.totalorder %s28, 0
    %p118 = por %p116, %p117
    %s120 = sadd.s32 %s119, 1
    %p123 = scmp.eq.s32.totalorder %s22, 1
    %p124 = scmp.ne.s32.totalorder %s119, %s121
    %p125 = scmp.eq.s32.totalorder %s22, 0
    %p126 = por %p124, %p125
    %p127 = scmp.ne.s32.totalorder %s119, %s121
    %p128 = scmp.eq.s32.totalorder %s27, 1
    %p129 = por %p127, %p128
    %p130 = scmp.ne.s32.totalorder %s121, %s122
    %p131 = scmp.eq.s32.totalorder %s27, 0
    %p132 = por %p130, %p131
    %p133 = scmp.ne.s32.totalorder %s121, %s122
    %p134 = scmp.eq.s32.totalorder %s28, 1
    %p135 = por %p133, %p134
    %p137 = scmp.ne.s32.totalorder %s122, %s136
    %p138 = scmp.eq.s32.totalorder %s28, 0
    %p139 = por %p137, %p138
    %s141 = sadd.s32 %s140, 1
    %p144 = scmp.eq.s32.totalorder %s22, 1
    %p145 = scmp.ne.s32.totalorder %s140, %s142
    %p146 = scmp.eq.s32.totalorder %s22, 0
    %p147 = por %p145, %p146
    %p148 = scmp.ne.s32.totalorder %s140, %s142
    %p149 = scmp.eq.s32.totalorder %s27, 1
    %p150 = por %p148, %p149
    %p151 = scmp.ne.s32.totalorder %s142, %s143
    %p152 = scmp.eq.s32.totalorder %s27, 0
    %p153 = por %p151, %p152
    %p154 = scmp.ne.s32.totalorder %s142, %s143
    %p155 = scmp.eq.s32.totalorder %s28, 1
    %p156 = por %p154, %p155
    %p158 = scmp.ne.s32.totalorder %s143, %s157
    %p159 = scmp.eq.s32.totalorder %s28, 0
    %p160 = por %p158, %p159
    %s162 = sadd.s32 %s161, 1
    %p165 = scmp.eq.s32.totalorder %s22, 1
    %p166 = scmp.ne.s32.totalorder %s161, %s163
    %p167 = scmp.eq.s32.totalorder %s22, 0
    %p168 = por %p166, %p167
    %p169 = scmp.ne.s32.totalorder %s161, %s163
    %p170 = scmp.eq.s32.totalorder %s27, 1
    %p171 = por %p169, %p170
    %p172 = scmp.ne.s32.totalorder %s163, %s164
    %p173 = scmp.eq.s32.totalorder %s27, 0
    %p174 = por %p172, %p173
    %p175 = scmp.ne.s32.totalorder %s163, %s164
    %p176 = scmp.eq.s32.totalorder %s28, 1
    %p177 = por %p175, %p176
    %p179 = scmp.ne.s32.totalorder %s164, %s178
    %p180 = scmp.eq.s32.totalorder %s28, 0
    %p181 = por %p179, %p180
    %s183 = sadd.s32 %s182, 1
    %p186 = scmp.eq.s32.totalorder %s22, 1
    %p187 = scmp.ne.s32.totalorder %s182, %s184
    %p188 = scmp.eq.s32.totalorder %s22, 0
    %p189 = por %p187, %p188
    %p190 = scmp.ne.s32.totalorder %s182, %s184
    %p191 = scmp.eq.s32.totalorder %s27, 1
    %p192 = por %p190, %p191
    %p193 = scmp.ne.s32.totalorder %s184, %s185
    %p194 = scmp.eq.s32.totalorder %s27, 0
    %p195 = por %p193, %p194
    %p196 = scmp.ne.s32.totalorder %s184, %s185
    %p197 = scmp.eq.s32.totalorder %s28, 1
    %p198 = por %p196, %p197
    %p200 = scmp.ne.s32.totalorder %s185, %s199
    %p201 = scmp.eq.s32.totalorder %s28, 0
    %p202 = por %p200, %p201
    %s204 = sadd.s32 %s203, 1
    %p207 = scmp.eq.s32.totalorder %s22, 1
    %p208 = scmp.ne.s32.totalorder %s203, %s205
    %p209 = scmp.eq.s32.totalorder %s22, 0
    %p210 = por %p208, %p209
    %p211 = scmp.ne.s32.totalorder %s203, %s205
    %p212 = scmp.eq.s32.totalorder %s27, 1
    %p213 = por %p211, %p212
    %p214 = scmp.ne.s32.totalorder %s205, %s206
    %p215 = scmp.eq.s32.totalorder %s27, 0
    %p216 = por %p214, %p215
    %p217 = scmp.ne.s32.totalorder %s205, %s206
    %p218 = scmp.eq.s32.totalorder %s28, 1
    %p219 = por %p217, %p218
    %p221 = scmp.ne.s32.totalorder %s206, %s220
    %p222 = scmp.eq.s32.totalorder %s28, 0
    %p223 = por %p221, %p222
    %s225 = sadd.s32 %s224, 1
    %p228 = scmp.eq.s32.totalorder %s22, 1
    %p229 = scmp.ne.s32.totalorder %s224, %s226
    %p230 = scmp.eq.s32.totalorder %s22, 0
    %p231 = por %p229, %p230
    %p232 = scmp.ne.s32.totalorder %s224, %s226
    %p233 = scmp.eq.s32.totalorder %s27, 1
    %p234 = por %p232, %p233
    %p235 = scmp.ne.s32.totalorder %s226, %s227
    %p236 = scmp.eq.s32.totalorder %s27, 0
    %p237 = por %p235, %p236
    %p238 = scmp.ne.s32.totalorder %s226, %s227
    %p239 = scmp.eq.s32.totalorder %s28, 1
    %p240 = por %p238, %p239
    %p242 = scmp.ne.s32.totalorder %s227, %s241
    %p243 = scmp.eq.s32.totalorder %s28, 0
    %p244 = por %p242, %p243
    %s246 = sadd.s32 %s245, 1
    %p249 = scmp.eq.s32.totalorder %s22, 1
    %p250 = scmp.ne.s32.totalorder %s245, %s247
    %p251 = scmp.eq.s32.totalorder %s22, 0
    %p252 = por %p250, %p251
    %p253 = scmp.ne.s32.totalorder %s245, %s247
    %p254 = scmp.eq.s32.totalorder %s27, 1
    %p255 = por %p253, %p254
    %p256 = scmp.ne.s32.totalorder %s247, %s248
    %p257 = scmp.eq.s32.totalorder %s27, 0
    %p258 = por %p256, %p257
    %p259 = scmp.ne.s32.totalorder %s247, %s248
    %p260 = scmp.eq.s32.totalorder %s28, 1
    %p261 = por %p259, %p260
    %p263 = scmp.ne.s32.totalorder %s248, %s262
    %p264 = scmp.eq.s32.totalorder %s28, 0
    %p265 = por %p263, %p264
    %s267 = sadd.s32 %s266, 1
    %p270 = scmp.eq.s32.totalorder %s22, 1
    %p271 = scmp.ne.s32.totalorder %s266, %s268
    %p272 = scmp.eq.s32.totalorder %s22, 0
    %p273 = por %p271, %p272
    %p274 = scmp.ne.s32.totalorder %s266, %s268
    %p275 = scmp.eq.s32.totalorder %s27, 1
    %p276 = por %p274, %p275
    %p277 = scmp.ne.s32.totalorder %s268, %s269
    %p278 = scmp.eq.s32.totalorder %s27, 0
    %p279 = por %p277, %p278
    %p280 = scmp.ne.s32.totalorder %s268, %s269
    %p281 = scmp.eq.s32.totalorder %s28, 1
    %p282 = por %p280, %p281
    %p284 = scmp.ne.s32.totalorder %s269, %s283
    %p285 = scmp.eq.s32.totalorder %s28, 0
    %p286 = por %p284, %p285
    %s287 = ssub.s32 %s22, %s29
    %p288 = scmp.eq.s32.totalorder %s287, 0
    %s290 = sadd.s32 %s289, 1
    %s291 = scalar_select %p288, %s289, %s290
    %p294 = pneg %p288
    %p295 = scmp.eq.s32.totalorder %s22, 1
    %p296 = por %p294, %p295
    %p297 = scmp.ne.s32.totalorder %s289, %s292
    %p298 = scmp.eq.s32.totalorder %s22, 0
    %p299 = por %p297, %p298
    %p300 = scmp.ne.s32.totalorder %s289, %s292
    %p301 = scmp.eq.s32.totalorder %s27, 1
    %p302 = por %p300, %p301
    %p303 = scmp.ne.s32.totalorder %s292, %s293
    %p304 = scmp.eq.s32.totalorder %s27, 0
    %p305 = por %p303, %p304
    %p306 = scmp.ne.s32.totalorder %s292, %s293
    %p307 = scmp.eq.s32.totalorder %s28, 1
    %p308 = por %p306, %p307
    %p310 = scmp.ne.s32.totalorder %s293, %s309
    %p311 = scmp.eq.s32.totalorder %s28, 0
    %p312 = por %p310, %p311
    %s313 = ssub.s32 %s22, %s29
    %p314 = scmp.eq.s32.totalorder %s313, 0
    %s316 = sadd.s32 %s315, 1
    %s317 = scalar_select %p314, %s315, %s316
    %p320 = pneg %p314
    %p321 = scmp.eq.s32.totalorder %s22, 1
    %p322 = por %p320, %p321
    %p323 = scmp.ne.s32.totalorder %s315, %s318
    %p324 = scmp.eq.s32.totalorder %s22, 0
    %p325 = por %p323, %p324
    %p326 = scmp.ne.s32.totalorder %s315, %s318
    %p327 = scmp.eq.s32.totalorder %s27, 1
    %p328 = por %p326, %p327
    %p329 = scmp.ne.s32.totalorder %s318, %s319
    %p330 = scmp.eq.s32.totalorder %s27, 0
    %p331 = por %p329, %p330
    %p332 = scmp.ne.s32.totalorder %s318, %s319
    %p333 = scmp.eq.s32.totalorder %s28, 1
    %p334 = por %p332, %p333
    %p336 = scmp.ne.s32.totalorder %s319, %s335
    %p337 = scmp.eq.s32.totalorder %s28, 0
    %p338 = por %p336, %p337
    %p339 = scmp.le.s32.totalorder 1, %s22
    %p340 = scmp.lt.s32.totalorder %s22, 3
    %p341 = pnand %p339, %p340
    %p342 = pneg %p341
    // Predicated region
    $region9: #{forward.4} parent=5 // pred_check
      _
    $region10: #{forward.4} parent=5 // pred_check_branch
      %344 = sbr.rel (%p341) target = $region12
    $region11: #{forward.4} parent=5 // pred_region
      %s345 = ssub.s32 %s22, 1
      // Predicated region
      $region13: #{forward.4} parent=11 // pred_check
        %p346 = pneg %p69
      $region14: #{forward.4} parent=11 // pred_check_branch
        %348 = sbr.rel (%p346) target = $region16
      $region15: #{forward.4} parent=11 // pred_region
        _
      $region16: #{forward.4} parent=11 // pred_fallthru
        _
      // Predicated region
      $region17: #{forward.4} parent=11 // pred_check
        %p349 = pneg %p90
      $region18: #{forward.4} parent=11 // pred_check_branch
        %351 = sbr.rel (%p349) target = $region20
      $region19: #{forward.4} parent=11 // pred_region
        _
      $region20: #{forward.4} parent=11 // pred_fallthru
        _
      // Predicated region
      $region21: #{forward.4} parent=11 // pred_check
        %p352 = pneg %p111
      $region22: #{forward.4} parent=11 // pred_check_branch
        %354 = sbr.rel (%p352) target = $region24
      $region23: #{forward.4} parent=11 // pred_region
        _
      $region24: #{forward.4} parent=11 // pred_fallthru
        _
      // Predicated region
      $region25: #{forward.4} parent=11 // pred_check
        %p355 = pneg %p132
      $region26: #{forward.4} parent=11 // pred_check_branch
        %357 = sbr.rel (%p355) target = $region28
      $region27: #{forward.4} parent=11 // pred_region
        _
      $region28: #{forward.4} parent=11 // pred_fallthru
        _
      // Predicated region
      $region29: #{forward.4} parent=11 // pred_check
        %p358 = pneg %p153
      $region30: #{forward.4} parent=11 // pred_check_branch
        %360 = sbr.rel (%p358) target = $region32
      $region31: #{forward.4} parent=11 // pred_region
        _
      $region32: #{forward.4} parent=11 // pred_fallthru
        _
      // Predicated region
      $region33: #{forward.4} parent=11 // pred_check
        %p361 = pneg %p174
      $region34: #{forward.4} parent=11 // pred_check_branch
        %363 = sbr.rel (%p361) target = $region36
      $region35: #{forward.4} parent=11 // pred_region
        _
      $region36: #{forward.4} parent=11 // pred_fallthru
        _
      // Predicated region
      $region37: #{forward.4} parent=11 // pred_check
        %p364 = pneg %p195
      $region38: #{forward.4} parent=11 // pred_check_branch
        %366 = sbr.rel (%p364) target = $region40
      $region39: #{forward.4} parent=11 // pred_region
        _
      $region40: #{forward.4} parent=11 // pred_fallthru
        _
      // Predicated region
      $region41: #{forward.4} parent=11 // pred_check
        %p367 = pneg %p216
      $region42: #{forward.4} parent=11 // pred_check_branch
        %369 = sbr.rel (%p367) target = $region44
      $region43: #{forward.4} parent=11 // pred_region
        _
      $region44: #{forward.4} parent=11 // pred_fallthru
        _
      // Predicated region
      $region45: #{forward.4} parent=11 // pred_check
        %p370 = pneg %p237
      $region46: #{forward.4} parent=11 // pred_check_branch
        %372 = sbr.rel (%p370) target = $region48
      $region47: #{forward.4} parent=11 // pred_region
        _
      $region48: #{forward.4} parent=11 // pred_fallthru
        _
      // Predicated region
      $region49: #{forward.4} parent=11 // pred_check
        %p373 = pneg %p258
      $region50: #{forward.4} parent=11 // pred_check_branch
        %375 = sbr.rel (%p373) target = $region52
      $region51: #{forward.4} parent=11 // pred_region
        _
      $region52: #{forward.4} parent=11 // pred_fallthru
        _
      // Predicated region
      $region53: #{forward.4} parent=11 // pred_check
        %p376 = pneg %p279
      $region54: #{forward.4} parent=11 // pred_check_branch
        %378 = sbr.rel (%p376) target = $region56
      $region55: #{forward.4} parent=11 // pred_region
        _
      $region56: #{forward.4} parent=11 // pred_fallthru
        _
    $region12: #{forward.4} parent=5 // pred_fallthru
      _
    %p379 = scmp.lt.s32.totalorder %s22, 2
    // Predicated region
    $region57: #{forward.4} parent=5 // pred_check
      %p380 = pneg %p379
    $region58: #{forward.4} parent=5 // pred_check_branch
      %382 = sbr.rel (%p380) target = $region60
    $region59: #{forward.4} parent=5 // pred_region
      // Predicated region
      $region61: #{forward.4} parent=59 // pred_check
        %p383 = pneg %p42
      $region62: #{forward.4} parent=59 // pred_check_branch
        %385 = sbr.rel (%p383) target = $region64
      $region63: #{forward.4} parent=59 // pred_region
        %p386 = scmp.lt.s32.totalorder %s22, 1
        %s387 = scalar_select %p386, %s22, 1
        %s388 = smul.addr %s387, 8
        %s389 = scalar_lea.vmem %s0, %s388
      $region64: #{forward.4} parent=59 // pred_fallthru
        _
    $region60: #{forward.4} parent=5 // pred_fallthru
      _
    %p390 = scmp.le.s32.totalorder 1, %s22
    %p391 = scmp.lt.s32.totalorder %s22, 3
    %p392 = pnand %p390, %p391
    %p393 = pneg %p392
    // Predicated region
    $region65: #{forward.4} parent=5 // pred_check
      _
    $region66: #{forward.4} parent=5 // pred_check_branch
      %395 = sbr.rel (%p392) target = $region68
    $region67: #{forward.4} parent=5 // pred_region
      %s396 = ssub.s32 %s22, 1
      %p397 = scmp.lt.s32.totalorder %s27, 1
      %s398 = scalar_select %p397, %s27, 1
      %s399 = smul.addr %s398, 8
      %s400 = scalar_lea.vmem %s0, %s399
      %p401 = pneg %p48
      %p402 = pneg %p45
      %p403 = pneg %p69
      %p404 = pneg %p66
      %p405 = pneg %p90
      %p406 = pneg %p87
      %p407 = pneg %p111
      %p408 = pneg %p108
      %p409 = pneg %p132
      %p410 = pneg %p129
      %p411 = pneg %p153
      %p412 = pneg %p150
      %p413 = pneg %p174
      %p414 = pneg %p171
      %p415 = pneg %p195
      %p416 = pneg %p192
      %p417 = pneg %p216
      %p418 = pneg %p213
      %p419 = pneg %p237
      %p420 = pneg %p234
      %p421 = pneg %p258
      %p422 = pneg %p255
      %p423 = pneg %p279
      %p424 = pneg %p276
      %p425 = pneg %p305
      %p426 = pneg %p302
      %p427 = scmp.lt.s32.totalorder %s27, 1
      %s428 = scalar_select %p427, %s27, 1
      %s429 = smul.addr %s428, 8
      %s430 = scalar_lea.vmem %s12, %s429
      %p431 = pneg %p331
      %p432 = pneg %p328
      %p433 = scmp.lt.s32.totalorder %s27, 1
      %s434 = scalar_select %p433, %s27, 1
      %s435 = smul.addr %s434, 8
      %s436 = scalar_lea.vmem %s13, %s435
      %p437 = scmp.lt.s32.totalorder %s27, 1
      %s438 = scalar_select %p437, %s27, 1
      %s439 = smul.addr %s438, 8
      %s440 = scalar_lea.vmem %s0, %s439
      %p441 = scmp.lt.s32.totalorder %s27, 1
      %s442 = scalar_select %p441, %s27, 1
      %s443 = smul.addr %s442, 8
      %s444 = scalar_lea.vmem %s12, %s443
      %p445 = scmp.lt.s32.totalorder %s27, 1
      %s446 = scalar_select %p445, %s27, 1
      %s447 = smul.addr %s446, 8
      %s448 = scalar_lea.vmem %s13, %s447
      %v449 = vld [vmem:[%s440] sm:$0xff]
      %v450 = vld [vmem:[%s1] sm:$0x1]
      %v451 = vld [vmem:[%s2] sm:$0x1]
      %vm452 = vcmask 261120
      %v453 = vsel %vm452, %v449, 0.0
      %454 = vadd.xlane.f32.xlu0 %v453
      %v455 = vpop.xlane.xlu0 %454
      %v456 = vrcp.pop 32.0
      %v457 = vmul.f32 32.0, %v456
      %v458 = vsub.f32 1.0, %v457
      %v459 = vmul.f32 %v456, %v458
      %v460 = vadd.f32 %v456, %v459
      %vm461 = vweird.f32 %v456
      %v462 = vsel %vm461, %v456, %v460
      %v463 = vmul.f32 %v455, %v462
      %v464 = vsub.f32 %v449, %v463
      %v465 = vmul.f32 %v464, %v464
      %v466 = vsel %vm452, %v465, 0.0
      %467 = vadd.xlane.f32.xlu0 %v466
      %v468 = vpop.xlane.xlu0 %467
      %v469 = vmul.f32 %v468, %v462
      %v470 = vadd.f32 %v469, 1e-06
      %v471 = vrsqrt.pop %v470
      %v472 = vmul.f32 %v471, %v470
      %v473 = vmul.f32 %v472, %v471
      %v474 = vmul.f32 0.5, %v473
      %v475 = vsub.f32 1.5, %v474
      %v476 = vmul.f32 %v471, %v475
      %vm477 = vweird.f32 %v470
      %vm478 = vweird.f32 %v471
      %vm479 = vmor %vm477, %vm478
      %v480 = vsel %vm479, %v471, %v476
      %v481 = vmul.f32 %v464, %v480
      %v483 = vperm.slane %v450, 0
      %v485 = vmul.f32 %v481, %v483
      %v487 = vperm.slane %v451, 0
      %v489 = vadd.f32 %v485, %v487
      %v490 = vld [vmem:[%s3] sm:$0xff]
      %v491 = vld [vmem:[%s3 + $0x8] sm:$0xff]
      %v492 = vld [vmem:[%s3 + $0x10] sm:$0xff]
      %v493 = vld [vmem:[%s3 + $0x18] sm:$0xff]
      %v494 = vld [vmem:[%s4] sm:$0x1]
      %v496 = vperm.slane %v494, 0
      %v499 = vsel %vm452, %v489, 0
      %501 = vmatpush.msra.mxu0 0.0
      %502 = vmatpush.msra.mxu0 0.0
      %503 = vmatpush.msra.mxu0 0.0
      %504 = vmatpush.msra.mxu0 0.0
      %505 = vmatpush.msra.mxu0 0.0
      %506 = vmatpush.msra.mxu0 0.0
      %507 = vmatpush.msra.mxu0 0.0
      %508 = vmatpush.msra.mxu0 0.0
      %509 = vmatpush.msra.mxu0 0.0
      %510 = vmatpush.msra.mxu0 0.0
      %511 = vmatpush.msra.mxu0 0.0
      %512 = vmatpush.msra.mxu0 0.0
      %513 = vmatpush.msra.mxu0 %v493
      %514 = vmatpush.msra.mxu0 %v492
      %515 = vmatpush.msra.mxu0 %v491
      %516 = vmatpush.msra.mxu0 %v490
      %517 = vmatmul.f32.gmra.mxu0 %v499
      %v518 = vpop.f32.mrf.mxu0
      %v519 = vadd.f32 %v496, %v518
      %520 = vdwg.mxu0
      %v521 = vmax.f32 %v519, 0.0
      %v522 = vld [vmem:[%s5] sm:$0x1]
      %v524 = vperm.slane %v522, 0
      %v526 = vmul.f32 %v521, %v524
      %vm527 = vcmask 130048
      %v528 = vsel %vm527, %v526, 0.0
      %529 = vadd.xlane.f32.xlu0 %v528
      %v530 = vpop.xlane.xlu0 %529
      %v531 = vld [vmem:[#allocation2] sm:$0x1]
      %v533 = vperm.slane %v531, 0
      %v535 = vadd.f32 %v530, %v533
      %vm536 = vcmask 7168
      %537 = vst.msk [vmem:[%s448] sm:$0xff] %vm536, %v535
      %v538 = vld [vmem:[%s7] sm:$0xff]
      %v539 = vld [vmem:[%s7 + $0x8] sm:$0xff]
      %v540 = vld [vmem:[%s7 + $0x10] sm:$0xff]
      %v541 = vld [vmem:[%s7 + $0x18] sm:$0xff]
      %v542 = vld [vmem:[%s8] sm:$0x1]
      %v544 = vperm.slane %v542, 0
      %546 = vmatpush.msra.mxu0 0.0
      %547 = vmatpush.msra.mxu0 0.0
      %548 = vmatpush.msra.mxu0 0.0
      %549 = vmatpush.msra.mxu0 0.0
      %550 = vmatpush.msra.mxu0 0.0
      %551 = vmatpush.msra.mxu0 0.0
      %552 = vmatpush.msra.mxu0 0.0
      %553 = vmatpush.msra.mxu0 0.0
      %554 = vmatpush.msra.mxu0 0.0
      %555 = vmatpush.msra.mxu0 0.0
      %556 = vmatpush.msra.mxu0 0.0
      %557 = vmatpush.msra.mxu0 0.0
      %558 = vmatpush.msra.mxu0 %v541
      %559 = vmatpush.msra.mxu0 %v540
      %560 = vmatpush.msra.mxu0 %v539
      %561 = vmatpush.msra.mxu0 %v538
      %562 = vmatmul.f32.gmra.mxu0 %v499
      %v563 = vpop.f32.mrf.mxu0
      %v564 = vadd.f32 %v544, %v563
      %565 = vdwg.mxu0
      %v566 = vld [vmem:[%s9] sm:$0x1]
      %v567 = vld [vmem:[%s10] sm:$0x1]
      %v568 = vsel %vm452, %v564, 0.0
      %569 = vadd.xlane.f32.xlu0 %v568
      %v570 = vpop.xlane.xlu0 %569
      %v571 = vmul.f32 %v570, %v462
      %v572 = vsub.f32 %v564, %v571
      %v573 = vmul.f32 %v572, %v572
      %v574 = vsel %vm452, %v573, 0.0
      %575 = vadd.xlane.f32.xlu0 %v574
      %v576 = vpop.xlane.xlu0 %575
      %v577 = vmul.f32 %v576, %v462
      %v578 = vadd.f32 %v577, 1e-05
      %v579 = vrsqrt.pop %v578
      %v580 = vmul.f32 %v579, %v578
      %v581 = vmul.f32 %v580, %v579
      %v582 = vmul.f32 0.5, %v581
      %v583 = vsub.f32 1.5, %v582
      %v584 = vmul.f32 %v579, %v583
      %vm585 = vweird.f32 %v578
      %vm586 = vweird.f32 %v579
      %vm587 = vmor %vm585, %vm586
      %v588 = vsel %vm587, %v579, %v584
      %v589 = vmul.f32 %v572, %v588
      %v591 = vperm.slane %v566, 0
      %v593 = vmul.f32 %v589, %v591
      %v595 = vperm.slane %v567, 0
      %v597 = vadd.f32 %v593, %v595
      %v598 = vld [vmem:[%s11] sm:$0xff]
      %v599 = vadd.f32 %v597, %v598
      %600 = vst.msk [vmem:[%s444] sm:$0xff] %vm452, %v599
      %p601 = scmp.lt.s32.totalorder %s27, 1
      %s602 = scalar_select %p601, %s27, 1
      %s603 = smul.addr %s602, 8
      %s604 = scalar_lea.vmem %s12, %s603
      %p605 = scmp.lt.s32.totalorder %s27, 1
      %s606 = scalar_select %p605, %s27, 1
      %s607 = smul.addr %s606, 8
      %s608 = scalar_lea.vmem %s13, %s607
      // Predicated region
      $region69: #{forward.4} parent=67 // pred_check
        %p609 = pneg %p302
      $region70: #{forward.4} parent=67 // pred_check_branch
        %611 = sbr.rel (%p609) target = $region72
      $region71: #{forward.4} parent=67 // pred_region
        _
      $region72: #{forward.4} parent=67 // pred_fallthru
        _
      // Predicated region
      $region73: #{forward.4} parent=67 // pred_check
        %p612 = pneg %p328
      $region74: #{forward.4} parent=67 // pred_check_branch
        %614 = sbr.rel (%p612) target = $region76
      $region75: #{forward.4} parent=67 // pred_region
        _
      $region76: #{forward.4} parent=67 // pred_fallthru
        _
    $region68: #{forward.4} parent=5 // pred_fallthru
      _
    %p615 = scmp.le.s32.totalorder 2, %s22
    // Predicated region
    $region77: #{forward.4} parent=5 // pred_check
      %p616 = pneg %p615
    $region78: #{forward.4} parent=5 // pred_check_branch
      %618 = sbr.rel (%p616) target = $region80
    $region79: #{forward.4} parent=5 // pred_region
      %s619 = ssub.s32 %s22, 2
      // Predicated region
      $region81: #{forward.4} parent=79 // pred_check
        %p620 = pneg %p308
      $region82: #{forward.4} parent=79 // pred_check_branch
        %622 = sbr.rel (%p620) target = $region84
      $region83: #{forward.4} parent=79 // pred_region
        %p623 = scmp.lt.s32.totalorder %s28, 1
        %s624 = scalar_select %p623, %s28, 1
        %s625 = smul.addr %s624, 8
        %s626 = scalar_lea.vmem %s12, %s625
      $region84: #{forward.4} parent=79 // pred_fallthru
        _
      // Predicated region
      $region85: #{forward.4} parent=79 // pred_check
        %p627 = pneg %p334
      $region86: #{forward.4} parent=79 // pred_check_branch
        %629 = sbr.rel (%p627) target = $region88
      $region87: #{forward.4} parent=79 // pred_region
        %p630 = scmp.lt.s32.totalorder %s28, 1
        %s631 = scalar_select %p630, %s28, 1
        %s632 = smul.addr %s631, 8
        %s633 = scalar_lea.vmem %s13, %s632
      $region88: #{forward.4} parent=79 // pred_fallthru
        _
    $region80: #{forward.4} parent=5 // pred_fallthru
      _
  $region6: #{forward.4} parent=0 // loop_footer
    %s26 = sadd.s32 1, %s22
  $region7: #{forward.4} parent=0 // loop_footer_branch
    %21 = sbr.rel target = $region3
  $region8: #{forward.4} parent=0 // loop_exit
    _

// kernel: forward.5
$region0: #{forward.5}
  #allocation0 [shape = 'u32[]', space=smem, size = 0x4, offset = 0x4, fixed_abs, tag = 'smem constant byte address 0x4 - core index']
  #allocation1 [shape = 'u32[72,128]{1,0:T(1,128)}', space=vmem, size = 0x9000, scoped, tag = 'internal scratch']
  #allocation2 [shape = 'f32[3,32]{1,0:T(4,128)}', space=vmem, size = 0x800, scoped, tag = 'scratch operand']
  %s0 = inlined_call_operand.vmem [shape: f32[2,3,32], index: 0, kind: input, shape index: {}]
  %s1 = inlined_call_operand.vmem [shape: f32[2,1,32], index: 1, kind: input, shape index: {}]
  %s2 = inlined_call_operand.vmem [shape: f32[2,1,32], index: 2, kind: input, shape index: {}]
  %s3 = inlined_call_operand.vmem [shape: f32[2,32,96], index: 3, kind: input, shape index: {}]
  %s4 = inlined_call_operand.vmem [shape: f32[2,1,96], index: 4, kind: input, shape index: {}]
  %s5 = inlined_call_operand.vmem [shape: f32[2,4,8,32], index: 5, kind: input, shape index: {}]
  %s6 = inlined_call_operand.vmem [shape: f32[2,1,32], index: 6, kind: input, shape index: {}]
  %s7 = inlined_call_operand.vmem [shape: f32[2,1,32], index: 7, kind: input, shape index: {}]
  %s8 = inlined_call_operand.vmem [shape: f32[2,1,32], index: 8, kind: input, shape index: {}]
  %s9 = inlined_call_operand.vmem [shape: f32[2,32,128], index: 9, kind: input, shape index: {}]
  %s10 = inlined_call_operand.vmem [shape: f32[2,1,128], index: 10, kind: input, shape index: {}]
  %s11 = inlined_call_operand.vmem [shape: f32[2,128,32], index: 11, kind: input, shape index: {}]
  %s12 = inlined_call_operand.vmem [shape: f32[2,1,32], index: 12, kind: input, shape index: {}]
  %s13 = inlined_call_operand.vmem [shape: f32[1,32], index: 13, kind: input, shape index: {}]
  %s14 = inlined_call_operand.vmem [shape: f32[1,32], index: 14, kind: input, shape index: {}]
  %s15 = inlined_call_operand.vmem [shape: f32[32,16], index: 15, kind: input, shape index: {}]
  %s16 = inlined_call_operand.vmem [shape: f32[1,16], index: 16, kind: input, shape index: {}]
  %s17 = inlined_call_operand.vmem [shape: f32[2,3,16], index: 17, kind: output, shape index: {}]
  %s18 = sld [smem:[#allocation0]]
  $region109: #{forward.5} parent=0
    _
  %s20 = ssub.s32 1, %s18
  %s21 = scalar_select 0, %s20, %s18
  loop: start=0, step=1, limit=6
  $region2: #{forward.5} parent=0 // loop_pre_header
    _
  $region3: #{forward.5} parent=0 // loop_header
    %s23 = sphi 0, %s27
    %p24 = scmp.ge.s32.totalorder %s23, 6
    %s30 = sphi 0, %s42
    %s31 = sphi 0, %s38
    %s32 = sphi 0, %s30
    %s33 = sphi 0, %s31
    %s34 = sphi 0, %s32
    %s35 = sphi 0, %s33
    %s45 = sphi 0, %s47
    %s48 = sphi 0, %s45
    %s49 = sphi 0, %s48
    %s65 = sphi 0, %s49
    %s71 = sphi 0, %s73
    %s74 = sphi 0, %s71
    %s75 = sphi 0, %s74
    %s91 = sphi 0, %s75
    %s97 = sphi 0, %s99
    %s100 = sphi 0, %s97
    %s101 = sphi 0, %s100
    %s117 = sphi 0, %s101
    %s123 = sphi 0, %s125
    %s126 = sphi 0, %s123
    %s127 = sphi 0, %s126
    %s143 = sphi 0, %s127
    %s149 = sphi 0, %s151
    %s152 = sphi 0, %s149
    %s153 = sphi 0, %s152
    %s169 = sphi 0, %s153
    %s175 = sphi 0, %s177
    %s178 = sphi 0, %s175
    %s179 = sphi 0, %s178
    %s195 = sphi 0, %s179
    %s201 = sphi 0, %s203
    %s204 = sphi 0, %s201
    %s205 = sphi 0, %s204
    %s221 = sphi 0, %s205
    %s227 = sphi 0, %s229
    %s230 = sphi 0, %s227
    %s231 = sphi 0, %s230
    %s247 = sphi 0, %s231
    %s253 = sphi 0, %s255
    %s256 = sphi 0, %s253
    %s257 = sphi 0, %s256
    %s273 = sphi 0, %s257
    %s279 = sphi 0, %s281
    %s282 = sphi 0, %s279
    %s283 = sphi 0, %s282
    %s299 = sphi 0, %s283
    %s305 = sphi 0, %s307
    %s308 = sphi 0, %s305
    %s309 = sphi 0, %s308
    %s325 = sphi 0, %s309
    %s331 = sphi 0, %s333
    %s334 = sphi 0, %s331
    %s335 = sphi 0, %s334
    %s351 = sphi 0, %s335
    %s357 = sphi 0, %s359
    %s360 = sphi 0, %s357
    %s361 = sphi 0, %s360
    %s377 = sphi 0, %s361
    %s381 = sphi 0, %s381
    %s383 = sphi 0, %s381
    %s384 = sphi 0, %s383
    %s398 = sphi 0, %s384
    %s402 = sphi 0, %s402
    %s404 = sphi 0, %s402
    %s405 = sphi 0, %s404
    %s419 = sphi 0, %s405
    %s423 = sphi 0, %s423
    %s425 = sphi 0, %s423
    %s426 = sphi 0, %s425
    %s440 = sphi 0, %s426
    %s444 = sphi 0, %s444
    %s446 = sphi 0, %s444
    %s447 = sphi 0, %s446
    %s461 = sphi 0, %s447
    %s467 = sphi 0, %s469
    %s470 = sphi 0, %s467
    %s471 = sphi 0, %s470
    %s487 = sphi 0, %s471
  $region4: #{forward.5} parent=0 // loop_header_branch
    %26 = sbr.rel (%p24) target = $region8
  $region5: #{forward.5} parent=0 // loop_body
    %s28 = ssub.s32 %s23, 1
    %s29 = ssub.s32 %s23, 2
    %s36 = sadd.s32 1, %s31
    %p37 = scmp.ge.s32.totalorder %s36, 2
    %s38 = scalar_select %p37, 0, %s36
    %s39 = sadd.s32 1, %s30
    %s40 = scalar_select %p37, %s39, %s30
    %p41 = scmp.ge.s32.totalorder %s40, 2
    %s42 = scalar_select %p41, 0, %s40
    %s43 = ssub.s32 %s30, %s42
    %p44 = scmp.eq.s32.totalorder %s43, 0
    %s46 = sadd.s32 %s45, 1
    %s47 = scalar_select %p44, %s45, %s46
    %p50 = pneg %p44
    %p51 = scmp.eq.s32.totalorder %s23, 3
    %p52 = por %p50, %p51
    %p53 = scmp.ne.s32.totalorder %s45, %s48
    %p54 = scmp.eq.s32.totalorder %s23, 0
    %p55 = por %p53, %p54
    %p56 = scmp.ne.s32.totalorder %s45, %s48
    %p57 = scmp.eq.s32.totalorder %s28, 3
    %p58 = por %p56, %p57
    %p59 = scmp.ne.s32.totalorder %s48, %s49
    %p60 = scmp.eq.s32.totalorder %s28, 0
    %p61 = por %p59, %p60
    %p62 = scmp.ne.s32.totalorder %s48, %s49
    %p63 = scmp.eq.s32.totalorder %s29, 3
    %p64 = por %p62, %p63
    %p66 = scmp.ne.s32.totalorder %s49, %s65
    %p67 = scmp.eq.s32.totalorder %s29, 0
    %p68 = por %p66, %p67
    %s69 = ssub.s32 %s31, %s38
    %p70 = scmp.eq.s32.totalorder %s69, 0
    %s72 = sadd.s32 %s71, 1
    %s73 = scalar_select %p70, %s71, %s72
    %p76 = pneg %p70
    %p77 = scmp.eq.s32.totalorder %s23, 3
    %p78 = por %p76, %p77
    %p79 = scmp.ne.s32.totalorder %s71, %s74
    %p80 = scmp.eq.s32.totalorder %s23, 0
    %p81 = por %p79, %p80
    %p82 = scmp.ne.s32.totalorder %s71, %s74
    %p83 = scmp.eq.s32.totalorder %s28, 3
    %p84 = por %p82, %p83
    %p85 = scmp.ne.s32.totalorder %s74, %s75
    %p86 = scmp.eq.s32.totalorder %s28, 0
    %p87 = por %p85, %p86
    %p88 = scmp.ne.s32.totalorder %s74, %s75
    %p89 = scmp.eq.s32.totalorder %s29, 3
    %p90 = por %p88, %p89
    %p92 = scmp.ne.s32.totalorder %s75, %s91
    %p93 = scmp.eq.s32.totalorder %s29, 0
    %p94 = por %p92, %p93
    %s95 = ssub.s32 %s31, %s38
    %p96 = scmp.eq.s32.totalorder %s95, 0
    %s98 = sadd.s32 %s97, 1
    %s99 = scalar_select %p96, %s97, %s98
    %p102 = pneg %p96
    %p103 = scmp.eq.s32.totalorder %s23, 3
    %p104 = por %p102, %p103
    %p105 = scmp.ne.s32.totalorder %s97, %s100
    %p106 = scmp.eq.s32.totalorder %s23, 0
    %p107 = por %p105, %p106
    %p108 = scmp.ne.s32.totalorder %s97, %s100
    %p109 = scmp.eq.s32.totalorder %s28, 3
    %p110 = por %p108, %p109
    %p111 = scmp.ne.s32.totalorder %s100, %s101
    %p112 = scmp.eq.s32.totalorder %s28, 0
    %p113 = por %p111, %p112
    %p114 = scmp.ne.s32.totalorder %s100, %s101
    %p115 = scmp.eq.s32.totalorder %s29, 3
    %p116 = por %p114, %p115
    %p118 = scmp.ne.s32.totalorder %s101, %s117
    %p119 = scmp.eq.s32.totalorder %s29, 0
    %p120 = por %p118, %p119
    %s121 = ssub.s32 %s31, %s38
    %p122 = scmp.eq.s32.totalorder %s121, 0
    %s124 = sadd.s32 %s123, 1
    %s125 = scalar_select %p122, %s123, %s124
    %p128 = pneg %p122
    %p129 = scmp.eq.s32.totalorder %s23, 3
    %p130 = por %p128, %p129
    %p131 = scmp.ne.s32.totalorder %s123, %s126
    %p132 = scmp.eq.s32.totalorder %s23, 0
    %p133 = por %p131, %p132
    %p134 = scmp.ne.s32.totalorder %s123, %s126
    %p135 = scmp.eq.s32.totalorder %s28, 3
    %p136 = por %p134, %p135
    %p137 = scmp.ne.s32.totalorder %s126, %s127
    %p138 = scmp.eq.s32.totalorder %s28, 0
    %p139 = por %p137, %p138
    %p140 = scmp.ne.s32.totalorder %s126, %s127
    %p141 = scmp.eq.s32.totalorder %s29, 3
    %p142 = por %p140, %p141
    %p144 = scmp.ne.s32.totalorder %s127, %s143
    %p145 = scmp.eq.s32.totalorder %s29, 0
    %p146 = por %p144, %p145
    %s147 = ssub.s32 %s31, %s38
    %p148 = scmp.eq.s32.totalorder %s147, 0
    %s150 = sadd.s32 %s149, 1
    %s151 = scalar_select %p148, %s149, %s150
    %p154 = pneg %p148
    %p155 = scmp.eq.s32.totalorder %s23, 3
    %p156 = por %p154, %p155
    %p157 = scmp.ne.s32.totalorder %s149, %s152
    %p158 = scmp.eq.s32.totalorder %s23, 0
    %p159 = por %p157, %p158
    %p160 = scmp.ne.s32.totalorder %s149, %s152
    %p161 = scmp.eq.s32.totalorder %s28, 3
    %p162 = por %p160, %p161
    %p163 = scmp.ne.s32.totalorder %s152, %s153
    %p164 = scmp.eq.s32.totalorder %s28, 0
    %p165 = por %p163, %p164
    %p166 = scmp.ne.s32.totalorder %s152, %s153
    %p167 = scmp.eq.s32.totalorder %s29, 3
    %p168 = por %p166, %p167
    %p170 = scmp.ne.s32.totalorder %s153, %s169
    %p171 = scmp.eq.s32.totalorder %s29, 0
    %p172 = por %p170, %p171
    %s173 = ssub.s32 %s31, %s38
    %p174 = scmp.eq.s32.totalorder %s173, 0
    %s176 = sadd.s32 %s175, 1
    %s177 = scalar_select %p174, %s175, %s176
    %p180 = pneg %p174
    %p181 = scmp.eq.s32.totalorder %s23, 3
    %p182 = por %p180, %p181
    %p183 = scmp.ne.s32.totalorder %s175, %s178
    %p184 = scmp.eq.s32.totalorder %s23, 0
    %p185 = por %p183, %p184
    %p186 = scmp.ne.s32.totalorder %s175, %s178
    %p187 = scmp.eq.s32.totalorder %s28, 3
    %p188 = por %p186, %p187
    %p189 = scmp.ne.s32.totalorder %s178, %s179
    %p190 = scmp.eq.s32.totalorder %s28, 0
    %p191 = por %p189, %p190
    %p192 = scmp.ne.s32.totalorder %s178, %s179
    %p193 = scmp.eq.s32.totalorder %s29, 3
    %p194 = por %p192, %p193
    %p196 = scmp.ne.s32.totalorder %s179, %s195
    %p197 = scmp.eq.s32.totalorder %s29, 0
    %p198 = por %p196, %p197
    %s199 = ssub.s32 %s31, %s38
    %p200 = scmp.eq.s32.totalorder %s199, 0
    %s202 = sadd.s32 %s201, 1
    %s203 = scalar_select %p200, %s201, %s202
    %p206 = pneg %p200
    %p207 = scmp.eq.s32.totalorder %s23, 3
    %p208 = por %p206, %p207
    %p209 = scmp.ne.s32.totalorder %s201, %s204
    %p210 = scmp.eq.s32.totalorder %s23, 0
    %p211 = por %p209, %p210
    %p212 = scmp.ne.s32.totalorder %s201, %s204
    %p213 = scmp.eq.s32.totalorder %s28, 3
    %p214 = por %p212, %p213
    %p215 = scmp.ne.s32.totalorder %s204, %s205
    %p216 = scmp.eq.s32.totalorder %s28, 0
    %p217 = por %p215, %p216
    %p218 = scmp.ne.s32.totalorder %s204, %s205
    %p219 = scmp.eq.s32.totalorder %s29, 3
    %p220 = por %p218, %p219
    %p222 = scmp.ne.s32.totalorder %s205, %s221
    %p223 = scmp.eq.s32.totalorder %s29, 0
    %p224 = por %p222, %p223
    %s225 = ssub.s32 %s31, %s38
    %p226 = scmp.eq.s32.totalorder %s225, 0
    %s228 = sadd.s32 %s227, 1
    %s229 = scalar_select %p226, %s227, %s228
    %p232 = pneg %p226
    %p233 = scmp.eq.s32.totalorder %s23, 3
    %p234 = por %p232, %p233
    %p235 = scmp.ne.s32.totalorder %s227, %s230
    %p236 = scmp.eq.s32.totalorder %s23, 0
    %p237 = por %p235, %p236
    %p238 = scmp.ne.s32.totalorder %s227, %s230
    %p239 = scmp.eq.s32.totalorder %s28, 3
    %p240 = por %p238, %p239
    %p241 = scmp.ne.s32.totalorder %s230, %s231
    %p242 = scmp.eq.s32.totalorder %s28, 0
    %p243 = por %p241, %p242
    %p244 = scmp.ne.s32.totalorder %s230, %s231
    %p245 = scmp.eq.s32.totalorder %s29, 3
    %p246 = por %p244, %p245
    %p248 = scmp.ne.s32.totalorder %s231, %s247
    %p249 = scmp.eq.s32.totalorder %s29, 0
    %p250 = por %p248, %p249
    %s251 = ssub.s32 %s31, %s38
    %p252 = scmp.eq.s32.totalorder %s251, 0
    %s254 = sadd.s32 %s253, 1
    %s255 = scalar_select %p252, %s253, %s254
    %p258 = pneg %p252
    %p259 = scmp.eq.s32.totalorder %s23, 3
    %p260 = por %p258, %p259
    %p261 = scmp.ne.s32.totalorder %s253, %s256
    %p262 = scmp.eq.s32.totalorder %s23, 0
    %p263 = por %p261, %p262
    %p264 = scmp.ne.s32.totalorder %s253, %s256
    %p265 = scmp.eq.s32.totalorder %s28, 3
    %p266 = por %p264, %p265
    %p267 = scmp.ne.s32.totalorder %s256, %s257
    %p268 = scmp.eq.s32.totalorder %s28, 0
    %p269 = por %p267, %p268
    %p270 = scmp.ne.s32.totalorder %s256, %s257
    %p271 = scmp.eq.s32.totalorder %s29, 3
    %p272 = por %p270, %p271
    %p274 = scmp.ne.s32.totalorder %s257, %s273
    %p275 = scmp.eq.s32.totalorder %s29, 0
    %p276 = por %p274, %p275
    %s277 = ssub.s32 %s31, %s38
    %p278 = scmp.eq.s32.totalorder %s277, 0
    %s280 = sadd.s32 %s279, 1
    %s281 = scalar_select %p278, %s279, %s280
    %p284 = pneg %p278
    %p285 = scmp.eq.s32.totalorder %s23, 3
    %p286 = por %p284, %p285
    %p287 = scmp.ne.s32.totalorder %s279, %s282
    %p288 = scmp.eq.s32.totalorder %s23, 0
    %p289 = por %p287, %p288
    %p290 = scmp.ne.s32.totalorder %s279, %s282
    %p291 = scmp.eq.s32.totalorder %s28, 3
    %p292 = por %p290, %p291
    %p293 = scmp.ne.s32.totalorder %s282, %s283
    %p294 = scmp.eq.s32.totalorder %s28, 0
    %p295 = por %p293, %p294
    %p296 = scmp.ne.s32.totalorder %s282, %s283
    %p297 = scmp.eq.s32.totalorder %s29, 3
    %p298 = por %p296, %p297
    %p300 = scmp.ne.s32.totalorder %s283, %s299
    %p301 = scmp.eq.s32.totalorder %s29, 0
    %p302 = por %p300, %p301
    %s303 = ssub.s32 %s31, %s38
    %p304 = scmp.eq.s32.totalorder %s303, 0
    %s306 = sadd.s32 %s305, 1
    %s307 = scalar_select %p304, %s305, %s306
    %p310 = pneg %p304
    %p311 = scmp.eq.s32.totalorder %s23, 3
    %p312 = por %p310, %p311
    %p313 = scmp.ne.s32.totalorder %s305, %s308
    %p314 = scmp.eq.s32.totalorder %s23, 0
    %p315 = por %p313, %p314
    %p316 = scmp.ne.s32.totalorder %s305, %s308
    %p317 = scmp.eq.s32.totalorder %s28, 3
    %p318 = por %p316, %p317
    %p319 = scmp.ne.s32.totalorder %s308, %s309
    %p320 = scmp.eq.s32.totalorder %s28, 0
    %p321 = por %p319, %p320
    %p322 = scmp.ne.s32.totalorder %s308, %s309
    %p323 = scmp.eq.s32.totalorder %s29, 3
    %p324 = por %p322, %p323
    %p326 = scmp.ne.s32.totalorder %s309, %s325
    %p327 = scmp.eq.s32.totalorder %s29, 0
    %p328 = por %p326, %p327
    %s329 = ssub.s32 %s31, %s38
    %p330 = scmp.eq.s32.totalorder %s329, 0
    %s332 = sadd.s32 %s331, 1
    %s333 = scalar_select %p330, %s331, %s332
    %p336 = pneg %p330
    %p337 = scmp.eq.s32.totalorder %s23, 3
    %p338 = por %p336, %p337
    %p339 = scmp.ne.s32.totalorder %s331, %s334
    %p340 = scmp.eq.s32.totalorder %s23, 0
    %p341 = por %p339, %p340
    %p342 = scmp.ne.s32.totalorder %s331, %s334
    %p343 = scmp.eq.s32.totalorder %s28, 3
    %p344 = por %p342, %p343
    %p345 = scmp.ne.s32.totalorder %s334, %s335
    %p346 = scmp.eq.s32.totalorder %s28, 0
    %p347 = por %p345, %p346
    %p348 = scmp.ne.s32.totalorder %s334, %s335
    %p349 = scmp.eq.s32.totalorder %s29, 3
    %p350 = por %p348, %p349
    %p352 = scmp.ne.s32.totalorder %s335, %s351
    %p353 = scmp.eq.s32.totalorder %s29, 0
    %p354 = por %p352, %p353
    %s355 = ssub.s32 %s31, %s38
    %p356 = scmp.eq.s32.totalorder %s355, 0
    %s358 = sadd.s32 %s357, 1
    %s359 = scalar_select %p356, %s357, %s358
    %p362 = pneg %p356
    %p363 = scmp.eq.s32.totalorder %s23, 3
    %p364 = por %p362, %p363
    %p365 = scmp.ne.s32.totalorder %s357, %s360
    %p366 = scmp.eq.s32.totalorder %s23, 0
    %p367 = por %p365, %p366
    %p368 = scmp.ne.s32.totalorder %s357, %s360
    %p369 = scmp.eq.s32.totalorder %s28, 3
    %p370 = por %p368, %p369
    %p371 = scmp.ne.s32.totalorder %s360, %s361
    %p372 = scmp.eq.s32.totalorder %s28, 0
    %p373 = por %p371, %p372
    %p374 = scmp.ne.s32.totalorder %s360, %s361
    %p375 = scmp.eq.s32.totalorder %s29, 3
    %p376 = por %p374, %p375
    %p378 = scmp.ne.s32.totalorder %s361, %s377
    %p379 = scmp.eq.s32.totalorder %s29, 0
    %p380 = por %p378, %p379
    %s382 = sadd.s32 %s381, 1
    %p385 = scmp.eq.s32.totalorder %s23, 3
    %p386 = scmp.ne.s32.totalorder %s381, %s383
    %p387 = scmp.eq.s32.totalorder %s23, 0
    %p388 = por %p386, %p387
    %p389 = scmp.ne.s32.totalorder %s381, %s383
    %p390 = scmp.eq.s32.totalorder %s28, 3
    %p391 = por %p389, %p390
    %p392 = scmp.ne.s32.totalorder %s383, %s384
    %p393 = scmp.eq.s32.totalorder %s28, 0
    %p394 = por %p392, %p393
    %p395 = scmp.ne.s32.totalorder %s383, %s384
    %p396 = scmp.eq.s32.totalorder %s29, 3
    %p397 = por %p395, %p396
    %p399 = scmp.ne.s32.totalorder %s384, %s398
    %p400 = scmp.eq.s32.totalorder %s29, 0
    %p401 = por %p399, %p400
    %s403 = sadd.s32 %s402, 1
    %p406 = scmp.eq.s32.totalorder %s23, 3
    %p407 = scmp.ne.s32.totalorder %s402, %s404
    %p408 = scmp.eq.s32.totalorder %s23, 0
    %p409 = por %p407, %p408
    %p410 = scmp.ne.s32.totalorder %s402, %s404
    %p411 = scmp.eq.s32.totalorder %s28, 3
    %p412 = por %p410, %p411
    %p413 = scmp.ne.s32.totalorder %s404, %s405
    %p414 = scmp.eq.s32.totalorder %s28, 0
    %p415 = por %p413, %p414
    %p416 = scmp.ne.s32.totalorder %s404, %s405
    %p417 = scmp.eq.s32.totalorder %s29, 3
    %p418 = por %p416, %p417
    %p420 = scmp.ne.s32.totalorder %s405, %s419
    %p421 = scmp.eq.s32.totalorder %s29, 0
    %p422 = por %p420, %p421
    %s424 = sadd.s32 %s423, 1
    %p427 = scmp.eq.s32.totalorder %s23, 3
    %p428 = scmp.ne.s32.totalorder %s423, %s425
    %p429 = scmp.eq.s32.totalorder %s23, 0
    %p430 = por %p428, %p429
    %p431 = scmp.ne.s32.totalorder %s423, %s425
    %p432 = scmp.eq.s32.totalorder %s28, 3
    %p433 = por %p431, %p432
    %p434 = scmp.ne.s32.totalorder %s425, %s426
    %p435 = scmp.eq.s32.totalorder %s28, 0
    %p436 = por %p434, %p435
    %p437 = scmp.ne.s32.totalorder %s425, %s426
    %p438 = scmp.eq.s32.totalorder %s29, 3
    %p439 = por %p437, %p438
    %p441 = scmp.ne.s32.totalorder %s426, %s440
    %p442 = scmp.eq.s32.totalorder %s29, 0
    %p443 = por %p441, %p442
    %s445 = sadd.s32 %s444, 1
    %p448 = scmp.eq.s32.totalorder %s23, 3
    %p449 = scmp.ne.s32.totalorder %s444, %s446
    %p450 = scmp.eq.s32.totalorder %s23, 0
    %p451 = por %p449, %p450
    %p452 = scmp.ne.s32.totalorder %s444, %s446
    %p453 = scmp.eq.s32.totalorder %s28, 3
    %p454 = por %p452, %p453
    %p455 = scmp.ne.s32.totalorder %s446, %s447
    %p456 = scmp.eq.s32.totalorder %s28, 0
    %p457 = por %p455, %p456
    %p458 = scmp.ne.s32.totalorder %s446, %s447
    %p459 = scmp.eq.s32.totalorder %s29, 3
    %p460 = por %p458, %p459
    %p462 = scmp.ne.s32.totalorder %s447, %s461
    %p463 = scmp.eq.s32.totalorder %s29, 0
    %p464 = por %p462, %p463
    %s465 = ssub.s32 %s30, %s42
    %p466 = scmp.eq.s32.totalorder %s465, 0
    %s468 = sadd.s32 %s467, 1
    %s469 = scalar_select %p466, %s467, %s468
    %p472 = pneg %p466
    %p473 = scmp.eq.s32.totalorder %s23, 3
    %p474 = por %p472, %p473
    %p475 = scmp.ne.s32.totalorder %s467, %s470
    %p476 = scmp.eq.s32.totalorder %s23, 0
    %p477 = por %p475, %p476
    %p478 = scmp.ne.s32.totalorder %s467, %s470
    %p479 = scmp.eq.s32.totalorder %s28, 3
    %p480 = por %p478, %p479
    %p481 = scmp.ne.s32.totalorder %s470, %s471
    %p482 = scmp.eq.s32.totalorder %s28, 0
    %p483 = por %p481, %p482
    %p484 = scmp.ne.s32.totalorder %s470, %s471
    %p485 = scmp.eq.s32.totalorder %s29, 3
    %p486 = por %p484, %p485
    %p488 = scmp.ne.s32.totalorder %s471, %s487
    %p489 = scmp.eq.s32.totalorder %s29, 0
    %p490 = por %p488, %p489
    %p491 = scmp.le.s32.totalorder 1, %s23
    %p492 = scmp.lt.s32.totalorder %s23, 5
    %p493 = pnand %p491, %p492
    %p494 = pneg %p493
    // Predicated region
    $region9: #{forward.5} parent=5 // pred_check
      _
    $region10: #{forward.5} parent=5 // pred_check_branch
      %496 = sbr.rel (%p493) target = $region12
    $region11: #{forward.5} parent=5 // pred_region
      %s497 = ssub.s32 %s23, 1
      // Predicated region
      $region13: #{forward.5} parent=11 // pred_check
        %p498 = pneg %p394
      $region14: #{forward.5} parent=11 // pred_check_branch
        %500 = sbr.rel (%p498) target = $region16
      $region15: #{forward.5} parent=11 // pred_region
        _
      $region16: #{forward.5} parent=11 // pred_fallthru
        _
      // Predicated region
      $region17: #{forward.5} parent=11 // pred_check
        %p501 = pneg %p415
      $region18: #{forward.5} parent=11 // pred_check_branch
        %503 = sbr.rel (%p501) target = $region20
      $region19: #{forward.5} parent=11 // pred_region
        _
      $region20: #{forward.5} parent=11 // pred_fallthru
        _
      // Predicated region
      $region21: #{forward.5} parent=11 // pred_check
        %p504 = pneg %p436
      $region22: #{forward.5} parent=11 // pred_check_branch
        %506 = sbr.rel (%p504) target = $region24
      $region23: #{forward.5} parent=11 // pred_region
        _
      $region24: #{forward.5} parent=11 // pred_fallthru
        _
      // Predicated region
      $region25: #{forward.5} parent=11 // pred_check
        %p507 = pneg %p457
      $region26: #{forward.5} parent=11 // pred_check_branch
        %509 = sbr.rel (%p507) target = $region28
      $region27: #{forward.5} parent=11 // pred_region
        _
      $region28: #{forward.5} parent=11 // pred_fallthru
        _
    $region12: #{forward.5} parent=5 // pred_fallthru
      _
    %p510 = scmp.lt.s32.totalorder %s23, 4
    // Predicated region
    $region29: #{forward.5} parent=5 // pred_check
      %p511 = pneg %p510
    $region30: #{forward.5} parent=5 // pred_check_branch
      %513 = sbr.rel (%p511) target = $region32
    $region31: #{forward.5} parent=5 // pred_region
      // Predicated region
      $region33: #{forward.5} parent=31 // pred_check
        %p514 = pneg %p55
      $region34: #{forward.5} parent=31 // pred_check_branch
        %516 = sbr.rel (%p514) target = $region36
      $region35: #{forward.5} parent=31 // pred_region
        %p517 = scmp.lt.s32.totalorder %s30, 1
        %s518 = scalar_select %p517, %s30, 1
        %s519 = smul.addr %s518, 4
        %s520 = scalar_lea.vmem %s0, %s519
      $region36: #{forward.5} parent=31 // pred_fallthru
        _
      // Predicated region
      $region37: #{forward.5} parent=31 // pred_check
        %p521 = pneg %p81
      $region38: #{forward.5} parent=31 // pred_check_branch
        %523 = sbr.rel (%p521) target = $region40
      $region39: #{forward.5} parent=31 // pred_region
        %p524 = scmp.lt.s32.totalorder %s31, 1
        %s525 = scalar_select %p524, %s31, 1
        %s526 = scalar_lea.vmem %s1, %s525
      $region40: #{forward.5} parent=31 // pred_fallthru
        _
      // Predicated region
      $region41: #{forward.5} parent=31 // pred_check
        %p527 = pneg %p107
      $region42: #{forward.5} parent=31 // pred_check_branch
        %529 = sbr.rel (%p527) target = $region44
      $region43: #{forward.5} parent=31 // pred_region
        %p530 = scmp.lt.s32.totalorder %s31, 1
        %s531 = scalar_select %p530, %s31, 1
        %s532 = scalar_lea.vmem %s2, %s531
      $region44: #{forward.5} parent=31 // pred_fallthru
        _
      // Predicated region
      $region45: #{forward.5} parent=31 // pred_check
        %p533 = pneg %p133
      $region46: #{forward.5} parent=31 // pred_check_branch
        %535 = sbr.rel (%p533) target = $region48
      $region47: #{forward.5} parent=31 // pred_region
        %p536 = scmp.lt.s32.totalorder %s31, 1
        %s537 = scalar_select %p536, %s31, 1
        %s538 = smul.addr %s537, 4
        %s539 = smul.addr %s538, 8
        %s540 = scalar_lea.vmem %s3, %s539
      $region48: #{forward.5} parent=31 // pred_fallthru
        _
      // Predicated region
      $region49: #{forward.5} parent=31 // pred_check
        %p541 = pneg %p159
      $region50: #{forward.5} parent=31 // pred_check_branch
        %543 = sbr.rel (%p541) target = $region52
      $region51: #{forward.5} parent=31 // pred_region
        %p544 = scmp.lt.s32.totalorder %s31, 1
        %s545 = scalar_select %p544, %s31, 1
        %s546 = scalar_lea.vmem %s4, %s545
      $region52: #{forward.5} parent=31 // pred_fallthru
        _
      // Predicated region
      $region53: #{forward.5} parent=31 // pred_check
        %p547 = pneg %p185
      $region54: #{forward.5} parent=31 // pred_check_branch
        %549 = sbr.rel (%p547) target = $region56
      $region55: #{forward.5} parent=31 // pred_region
        %p550 = scmp.lt.s32.totalorder %s31, 1
        %s551 = scalar_select %p550, %s31, 1
        %s552 = smul.addr %s551, 4
        %s553 = smul.addr %s552, 8
        %s554 = scalar_lea.vmem %s5, %s553
      $region56: #{forward.5} parent=31 // pred_fallthru
        _
      // Predicated region
      $region57: #{forward.5} parent=31 // pred_check
        %p555 = pneg %p211
      $region58: #{forward.5} parent=31 // pred_check_branch
        %557 = sbr.rel (%p555) target = $region60
      $region59: #{forward.5} parent=31 // pred_region
        %p558 = scmp.lt.s32.totalorder %s31, 1
        %s559 = scalar_select %p558, %s31, 1
        %s560 = scalar_lea.vmem %s6, %s559
      $region60: #{forward.5} parent=31 // pred_fallthru
        _
      // Predicated region
      $region61: #{forward.5} parent=31 // pred_check
        %p561 = pneg %p237
      $region62: #{forward.5} parent=31 // pred_check_branch
        %563 = sbr.rel (%p561) target = $region64
      $region63: #{forward.5} parent=31 // pred_region
        %p564 = scmp.lt.s32.totalorder %s31, 1
        %s565 = scalar_select %p564, %s31, 1
        %s566 = scalar_lea.vmem %s7, %s565
      $region64: #{forward.5} parent=31 // pred_fallthru
        _
      // Predicated region
      $region65: #{forward.5} parent=31 // pred_check
        %p567 = pneg %p263
      $region66: #{forward.5} parent=31 // pred_check_branch
        %569 = sbr.rel (%p567) target = $region68
      $region67: #{forward.5} parent=31 // pred_region
        %p570 = scmp.lt.s32.totalorder %s31, 1
        %s571 = scalar_select %p570, %s31, 1
        %s572 = scalar_lea.vmem %s8, %s571
      $region68: #{forward.5} parent=31 // pred_fallthru
        _
      // Predicated region
      $region69: #{forward.5} parent=31 // pred_check
        %p573 = pneg %p289
      $region70: #{forward.5} parent=31 // pred_check_branch
        %575 = sbr.rel (%p573) target = $region72
      $region71: #{forward.5} parent=31 // pred_region
        %p576 = scmp.lt.s32.totalorder %s31, 1
        %s577 = scalar_select %p576, %s31, 1
        %s578 = smul.addr %s577, 4
        %s579 = smul.addr %s578, 8
        %s580 = scalar_lea.vmem %s9, %s579
      $region72: #{forward.5} parent=31 // pred_fallthru
        _
      // Predicated region
      $region73: #{forward.5} parent=31 // pred_check
        %p581 = pneg %p315
      $region74: #{forward.5} parent=31 // pred_check_branch
        %583 = sbr.rel (%p581) target = $region76
      $region75: #{forward.5} parent=31 // pred_region
        %p584 = scmp.lt.s32.totalorder %s31, 1
        %s585 = scalar_select %p584, %s31, 1
        %s586 = scalar_lea.vmem %s10, %s585
      $region76: #{forward.5} parent=31 // pred_fallthru
        _
      // Predicated region
      $region77: #{forward.5} parent=31 // pred_check
        %p587 = pneg %p341
      $region78: #{forward.5} parent=31 // pred_check_branch
        %589 = sbr.rel (%p587) target = $region80
      $region79: #{forward.5} parent=31 // pred_region
        %p590 = scmp.lt.s32.totalorder %s31, 1
        %s591 = scalar_select %p590, %s31, 1
        %s592 = smul.addr %s591, 16
        %s593 = smul.addr %s592, 8
        %s594 = scalar_lea.vmem %s11, %s593
      $region80: #{forward.5} parent=31 // pred_fallthru
        _
      // Predicated region
      $region81: #{forward.5} parent=31 // pred_check
        %p595 = pneg %p367
      $region82: #{forward.5} parent=31 // pred_check_branch
        %597 = sbr.rel (%p595) target = $region84
      $region83: #{forward.5} parent=31 // pred_region
        %p598 = scmp.lt.s32.totalorder %s31, 1
        %s599 = scalar_select %p598, %s31, 1
        %s600 = scalar_lea.vmem %s12, %s599
      $region84: #{forward.5} parent=31 // pred_fallthru
        _
    $region32: #{forward.5} parent=5 // pred_fallthru
      _
    %p601 = scmp.le.s32.totalorder 1, %s23
    %p602 = scmp.lt.s32.totalorder %s23, 5
    %p603 = pnand %p601, %p602
    %p604 = pneg %p603
    // Predicated region
    $region85: #{forward.5} parent=5 // pred_check
      _
    $region86: #{forward.5} parent=5 // pred_check_branch
      %606 = sbr.rel (%p603) target = $region88
    $region87: #{forward.5} parent=5 // pred_region
      %s607 = ssub.s32 %s23, 1
      %p608 = scmp.lt.s32.totalorder %s32, 1
      %s609 = scalar_select %p608, %s32, 1
      %s610 = smul.addr %s609, 4
      %s611 = scalar_lea.vmem %s0, %s610
      %p612 = pneg %p61
      %p613 = pneg %p58
      %p614 = scmp.lt.s32.totalorder %s33, 1
      %s615 = scalar_select %p614, %s33, 1
      %s616 = scalar_lea.vmem %s1, %s615
      %p617 = pneg %p87
      %p618 = pneg %p84
      %p619 = scmp.lt.s32.totalorder %s33, 1
      %s620 = scalar_select %p619, %s33, 1
      %s621 = scalar_lea.vmem %s2, %s620
      %p622 = pneg %p113
      %p623 = pneg %p110
      %p624 = scmp.lt.s32.totalorder %s33, 1
      %s625 = scalar_select %p624, %s33, 1
      %s626 = smul.addr %s625, 4
      %s627 = smul.addr %s626, 8
      %s628 = scalar_lea.vmem %s3, %s627
      %p629 = pneg %p139
      %p630 = pneg %p136
      %p631 = scmp.lt.s32.totalorder %s33, 1
      %s632 = scalar_select %p631, %s33, 1
      %s633 = scalar_lea.vmem %s4, %s632
      %p634 = pneg %p165
      %p635 = pneg %p162
      %p636 = scmp.lt.s32.totalorder %s33, 1
      %s637 = scalar_select %p636, %s33, 1
      %s638 = smul.addr %s637, 4
      %s639 = smul.addr %s638, 8
      %s640 = scalar_lea.vmem %s5, %s639
      %p641 = pneg %p191
      %p642 = pneg %p188
      %p643 = scmp.lt.s32.totalorder %s33, 1
      %s644 = scalar_select %p643, %s33, 1
      %s645 = scalar_lea.vmem %s6, %s644
      %p646 = pneg %p217
      %p647 = pneg %p214
      %p648 = scmp.lt.s32.totalorder %s33, 1
      %s649 = scalar_select %p648, %s33, 1
      %s650 = scalar_lea.vmem %s7, %s649
      %p651 = pneg %p243
      %p652 = pneg %p240
      %p653 = scmp.lt.s32.totalorder %s33, 1
      %s654 = scalar_select %p653, %s33, 1
      %s655 = scalar_lea.vmem %s8, %s654
      %p656 = pneg %p269
      %p657 = pneg %p266
      %p658 = scmp.lt.s32.totalorder %s33, 1
      %s659 = scalar_select %p658, %s33, 1
      %s660 = smul.addr %s659, 4
      %s661 = smul.addr %s660, 8
      %s662 = scalar_lea.vmem %s9, %s661
      %p663 = pneg %p295
      %p664 = pneg %p292
      %p665 = scmp.lt.s32.totalorder %s33, 1
      %s666 = scalar_select %p665, %s33, 1
      %s667 = scalar_lea.vmem %s10, %s666
      %p668 = pneg %p321
      %p669 = pneg %p318
      %p670 = scmp.lt.s32.totalorder %s33, 1
      %s671 = scalar_select %p670, %s33, 1
      %s672 = smul.addr %s671, 16
      %s673 = smul.addr %s672, 8
      %s674 = scalar_lea.vmem %s11, %s673
      %p675 = pneg %p347
      %p676 = pneg %p344
      %p677 = scmp.lt.s32.totalorder %s33, 1
      %s678 = scalar_select %p677, %s33, 1
      %s679 = scalar_lea.vmem %s12, %s678
      %p680 = pneg %p373
      %p681 = pneg %p370
      %p682 = pneg %p394
      %p683 = pneg %p391
      %p684 = pneg %p415
      %p685 = pneg %p412
      %p686 = pneg %p436
      %p687 = pneg %p433
      %p688 = pneg %p457
      %p689 = pneg %p454
      %p690 = pneg %p483
      %p691 = pneg %p480
      %p692 = scmp.lt.s32.totalorder %s32, 1
      %s693 = scalar_select %p692, %s32, 1
      %s694 = smul.addr %s693, 4
      %s695 = scalar_lea.vmem %s17, %s694
      %p696 = scmp.lt.s32.totalorder %s32, 1
      %s697 = scalar_select %p696, %s32, 1
      %s698 = smul.addr %s697, 4
      %s699 = scalar_lea.vmem %s0, %s698
      %p700 = scmp.lt.s32.totalorder %s33, 1
      %s701 = scalar_select %p700, %s33, 1
      %s702 = scalar_lea.vmem %s1, %s701
      %p703 = scmp.lt.s32.totalorder %s33, 1
      %s704 = scalar_select %p703, %s33, 1
      %s705 = scalar_lea.vmem %s2, %s704
      %p706 = scmp.lt.s32.totalorder %s33, 1
      %s707 = scalar_select %p706, %s33, 1
      %s708 = smul.addr %s707, 4
      %s709 = smul.addr %s708, 8
      %s710 = scalar_lea.vmem %s3, %s709
      %p711 = scmp.lt.s32.totalorder %s33, 1
      %s712 = scalar_select %p711, %s33, 1
      %s713 = scalar_lea.vmem %s4, %s712
      %p714 = scmp.lt.s32.totalorder %s33, 1
      %s715 = scalar_select %p714, %s33, 1
      %s716 = smul.addr %s715, 4
      %s717 = smul.addr %s716, 8
      %s718 = scalar_lea.vmem %s5, %s717
      %p719 = scmp.lt.s32.totalorder %s33, 1
      %s720 = scalar_select %p719, %s33, 1
      %s721 = scalar_lea.vmem %s6, %s720
      %p722 = scmp.lt.s32.totalorder %s33, 1
      %s723 = scalar_select %p722, %s33, 1
      %s724 = scalar_lea.vmem %s7, %s723
      %p725 = scmp.lt.s32.totalorder %s33, 1
      %s726 = scalar_select %p725, %s33, 1
      %s727 = scalar_lea.vmem %s8, %s726
      %p728 = scmp.lt.s32.totalorder %s33, 1
      %s729 = scalar_select %p728, %s33, 1
      %s730 = smul.addr %s729, 4
      %s731 = smul.addr %s730, 8
      %s732 = scalar_lea.vmem %s9, %s731
      %p733 = scmp.lt.s32.totalorder %s33, 1
      %s734 = scalar_select %p733, %s33, 1
      %s735 = scalar_lea.vmem %s10, %s734
      %p736 = scmp.lt.s32.totalorder %s33, 1
      %s737 = scalar_select %p736, %s33, 1
      %s738 = smul.addr %s737, 16
      %s739 = smul.addr %s738, 8
      %s740 = scalar_lea.vmem %s11, %s739
      %p741 = scmp.lt.s32.totalorder %s33, 1
      %s742 = scalar_select %p741, %s33, 1
      %s743 = scalar_lea.vmem %s12, %s742
      %p744 = scmp.lt.s32.totalorder %s32, 1
      %s745 = scalar_select %p744, %s32, 1
      %s746 = smul.addr %s745, 4
      %s747 = scalar_lea.vmem %s17, %s746
      %p748 = scmp.eq.s32.totalorder %s33, 0
      // Predicated region
      $region89: #{forward.5} parent=87 // pred_check
        %p749 = pneg %p748
      $region90: #{forward.5} parent=87 // pred_check_branch
        %751 = sbr.rel (%p749) target = $region92
      $region91: #{forward.5} parent=87 // pred_region
        %v752 = vld [vmem:[%s699] sm:$0x7]
        %vm753 = vcmask 256000
        %754 = vst.msk [vmem:[#allocation2] sm:$0x7] %vm753, %v752
      $region92: #{forward.5} parent=87 // pred_fallthru
        _
      %v755 = vld [vmem:[#allocation2] sm:$0x7]
      %v756 = vld [vmem:[%s702] sm:$0x1]
      %v757 = vld [vmem:[%s705] sm:$0x1]
      %v758 = vld [vmem:[%s710] sm:$0xff]
      %v759 = vld [vmem:[%s710 + $0x8] sm:$0xff]
      %v760 = vld [vmem:[%s710 + $0x10] sm:$0xff]
      %v761 = vld [vmem:[%s710 + $0x18] sm:$0xff]
      %v762 = vld [vmem:[%s713] sm:$0x1]
      %v763 = vld [vmem:[%s718] sm:$0xff]
      %v764 = vld [vmem:[%s718 + $0x8] sm:$0xff]
      %v765 = vld [vmem:[%s718 + $0x10] sm:$0xff]
      %v766 = vld [vmem:[%s718 + $0x18] sm:$0xff]
      %v767 = vld [vmem:[%s721] sm:$0x1]
      %v768 = vld [vmem:[%s724] sm:$0x1]
      %v769 = vld [vmem:[%s727] sm:$0x1]
      %v770 = vld [vmem:[%s732] sm:$0xff]
      %v771 = vld [vmem:[%s732 + $0x8] sm:$0xff]
      %v772 = vld [vmem:[%s732 + $0x10] sm:$0xff]
      %v773 = vld [vmem:[%s732 + $0x18] sm:$0xff]
      %v774 = vld [vmem:[%s735] sm:$0x1]
      %v775 = vld [vmem:[%s740] sm:$0xff]
      %v776 = vld [vmem:[%s740 + $0x8] sm:$0xff]
      %v777 = vld [vmem:[%s740 + $0x10] sm:$0xff]
      %v778 = vld [vmem:[%s740 + $0x18] sm:$0xff]
      %v779 = vld [vmem:[%s740 + $0x20] sm:$0xff]
      %v780 = vld [vmem:[%s740 + $0x28] sm:$0xff]
      %v781 = vld [vmem:[%s740 + $0x30] sm:$0xff]
      %v782 = vld [vmem:[%s740 + $0x38] sm:$0xff]
      %v783 = vld [vmem:[%s740 + $0x40] sm:$0xff]
      %v784 = vld [vmem:[%s740 + $0x48] sm:$0xff]
      %v785 = vld [vmem:[%s740 + $0x50] sm:$0xff]
      %v786 = vld [vmem:[%s740 + $0x58] sm:$0xff]
      %v787 = vld [vmem:[%s740 + $0x60] sm:$0xff]
      %v788 = vld [vmem:[%s740 + $0x68] sm:$0xff]
      %v789 = vld [vmem:[%s740 + $0x70] sm:$0xff]
      %v790 = vld [vmem:[%s740 + $0x78] sm:$0xff]
      %v791 = vld [vmem:[%s743] sm:$0x1]
      %vm792 = vcmask 256000
      %v793 = vsel %vm792, %v755, 0.0
      %794 = vadd.xlane.f32.xlu0 %v793
      %v795 = vpop.xlane.xlu0 %794
      %v796 = vrcp.pop 32.0
      %v797 = vmul.f32 32.0, %v796
      %v798 = vsub.f32 1.0, %v797
      %v799 = vmul.f32 %v796, %v798
      %v800 = vadd.f32 %v796, %v799
      %vm801 = vweird.f32 %v796
      %v802 = vsel %vm801, %v796, %v800
      %v803 = vmul.f32 %v795, %v802
      %v804 = vsub.f32 %v755, %v803
      %v805 = vmul.f32 %v804, %v804
      %v806 = vsel %vm792, %v805, 0.0
      %807 = vadd.xlane.f32.xlu0 %v806
      %v808 = vpop.xlane.xlu0 %807
      %v809 = vmul.f32 %v808, %v802
      %v810 = vadd.f32 %v809, 1e-05
      %v811 = vrsqrt.pop %v810
      %v812 = vmul.f32 %v811, %v810
      %v813 = vmul.f32 %v812, %v811
      %v814 = vmul.f32 0.5, %v813
      %v815 = vsub.f32 1.5, %v814
      %v816 = vmul.f32 %v811, %v815
      %vm817 = vweird.f32 %v810
      %vm818 = vweird.f32 %v811
      %vm819 = vmor %vm817, %vm818
      %v820 = vsel %vm819, %v811, %v816
      %v821 = vmul.f32 %v804, %v820
      %v823 = vperm.slane %v756, 0
      %v825 = vmul.f32 %v821, %v823
      %v827 = vperm.slane %v757, 0
      %v829 = vadd.f32 %v825, %v827
      %v831 = vperm.slane %v762, 0
      %vm833 = vcmask 261120
      %v835 = vsel %vm833, %v829, 0
      %837 = vmatpush.msra.mxu0 0.0
      %838 = vmatpush.msra.mxu0 0.0
      %839 = vmatpush.msra.mxu0 0.0
      %840 = vmatpush.msra.mxu0 0.0
      %841 = vmatpush.msra.mxu0 0.0
      %842 = vmatpush.msra.mxu0 0.0
      %843 = vmatpush.msra.mxu0 0.0
      %844 = vmatpush.msra.mxu0 0.0
      %845 = vmatpush.msra.mxu0 0.0
      %846 = vmatpush.msra.mxu0 0.0
      %847 = vmatpush.msra.mxu0 0.0
      %848 = vmatpush.msra.mxu0 0.0
      %849 = vmatpush.msra.mxu0 %v761
      %850 = vmatpush.msra.mxu0 %v760
      %851 = vmatpush.msra.mxu0 %v759
      %852 = vmatpush.msra.mxu0 %v758
      %853 = vmatmul.f32.gmra.mxu0 %v835
      %v854 = vpop.f32.mrf.mxu0
      %v855 = vadd.f32 %v831, %v854
      %856 = vdwg.mxu0
      %v857 = vmul.f32 %v855, 0.35355338
      %859 = vrot.lane.b32.xlu0 %v855, 96
      %v860 = vpop.permute.xlu0 %859
      %vm861 = vcmask 64512
      %v863 = vsel %vm861, %v857, 0
      %v865 = vsel %vm861, %v860, 0
      %867 = vmatpush.xpose.msra.mxu0 0.0
      %868 = vmatpush.xpose.msra.mxu0 0.0
      %869 = vmatpush.xpose.msra.mxu0 0.0
      %870 = vmatpush.xpose.msra.mxu0 0.0
      %871 = vmatpush.xpose.msra.mxu0 0.0
      %872 = vmatpush.xpose.msra.mxu0 0.0
      %873 = vmatpush.xpose.msra.mxu0 0.0
      %874 = vmatpush.xpose.msra.mxu0 0.0
      %875 = vmatpush.xpose.msra.mxu0 0.0
      %876 = vmatpush.xpose.msra.mxu0 0.0
      %877 = vmatpush.xpose.msra.mxu0 0.0
      %878 = vmatpush.xpose.msra.mxu0 0.0
      %879 = vmatpush.xpose.msra.mxu0 0.0
      %880 = vmatpush.xpose.msra.mxu0 0.0
      %881 = vmatpush.xpose.msra.mxu0 0.0
      %882 = vmatpush.xpose.msra.mxu0 %v865
      %883 = vmatmul.f32.gmra.mxu0 %v863
      %v884 = vpop.f32.mrf.mxu0
      %v885 = vadd.f32 0.0, %v884
      %886 = vdwg.mxu0
      %vm887 = vcmask 18432
      %v888 = vsel %vm887, %v885, -inf
      %889 = vmax.xlane.f32.xlu0 %v888
      %v890 = vpop.xlane.xlu0 %889
      %v891 = vsub.f32 %v885, %v890
      %v892 = vmul.f32 %v891, 1.442695
      %v893 = vpow.pop %v892
      %v894 = vsel %vm887, %v893, 0.0
      %895 = vadd.xlane.f32.xlu0 %v894
      %v896 = vpop.xlane.xlu0 %895
      %v897 = vrcp.pop %v896
      %v898 = vmul.f32 %v896, %v897
      %v899 = vsub.f32 1.0, %v898
      %v900 = vmul.f32 %v897, %v899
      %v901 = vadd.f32 %v897, %v900
      %vm902 = vweird.f32 %v896
      %vm903 = vweird.f32 %v897
      %vm904 = vmor %vm902, %vm903
      %v905 = vsel %vm904, %v897, %v901
      %v906 = vand.u32 2147483647, %v896
      %vm907 = vcmp.eq.f32.partialorder %v906, 8.507059e+37
      %v908 = vand.u32 %v896, 2147483648
      %v909 = vor.u32 1.1754944e-38, %v908
      %v910 = vsel %vm907, %v909, %v905
      %v911 = vmul.f32 %v893, %v910
      %912 = vrot.lane.b32.xlu0 %v855, 64
      %v913 = vpop.permute.xlu0 %912
      %vm914 = vcmask 23552
      %v916 = vsel %vm914, %v911, 0
      %vm918 = vcmask 1042432
      %v919 = vsel %vm918, %v913, 0
      %921 = vmatpush.msra.mxu0 0.0
      %922 = vmatpush.msra.mxu0 0.0
      %923 = vmatpush.msra.mxu0 0.0
      %924 = vmatpush.msra.mxu0 0.0
      %925 = vmatpush.msra.mxu0 0.0
      %926 = vmatpush.msra.mxu0 0.0
      %927 = vmatpush.msra.mxu0 0.0
      %928 = vmatpush.msra.mxu0 0.0
      %929 = vmatpush.msra.mxu0 0.0
      %930 = vmatpush.msra.mxu0 0.0
      %931 = vmatpush.msra.mxu0 0.0
      %932 = vmatpush.msra.mxu0 0.0
      %933 = vmatpush.msra.mxu0 0.0
      %934 = vmatpush.msra.mxu0 0.0
      %935 = vmatpush.msra.mxu0 0.0
      %936 = vmatpush.msra.mxu0 %v919
      %937 = vmatmul.f32.gmra.mxu0 %v916
      %v938 = vpop.f32.mrf.mxu0
      %v939 = vadd.f32 0.0, %v938
      %940 = vdwg.mxu0
      %941 = vrot.lane.b32.xlu0 %v857, 120
      %v942 = vpop.permute.xlu0 %941
      %943 = vrot.lane.b32.xlu0 %v855, 88
      %v944 = vpop.permute.xlu0 %943
      %v945 = vsel %vm861, %v942, 0
      %v947 = vsel %vm861, %v944, 0
      %949 = vmatpush.xpose.msra.mxu0 0.0
      %950 = vmatpush.xpose.msra.mxu0 0.0
      %951 = vmatpush.xpose.msra.mxu0 0.0
      %952 = vmatpush.xpose.msra.mxu0 0.0
      %953 = vmatpush.xpose.msra.mxu0 0.0
      %954 = vmatpush.xpose.msra.mxu0 0.0
      %955 = vmatpush.xpose.msra.mxu0 0.0
      %956 = vmatpush.xpose.msra.mxu0 0.0
      %957 = vmatpush.xpose.msra.mxu0 0.0
      %958 = vmatpush.xpose.msra.mxu0 0.0
      %959 = vmatpush.xpose.msra.mxu0 0.0
      %960 = vmatpush.xpose.msra.mxu0 0.0
      %961 = vmatpush.xpose.msra.mxu0 0.0
      %962 = vmatpush.xpose.msra.mxu0 0.0
      %963 = vmatpush.xpose.msra.mxu0 0.0
      %964 = vmatpush.xpose.msra.mxu0 %v947
      %965 = vmatmul.f32.gmra.mxu0 %v945
      %v966 = vpop.f32.mrf.mxu0
      %v967 = vadd.f32 0.0, %v966
      %968 = vdwg.mxu0
      %v969 = vsel %vm887, %v967, -inf
      %970 = vmax.xlane.f32.xlu0 %v969
      %v971 = vpop.xlane.xlu0 %970
      %v972 = vsub.f32 %v967, %v971
      %v973 = vmul.f32 %v972, 1.442695
      %v974 = vpow.pop %v973
      %v975 = vsel %vm887, %v974, 0.0
      %976 = vadd.xlane.f32.xlu0 %v975
      %v977 = vpop.xlane.xlu0 %976
      %v978 = vrcp.pop %v977
      %v979 = vmul.f32 %v977, %v978
      %v980 = vsub.f32 1.0, %v979
      %v981 = vmul.f32 %v978, %v980
      %v982 = vadd.f32 %v978, %v981
      %vm983 = vweird.f32 %v977
      %vm984 = vweird.f32 %v978
      %vm985 = vmor %vm983, %vm984
      %v986 = vsel %vm985, %v978, %v982
      %v987 = vand.u32 2147483647, %v977
      %vm988 = vcmp.eq.f32.partialorder %v987, 8.507059e+37
      %v989 = vand.u32 %v977, 2147483648
      %v990 = vor.u32 1.1754944e-38, %v989
      %v991 = vsel %vm988, %v990, %v986
      %v992 = vmul.f32 %v974, %v991
      %993 = vrot.lane.b32.xlu0 %v855, 56
      %v994 = vpop.permute.xlu0 %993
      %v996 = vsel %vm914, %v992, 0
      %v998 = vsel %vm918, %v994, 0
      %1000 = vmatpush.msra.mxu0 0.0
      %1001 = vmatpush.msra.mxu0 0.0
      %1002 = vmatpush.msra.mxu0 0.0
      %1003 = vmatpush.msra.mxu0 0.0
      %1004 = vmatpush.msra.mxu0 0.0
      %1005 = vmatpush.msra.mxu0 0.0
      %1006 = vmatpush.msra.mxu0 0.0
      %1007 = vmatpush.msra.mxu0 0.0
      %1008 = vmatpush.msra.mxu0 0.0
      %1009 = vmatpush.msra.mxu0 0.0
      %1010 = vmatpush.msra.mxu0 0.0
      %1011 = vmatpush.msra.mxu0 0.0
      %1012 = vmatpush.msra.mxu0 0.0
      %1013 = vmatpush.msra.mxu0 0.0
      %1014 = vmatpush.msra.mxu0 0.0
      %1015 = vmatpush.msra.mxu0 %v998
      %1016 = vmatmul.f32.gmra.mxu0 %v996
      %v1017 = vpop.f32.mrf.mxu0
      %v1018 = vadd.f32 0.0, %v1017
      %1019 = vdwg.mxu0
      %v1021 = vsel %vm861, %v1018, 0
      %1023 = vmatpush.msra.mxu0 0.0
      %1024 = vmatpush.msra.mxu0 0.0
      %1025 = vmatpush.msra.mxu0 0.0
      %1026 = vmatpush.msra.mxu0 0.0
      %1027 = vmatpush.msra.mxu0 0.0
      %1028 = vmatpush.msra.mxu0 0.0
      %1029 = vmatpush.msra.mxu0 0.0
      %1030 = vmatpush.msra.mxu0 0.0
      %1031 = vmatpush.msra.mxu0 0.0
      %1032 = vmatpush.msra.mxu0 0.0
      %1033 = vmatpush.msra.mxu0 0.0
      %1034 = vmatpush.msra.mxu0 0.0
      %1035 = vmatpush.msra.mxu0 0.0
      %1036 = vmatpush.msra.mxu0 0.0
      %1037 = vmatpush.msra.mxu0 0.0
      %1038 = vmatpush.msra.mxu0 %v764
      %1039 = vmatmul.f32.gmra.mxu0 %v1021
      %v1040 = vpop.f32.mrf.mxu0
      %v1041 = vadd.f32 0.0, %v1040
      %1042 = vdwg.mxu0
      %v1044 = vsel %vm861, %v939, 0
      %1046 = vmatpush.msra.mxu0 0.0
      %1047 = vmatpush.msra.mxu0 0.0
      %1048 = vmatpush.msra.mxu0 0.0
      %1049 = vmatpush.msra.mxu0 0.0
      %1050 = vmatpush.msra.mxu0 0.0
      %1051 = vmatpush.msra.mxu0 0.0
      %1052 = vmatpush.msra.mxu0 0.0
      %1053 = vmatpush.msra.mxu0 0.0
      %1054 = vmatpush.msra.mxu0 0.0
      %1055 = vmatpush.msra.mxu0 0.0
      %1056 = vmatpush.msra.mxu0 0.0
      %1057 = vmatpush.msra.mxu0 0.0
      %1058 = vmatpush.msra.mxu0 0.0
      %1059 = vmatpush.msra.mxu0 0.0
      %1060 = vmatpush.msra.mxu0 0.0
      %1061 = vmatpush.msra.mxu0 %v763
      %1062 = vmatmul.f32.gmra.mxu0 %v1044
      %v1063 = vpop.f32.mrf.mxu0
      %v1064 = vadd.f32 %v1041, %v1063
      %1065 = vdwg.mxu0
      %1066 = vrot.lane.b32.xlu0 %v857, 112
      %v1067 = vpop.permute.xlu0 %1066
      %1068 = vrot.lane.b32.xlu0 %v855, 80
      %v1069 = vpop.permute.xlu0 %1068
      %v1070 = vsel %vm861, %v1067, 0
      %v1072 = vsel %vm861, %v1069, 0
      %1074 = vmatpush.xpose.msra.mxu0 0.0
      %1075 = vmatpush.xpose.msra.mxu0 0.0
      %1076 = vmatpush.xpose.msra.mxu0 0.0
      %1077 = vmatpush.xpose.msra.mxu0 0.0
      %1078 = vmatpush.xpose.msra.mxu0 0.0
      %1079 = vmatpush.xpose.msra.mxu0 0.0
      %1080 = vmatpush.xpose.msra.mxu0 0.0
      %1081 = vmatpush.xpose.msra.mxu0 0.0
      %1082 = vmatpush.xpose.msra.mxu0 0.0
      %1083 = vmatpush.xpose.msra.mxu0 0.0
      %1084 = vmatpush.xpose.msra.mxu0 0.0
      %1085 = vmatpush.xpose.msra.mxu0 0.0
      %1086 = vmatpush.xpose.msra.mxu0 0.0
      %1087 = vmatpush.xpose.msra.mxu0 0.0
      %1088 = vmatpush.xpose.msra.mxu0 0.0
      %1089 = vmatpush.xpose.msra.mxu0 %v1072
      %1090 = vmatmul.f32.gmra.mxu0 %v1070
      %v1091 = vpop.f32.mrf.mxu0
      %v1092 = vadd.f32 0.0, %v1091
      %1093 = vdwg.mxu0
      %v1094 = vsel %vm887, %v1092, -inf
      %1095 = vmax.xlane.f32.xlu0 %v1094
      %v1096 = vpop.xlane.xlu0 %1095
      %v1097 = vsub.f32 %v1092, %v1096
      %v1098 = vmul.f32 %v1097, 1.442695
      %v1099 = vpow.pop %v1098
      %v1100 = vsel %vm887, %v1099, 0.0
      %1101 = vadd.xlane.f32.xlu0 %v1100
      %v1102 = vpop.xlane.xlu0 %1101
      %v1103 = vrcp.pop %v1102
      %v1104 = vmul.f32 %v1102, %v1103
      %v1105 = vsub.f32 1.0, %v1104
      %v1106 = vmul.f32 %v1103, %v1105
      %v1107 = vadd.f32 %v1103, %v1106
      %vm1108 = vweird.f32 %v1102
      %vm1109 = vweird.f32 %v1103
      %vm1110 = vmor %vm1108, %vm1109
      %v1111 = vsel %vm1110, %v1103, %v1107
      %v1112 = vand.u32 2147483647, %v1102
      %vm1113 = vcmp.eq.f32.partialorder %v1112, 8.507059e+37
      %v1114 = vand.u32 %v1102, 2147483648
      %v1115 = vor.u32 1.1754944e-38, %v1114
      %v1116 = vsel %vm1113, %v1115, %v1111
      %v1117 = vmul.f32 %v1099, %v1116
      %1118 = vrot.lane.b32.xlu0 %v855, 48
      %v1119 = vpop.permute.xlu0 %1118
      %v1121 = vsel %vm914, %v1117, 0
      %v1123 = vsel %vm918, %v1119, 0
      %1125 = vmatpush.msra.mxu0 0.0
      %1126 = vmatpush.msra.mxu0 0.0
      %1127 = vmatpush.msra.mxu0 0.0
      %1128 = vmatpush.msra.mxu0 0.0
      %1129 = vmatpush.msra.mxu0 0.0
      %1130 = vmatpush.msra.mxu0 0.0
      %1131 = vmatpush.msra.mxu0 0.0
      %1132 = vmatpush.msra.mxu0 0.0
      %1133 = vmatpush.msra.mxu0 0.0
      %1134 = vmatpush.msra.mxu0 0.0
      %1135 = vmatpush.msra.mxu0 0.0
      %1136 = vmatpush.msra.mxu0 0.0
      %1137 = vmatpush.msra.mxu0 0.0
      %1138 = vmatpush.msra.mxu0 0.0
      %1139 = vmatpush.msra.mxu0 0.0
      %1140 = vmatpush.msra.mxu0 %v1123
      %1141 = vmatmul.f32.gmra.mxu0 %v1121
      %v1142 = vpop.f32.mrf.mxu0
      %v1143 = vadd.f32 0.0, %v1142
      %1144 = vdwg.mxu0
      %v1146 = vsel %vm861, %v1143, 0
      %1148 = vmatpush.msra.mxu0 0.0
      %1149 = vmatpush.msra.mxu0 0.0
      %1150 = vmatpush.msra.mxu0 0.0
      %1151 = vmatpush.msra.mxu0 0.0
      %1152 = vmatpush.msra.mxu0 0.0
      %1153 = vmatpush.msra.mxu0 0.0
      %1154 = vmatpush.msra.mxu0 0.0
      %1155 = vmatpush.msra.mxu0 0.0
      %1156 = vmatpush.msra.mxu0 0.0
      %1157 = vmatpush.msra.mxu0 0.0
      %1158 = vmatpush.msra.mxu0 0.0
      %1159 = vmatpush.msra.mxu0 0.0
      %1160 = vmatpush.msra.mxu0 0.0
      %1161 = vmatpush.msra.mxu0 0.0
      %1162 = vmatpush.msra.mxu0 0.0
      %1163 = vmatpush.msra.mxu0 %v765
      %1164 = vmatmul.f32.gmra.mxu0 %v1146
      %v1165 = vpop.f32.mrf.mxu0
      %v1166 = vadd.f32 0.0, %v1165
      %1167 = vdwg.mxu0
      %v1168 = vadd.f32 %v1064, %v1166
      %1169 = vrot.lane.b32.xlu0 %v857, 104
      %v1170 = vpop.permute.xlu0 %1169
      %1171 = vrot.lane.b32.xlu0 %v855, 72
      %v1172 = vpop.permute.xlu0 %1171
      %v1173 = vsel %vm861, %v1170, 0
      %v1175 = vsel %vm861, %v1172, 0
      %1177 = vmatpush.xpose.msra.mxu0 0.0
      %1178 = vmatpush.xpose.msra.mxu0 0.0
      %1179 = vmatpush.xpose.msra.mxu0 0.0
      %1180 = vmatpush.xpose.msra.mxu0 0.0
      %1181 = vmatpush.xpose.msra.mxu0 0.0
      %1182 = vmatpush.xpose.msra.mxu0 0.0
      %1183 = vmatpush.xpose.msra.mxu0 0.0
      %1184 = vmatpush.xpose.msra.mxu0 0.0
      %1185 = vmatpush.xpose.msra.mxu0 0.0
      %1186 = vmatpush.xpose.msra.mxu0 0.0
      %1187 = vmatpush.xpose.msra.mxu0 0.0
      %1188 = vmatpush.xpose.msra.mxu0 0.0
      %1189 = vmatpush.xpose.msra.mxu0 0.0
      %1190 = vmatpush.xpose.msra.mxu0 0.0
      %1191 = vmatpush.xpose.msra.mxu0 0.0
      %1192 = vmatpush.xpose.msra.mxu0 %v1175
      %1193 = vmatmul.f32.gmra.mxu0 %v1173
      %v1194 = vpop.f32.mrf.mxu0
      %v1195 = vadd.f32 0.0, %v1194
      %1196 = vdwg.mxu0
      %v1197 = vsel %vm887, %v1195, -inf
      %1198 = vmax.xlane.f32.xlu0 %v1197
      %v1199 = vpop.xlane.xlu0 %1198
      %v1200 = vsub.f32 %v1195, %v1199
      %v1201 = vmul.f32 %v1200, 1.442695
      %v1202 = vpow.pop %v1201
      %v1203 = vsel %vm887, %v1202, 0.0
      %1204 = vadd.xlane.f32.xlu0 %v1203
      %v1205 = vpop.xlane.xlu0 %1204
      %v1206 = vrcp.pop %v1205
      %v1207 = vmul.f32 %v1205, %v1206
      %v1208 = vsub.f32 1.0, %v1207
      %v1209 = vmul.f32 %v1206, %v1208
      %v1210 = vadd.f32 %v1206, %v1209
      %vm1211 = vweird.f32 %v1205
      %vm1212 = vweird.f32 %v1206
      %vm1213 = vmor %vm1211, %vm1212
      %v1214 = vsel %vm1213, %v1206, %v1210
      %v1215 = vand.u32 2147483647, %v1205
      %vm1216 = vcmp.eq.f32.partialorder %v1215, 8.507059e+37
      %v1217 = vand.u32 %v1205, 2147483648
      %v1218 = vor.u32 1.1754944e-38, %v1217
      %v1219 = vsel %vm1216, %v1218, %v1214
      %v1220 = vmul.f32 %v1202, %v1219
      %1221 = vrot.lane.b32.xlu0 %v855, 40
      %v1222 = vpop.permute.xlu0 %1221
      %v1224 = vsel %vm914, %v1220, 0
      %v1226 = vsel %vm918, %v1222, 0
      %1228 = vmatpush.msra.mxu0 0.0
      %1229 = vmatpush.msra.mxu0 0.0
      %1230 = vmatpush.msra.mxu0 0.0
      %1231 = vmatpush.msra.mxu0 0.0
      %1232 = vmatpush.msra.mxu0 0.0
      %1233 = vmatpush.msra.mxu0 0.0
      %1234 = vmatpush.msra.mxu0 0.0
      %1235 = vmatpush.msra.mxu0 0.0
      %1236 = vmatpush.msra.mxu0 0.0
      %1237 = vmatpush.msra.mxu0 0.0
      %1238 = vmatpush.msra.mxu0 0.0
      %1239 = vmatpush.msra.mxu0 0.0
      %1240 = vmatpush.msra.mxu0 0.0
      %1241 = vmatpush.msra.mxu0 0.0
      %1242 = vmatpush.msra.mxu0 0.0
      %1243 = vmatpush.msra.mxu0 %v1226
      %1244 = vmatmul.f32.gmra.mxu0 %v1224
      %v1245 = vpop.f32.mrf.mxu0
      %v1246 = vadd.f32 0.0, %v1245
      %1247 = vdwg.mxu0
      %v1249 = vsel %vm861, %v1246, 0
      %1251 = vmatpush.msra.mxu0 0.0
      %1252 = vmatpush.msra.mxu0 0.0
      %1253 = vmatpush.msra.mxu0 0.0
      %1254 = vmatpush.msra.mxu0 0.0
      %1255 = vmatpush.msra.mxu0 0.0
      %1256 = vmatpush.msra.mxu0 0.0
      %1257 = vmatpush.msra.mxu0 0.0
      %1258 = vmatpush.msra.mxu0 0.0
      %1259 = vmatpush.msra.mxu0 0.0
      %1260 = vmatpush.msra.mxu0 0.0
      %1261 = vmatpush.msra.mxu0 0.0
      %1262 = vmatpush.msra.mxu0 0.0
      %1263 = vmatpush.msra.mxu0 0.0
      %1264 = vmatpush.msra.mxu0 0.0
      %1265 = vmatpush.msra.mxu0 0.0
      %1266 = vmatpush.msra.mxu0 %v766
      %1267 = vmatmul.f32.gmra.mxu0 %v1249
      %v1268 = vpop.f32.mrf.mxu0
      %v1269 = vadd.f32 0.0, %v1268
      %1270 = vdwg.mxu0
      %v1271 = vadd.f32 %v1168, %v1269
      %v1272 = vadd.f32 %v755, %v1271
      %v1274 = vperm.slane %v767, 0
      %v1276 = vadd.f32 %v1272, %v1274
      %v1277 = vsel %vm792, %v1276, 0.0
      %1278 = vadd.xlane.f32.xlu0 %v1277
      %v1279 = vpop.xlane.xlu0 %1278
      %v1280 = vmul.f32 %v1279, %v802
      %v1281 = vsub.f32 %v1276, %v1280
      %v1282 = vmul.f32 %v1281, %v1281
      %v1283 = vsel %vm792, %v1282, 0.0
      %1284 = vadd.xlane.f32.xlu0 %v1283
      %v1285 = vpop.xlane.xlu0 %1284
      %v1286 = vmul.f32 %v1285, %v802
      %v1287 = vadd.f32 %v1286, 1e-05
      %v1288 = vrsqrt.pop %v1287
      %v1289 = vmul.f32 %v1288, %v1287
      %v1290 = vmul.f32 %v1289, %v1288
      %v1291 = vmul.f32 0.5, %v1290
      %v1292 = vsub.f32 1.5, %v1291
      %v1293 = vmul.f32 %v1288, %v1292
      %vm1294 = vweird.f32 %v1287
      %vm1295 = vweird.f32 %v1288
      %vm1296 = vmor %vm1294, %vm1295
      %v1297 = vsel %vm1296, %v1288, %v1293
      %v1298 = vmul.f32 %v1281, %v1297
      %v1300 = vperm.slane %v768, 0
      %v1302 = vmul.f32 %v1298, %v1300
      %v1304 = vperm.slane %v769, 0
      %v1306 = vadd.f32 %v1302, %v1304
      %v1308 = vperm.slane %v774, 0
      %v1311 = vsel %vm833, %v1306, 0
      %1313 = vmatpush.msra.mxu0 0.0
      %1314 = vmatpush.msra.mxu0 0.0
      %1315 = vmatpush.msra.mxu0 0.0
      %1316 = vmatpush.msra.mxu0 0.0
      %1317 = vmatpush.msra.mxu0 0.0
      %1318 = vmatpush.msra.mxu0 0.0
      %1319 = vmatpush.msra.mxu0 0.0
      %1320 = vmatpush.msra.mxu0 0.0
      %1321 = vmatpush.msra.mxu0 0.0
      %1322 = vmatpush.msra.mxu0 0.0
      %1323 = vmatpush.msra.mxu0 0.0
      %1324 = vmatpush.msra.mxu0 0.0
      %1325 = vmatpush.msra.mxu0 %v773
      %1326 = vmatpush.msra.mxu0 %v772
      %1327 = vmatpush.msra.mxu0 %v771
      %1328 = vmatpush.msra.mxu0 %v770
      %1329 = vmatmul.f32.gmra.mxu0 %v1311
      %v1330 = vpop.f32.mrf.mxu0
      %v1331 = vadd.f32 %v1308, %v1330
      %1332 = vdwg.mxu0
      %v1333 = vmul.f32 %v1331, 0.5
      %v1334 = vmul.f32 %v1331, 0.70710677
      %v1335 = vand.u32 2147483647, %v1334
      %v1336 = vmul.f32 %v1335, 0.3275911
      %v1337 = vadd.f32 %v1336, 1.0
      %v1338 = vrcp.pop %v1337
      %v1339 = vmul.f32 %v1337, %v1338
      %v1340 = vsub.f32 1.0, %v1339
      %v1341 = vmul.f32 %v1338, %v1340
      %v1342 = vadd.f32 %v1338, %v1341
      %vm1343 = vweird.f32 %v1337
      %vm1344 = vweird.f32 %v1338
      %vm1345 = vmor %vm1343, %vm1344
      %v1346 = vsel %vm1345, %v1338, %v1342
      %v1347 = vand.u32 2147483647, %v1337
      %vm1348 = vcmp.eq.f32.partialorder %v1347, 8.507059e+37
      %v1349 = vand.u32 %v1337, 2147483648
      %v1350 = vor.u32 1.1754944e-38, %v1349
      %v1351 = vsel %vm1348, %v1350, %v1346
      %v1352 = vmul.f32 1.0, %v1351
      %v1353 = vmul.f32 %v1352, 1.0614054
      %v1354 = vadd.f32 %v1353, -1.4531521
      %v1355 = vmul.f32 %v1354, %v1352
      %v1356 = vadd.f32 %v1355, 1.4214138
      %v1357 = vmul.f32 %v1356, %v1352
      %v1358 = vadd.f32 %v1357, -0.28449672
      %v1359 = vmul.f32 %v1358, %v1352
      %v1360 = vadd.f32 %v1359, 0.2548296
      %v1361 = vmul.f32 %v1360, %v1352
      %v1362 = vsub.f32 0.0, %v1335
      %v1363 = vmul.f32 %v1362, %v1335
      %v1364 = vmul.f32 %v1363, 1.442695
      %v1365 = vpow.pop %v1364
      %v1366 = vmul.f32 %v1361, %v1365
      %v1367 = vsub.f32 1.0, %v1366
      %vm1368 = vcmp.ge.f32.partialorder %v1334, 0.0
      %v1369 = vsub.f32 0.0, %v1367
      %v1370 = vsel %vm1368, %v1367, %v1369
      %v1371 = vadd.f32 %v1370, 1.0
      %v1372 = vmul.f32 %v1333, %v1371
      %1373 = vmatpush.msra.mxu0 %v790
      %1374 = vmatpush.msra.mxu0 %v789
      %1375 = vmatpush.msra.mxu0 %v788
      %1376 = vmatpush.msra.mxu0 %v787
      %1377 = vmatpush.msra.mxu0 %v786
      %1378 = vmatpush.msra.mxu0 %v785
      %1379 = vmatpush.msra.mxu0 %v784
      %1380 = vmatpush.msra.mxu0 %v783
      %1381 = vmatpush.msra.mxu0 %v782
      %1382 = vmatpush.msra.mxu0 %v781
      %1383 = vmatpush.msra.mxu0 %v780
      %1384 = vmatpush.msra.mxu0 %v779
      %1385 = vmatpush.msra.mxu0 %v778
      %1386 = vmatpush.msra.mxu0 %v777
      %1387 = vmatpush.msra.mxu0 %v776
      %1388 = vmatpush.msra.mxu0 %v775
      %1389 = vmatmul.f32.gmra.mxu0 %v1372
      %v1390 = vpop.f32.mrf.mxu0
      %v1391 = vadd.f32 0.0, %v1390
      %1392 = vdwg.mxu0
      %v1393 = vadd.f32 %v1276, %v1391
      %v1395 = vperm.slane %v791, 0
      %v1397 = vadd.f32 %v1393, %v1395
      %1398 = vst.msk [vmem:[#allocation2] sm:$0x7] %vm792, %v1397
      %p1399 = scmp.eq.s32.totalorder %s33, 1
      // Predicated region
      $region93: #{forward.5} parent=87 // pred_check
        %p1400 = pneg %p1399
      $region94: #{forward.5} parent=87 // pred_check_branch
        %1402 = sbr.rel (%p1400) target = $region96
      $region95: #{forward.5} parent=87 // pred_region
        %v1403 = vld [vmem:[%s13] sm:$0x1]
        %v1404 = vld [vmem:[%s14] sm:$0x1]
        %v1405 = vsel %vm792, %v1397, 0.0
        %1406 = vadd.xlane.f32.xlu0 %v1405
        %v1407 = vpop.xlane.xlu0 %1406
        %v1408 = vmul.f32 %v1407, %v802
        %v1409 = vsub.f32 %v1397, %v1408
        %v1410 = vmul.f32 %v1409, %v1409
        %v1411 = vsel %vm792, %v1410, 0.0
        %1412 = vadd.xlane.f32.xlu0 %v1411
        %v1413 = vpop.xlane.xlu0 %1412
        %v1414 = vmul.f32 %v1413, %v802
        %v1415 = vadd.f32 %v1414, 1e-05
        %v1416 = vrsqrt.pop %v1415
        %v1417 = vmul.f32 %v1416, %v1415
        %v1418 = vmul.f32 %v1417, %v1416
        %v1419 = vmul.f32 0.5, %v1418
        %v1420 = vsub.f32 1.5, %v1419
        %v1421 = vmul.f32 %v1416, %v1420
        %vm1422 = vweird.f32 %v1415
        %vm1423 = vweird.f32 %v1416
        %vm1424 = vmor %vm1422, %vm1423
        %v1425 = vsel %vm1424, %v1416, %v1421
        %v1426 = vmul.f32 %v1409, %v1425
        %v1428 = vperm.slane %v1403, 0
        %v1430 = vmul.f32 %v1426, %v1428
        %v1432 = vperm.slane %v1404, 0
        %v1434 = vadd.f32 %v1430, %v1432
        %v1435 = vld [vmem:[%s15] sm:$0xff]
        %v1436 = vld [vmem:[%s15 + $0x8] sm:$0xff]
        %v1437 = vld [vmem:[%s15 + $0x10] sm:$0xff]
        %v1438 = vld [vmem:[%s15 + $0x18] sm:$0xff]
        %v1439 = vld [vmem:[%s16] sm:$0x1]
        %v1441 = vperm.slane %v1439, 0
        %v1444 = vsel %vm833, %v1434, 0
        %1446 = vmatpush.msra.mxu0 0.0
        %1447 = vmatpush.msra.mxu0 0.0
        %1448 = vmatpush.msra.mxu0 0.0
        %1449 = vmatpush.msra.mxu0 0.0
        %1450 = vmatpush.msra.mxu0 0.0
        %1451 = vmatpush.msra.mxu0 0.0
        %1452 = vmatpush.msra.mxu0 0.0
        %1453 = vmatpush.msra.mxu0 0.0
        %1454 = vmatpush.msra.mxu0 0.0
        %1455 = vmatpush.msra.mxu0 0.0
        %1456 = vmatpush.msra.mxu0 0.0
        %1457 = vmatpush.msra.mxu0 0.0
        %1458 = vmatpush.msra.mxu0 %v1438
        %1459 = vmatpush.msra.mxu0 %v1437
        %1460 = vmatpush.msra.mxu0 %v1436
        %1461 = vmatpush.msra.mxu0 %v1435
        %1462 = vmatmul.f32.gmra.mxu0 %v1444
        %v1463 = vpop.f32.mrf.mxu0
        %v1464 = vadd.f32 %v1441, %v1463
        %1465 = vdwg.mxu0
        %vm1466 = vcmask 124928
        %1467 = vst.msk [vmem:[%s747] sm:$0x7] %vm1466, %v1464
      $region96: #{forward.5} parent=87 // pred_fallthru
        _
      %p1468 = scmp.lt.s32.totalorder %s32, 1
      %s1469 = scalar_select %p1468, %s32, 1
      %s1470 = smul.addr %s1469, 4
      %s1471 = scalar_lea.vmem %s17, %s1470
      // Predicated region
      $region97: #{forward.5} parent=87 // pred_check
        %p1472 = pneg %p480
      $region98: #{forward.5} parent=87 // pred_check_branch
        %1474 = sbr.rel (%p1472) target = $region100
      $region99: #{forward.5} parent=87 // pred_region
        _
      $region100: #{forward.5} parent=87 // pred_fallthru
        _
    $region88: #{forward.5} parent=5 // pred_fallthru
      _
    %p1475 = scmp.le.s32.totalorder 2, %s23
    // Predicated region
    $region101: #{forward.5} parent=5 // pred_check
      %p1476 = pneg %p1475
    $region102: #{forward.5} parent=5 // pred_check_branch
      %1478 = sbr.rel (%p1476) target = $region104
    $region103: #{forward.5} parent=5 // pred_region
      %s1479 = ssub.s32 %s23, 2
      // Predicated region
      $region105: #{forward.5} parent=103 // pred_check
        %p1480 = pneg %p486
      $region106: #{forward.5} parent=103 // pred_check_branch
        %1482 = sbr.rel (%p1480) target = $region108
      $region107: #{forward.5} parent=103 // pred_region
        %p1483 = scmp.lt.s32.totalorder %s34, 1
        %s1484 = scalar_select %p1483, %s34, 1
        %s1485 = smul.addr %s1484, 4
        %s1486 = scalar_lea.vmem %s17, %s1485
      $region108: #{forward.5} parent=103 // pred_fallthru
        _
    $region104: #{forward.5} parent=5 // pred_fallthru
      _
  $region6: #{forward.5} parent=0 // loop_footer
    %s27 = sadd.s32 1, %s23
  $region7: #{forward.5} parent=0 // loop_footer_branch
    %22 = sbr.rel target = $region3
  $region8: #{forward.5} parent=0 // loop_exit
    _

// kernel: forward.7
$region0: #{forward.7}
  #allocation0 [shape = 'u32[]', space=smem, size = 0x4, offset = 0x4, fixed_abs, tag = 'smem constant byte address 0x4 - core index']
  #allocation1 [shape = 'u32[72,128]{1,0:T(1,128)}', space=vmem, size = 0x9000, scoped, tag = 'internal scratch']
  %s0 = inlined_call_operand.vmem [shape: f32[16,16], index: 0, kind: input, shape index: {}]
  %s1 = inlined_call_operand.vmem [shape: f32[1,16], index: 1, kind: input, shape index: {}]
  %s2 = inlined_call_operand.vmem [shape: f32[1,16], index: 2, kind: input, shape index: {}]
  %s3 = inlined_call_operand.vmem [shape: f32[16,32], index: 3, kind: input, shape index: {}]
  %s4 = inlined_call_operand.vmem [shape: f32[1,32], index: 4, kind: input, shape index: {}]
  %s5 = inlined_call_operand.vmem [shape: f32[16,32], index: 5, kind: input, shape index: {}]
  %s6 = inlined_call_operand.vmem [shape: f32[16,1], index: 6, kind: input, shape index: {}]
  %s7 = inlined_call_operand.vmem [shape: f32[16,32], index: 7, kind: output, shape index: {0}]
  %s8 = inlined_call_operand.hbm [shape: f32[1,1], index: 8, kind: output, shape index: {1}]
  %9 = xla_tuple %s7, %s8
  %s10 = sld [smem:[#allocation0]]
  $region46: #{forward.7} parent=0
    _
  %s12 = ssub.s32 1, %s10
  %s13 = scalar_select 0, %s12, %s10
  $region1: #{forward.7} parent=0
    #allocation2 [shape = 'u8[512]{0}', space=smem, size = 0x200, scoped, tag = 'output window, operand 1, single buffered']
    #allocation3 [shape = 's32[1]{0}', space=sflag, size = 0x4, scoped, tag = 'scoped memory for forward.7']
    %14 = vsyncpa [#allocation3], 0
    // Predicated region
    $region2: #{forward.7} parent=1 // pred_check
      _
    $region3: #{forward.7} parent=1 // pred_check_branch
      %16 = sbr.rel (0) target = $region5
    $region4: #{forward.7} parent=1 // pred_region
      _
    $region5: #{forward.7} parent=1 // pred_fallthru
      _
    // Predicated region
    $region6: #{forward.7} parent=1 // pred_check
      _
    $region7: #{forward.7} parent=1 // pred_check_branch
      %18 = sbr.rel (0) target = $region9
    $region8: #{forward.7} parent=1 // pred_region
      _
    $region9: #{forward.7} parent=1 // pred_fallthru
      _
    // Predicated region
    $region10: #{forward.7} parent=1 // pred_check
      _
    $region11: #{forward.7} parent=1 // pred_check_branch
      %20 = sbr.rel (0) target = $region13
    $region12: #{forward.7} parent=1 // pred_region
      _
    $region13: #{forward.7} parent=1 // pred_fallthru
      _
    // Predicated region
    $region14: #{forward.7} parent=1 // pred_check
      _
    $region15: #{forward.7} parent=1 // pred_check_branch
      %22 = sbr.rel (0) target = $region17
    $region16: #{forward.7} parent=1 // pred_region
      _
    $region17: #{forward.7} parent=1 // pred_fallthru
      _
    // Predicated region
    $region18: #{forward.7} parent=1 // pred_check
      _
    $region19: #{forward.7} parent=1 // pred_check_branch
      %24 = sbr.rel (0) target = $region21
    $region20: #{forward.7} parent=1 // pred_region
      _
    $region21: #{forward.7} parent=1 // pred_fallthru
      _
    // Predicated region
    $region22: #{forward.7} parent=1 // pred_check
      _
    $region23: #{forward.7} parent=1 // pred_check_branch
      %26 = sbr.rel (0) target = $region25
    $region24: #{forward.7} parent=1 // pred_region
      _
    $region25: #{forward.7} parent=1 // pred_fallthru
      _
    // Predicated region
    $region26: #{forward.7} parent=1 // pred_check
      _
    $region27: #{forward.7} parent=1 // pred_check_branch
      %28 = sbr.rel (0) target = $region29
    $region28: #{forward.7} parent=1 // pred_region
      _
    $region29: #{forward.7} parent=1 // pred_fallthru
      _
    %v29 = vld [vmem:[%s0] sm:$0xff]
    %v30 = vld [vmem:[%s0 + $0x8] sm:$0xff]
    %v31 = vld [vmem:[%s1] sm:$0x1]
    %v32 = vld [vmem:[%s2] sm:$0x1]
    %vm33 = vcmask 130048
    %v34 = vsel %vm33, %v29, 0.0
    %35 = vadd.xlane.f32.xlu0 %v34
    %v36 = vpop.xlane.xlu0 %35
    %v37 = vsel %vm33, %v30, 0.0
    %38 = vadd.xlane.f32.xlu0 %v37
    %v39 = vpop.xlane.xlu0 %38
    %v40 = vrcp.pop 16.0
    %v41 = vmul.f32 16.0, %v40
    %v42 = vsub.f32 1.0, %v41
    %v43 = vmul.f32 %v40, %v42
    %v44 = vadd.f32 %v40, %v43
    %vm45 = vweird.f32 %v40
    %v46 = vsel %vm45, %v40, %v44
    %v47 = vmul.f32 %v36, %v46
    %v48 = vmul.f32 %v39, %v46
    %v49 = vsub.f32 %v29, %v47
    %v50 = vsub.f32 %v30, %v48
    %v51 = vmul.f32 %v49, %v49
    %v52 = vmul.f32 %v50, %v50
    %v53 = vsel %vm33, %v51, 0.0
    %54 = vadd.xlane.f32.xlu0 %v53
    %v55 = vpop.xlane.xlu0 %54
    %v56 = vsel %vm33, %v52, 0.0
    %57 = vadd.xlane.f32.xlu0 %v56
    %v58 = vpop.xlane.xlu0 %57
    %v59 = vmul.f32 %v55, %v46
    %v60 = vmul.f32 %v58, %v46
    %v61 = vadd.f32 %v59, 1e-05
    %v62 = vadd.f32 %v60, 1e-05
    %v63 = vrsqrt.pop %v61
    %v64 = vmul.f32 %v63, %v61
    %v65 = vmul.f32 %v64, %v63
    %v66 = vmul.f32 0.5, %v65
    %v67 = vsub.f32 1.5, %v66
    %v68 = vmul.f32 %v63, %v67
    %vm69 = vweird.f32 %v61
    %vm70 = vweird.f32 %v63
    %vm71 = vmor %vm69, %vm70
    %v72 = vsel %vm71, %v63, %v68
    %v73 = vrsqrt.pop %v62
    %v74 = vmul.f32 %v73, %v62
    %v75 = vmul.f32 %v74, %v73
    %v76 = vmul.f32 0.5, %v75
    %v77 = vsub.f32 1.5, %v76
    %v78 = vmul.f32 %v73, %v77
    %vm79 = vweird.f32 %v62
    %vm80 = vweird.f32 %v73
    %vm81 = vmor %vm79, %vm80
    %v82 = vsel %vm81, %v73, %v78
    %v83 = vmul.f32 %v49, %v72
    %v84 = vmul.f32 %v50, %v82
    %v86 = vperm.slane %v31, 0
    %v88 = vmul.f32 %v83, %v86
    %v89 = vmul.f32 %v84, %v86
    %v91 = vperm.slane %v32, 0
    %v93 = vadd.f32 %v88, %v91
    %v94 = vadd.f32 %v89, %v91
    %v95 = vld [vmem:[%s3] sm:$0xff]
    %v96 = vld [vmem:[%s3 + $0x8] sm:$0xff]
    %v97 = vld [vmem:[%s4] sm:$0x1]
    %v99 = vperm.slane %v97, 0
    %v102 = vsel %vm33, %v93, 0
    %v105 = vsel %vm33, %v94, 0
    %107 = vmatpush.msra.mxu0 0.0
    %108 = vmatpush.msra.mxu0 0.0
    %109 = vmatpush.msra.mxu0 0.0
    %110 = vmatpush.msra.mxu0 0.0
    %111 = vmatpush.msra.mxu0 0.0
    %112 = vmatpush.msra.mxu0 0.0
    %113 = vmatpush.msra.mxu0 0.0
    %114 = vmatpush.msra.mxu0 0.0
    %115 = vmatpush.msra.mxu0 0.0
    %116 = vmatpush.msra.mxu0 0.0
    %117 = vmatpush.msra.mxu0 0.0
    %118 = vmatpush.msra.mxu0 0.0
    %119 = vmatpush.msra.mxu0 0.0
    %120 = vmatpush.msra.mxu0 0.0
    %121 = vmatpush.msra.mxu0 %v96
    %122 = vmatpush.msra.mxu0 %v95
    %123 = vmatmul.f32.gmra.mxu0 %v102
    %v124 = vpop.f32.mrf.mxu0
    %v125 = vadd.f32 %v99, %v124
    %126 = vmatmul.f32.gmra.mxu0 %v105
    %v127 = vpop.f32.mrf.mxu0
    %v128 = vadd.f32 %v99, %v127
    %129 = vdwg.mxu0
    %vm130 = vcmask 261120
    %131 = vst.msk [vmem:[%s7] sm:$0xff] %vm130, %v125
    %132 = vst.msk [vmem:[%s7 + $0x8] sm:$0xff] %vm130, %v128
    %v133 = vld [vmem:[%s5] sm:$0xff]
    %v134 = vld [vmem:[%s5 + $0x8] sm:$0xff]
    %v135 = vsub.f32 %v125, %v133
    %v136 = vsub.f32 %v128, %v134
    %v137 = vmul.f32 %v135, %v135
    %v138 = vmul.f32 %v136, %v136
    %v139 = vsel %vm130, %v137, 0.0
    %140 = vadd.xlane.f32.xlu0 %v139
    %v141 = vpop.xlane.xlu0 %140
    %v142 = vsel %vm130, %v138, 0.0
    %143 = vadd.xlane.f32.xlu0 %v142
    %v144 = vpop.xlane.xlu0 %143
    %v145 = vrcp.pop 32.0
    %v146 = vmul.f32 32.0, %v145
    %v147 = vsub.f32 1.0, %v146
    %v148 = vmul.f32 %v145, %v147
    %v149 = vadd.f32 %v145, %v148
    %vm150 = vweird.f32 %v145
    %v151 = vsel %vm150, %v145, %v149
    %v152 = vmul.f32 %v141, %v151
    %v153 = vmul.f32 %v144, %v151
    %v154 = vld [vmem:[%s6] sm:$0xff]
    %v155 = vld [vmem:[%s6 + $0x8] sm:$0xff]
    %v156 = vmul.f32 %v152, %v154
    %v157 = vmul.f32 %v153, %v155
    %vm158 = vcmask 7168
    %v159 = vsel %vm158, %v156, 0.0
    %v160 = vsel %vm158, %v157, 0.0
    %v161 = vadd.f32 %v159, %v160
    %162 = vadd.xlane.f32.xlu0 %v161
    %v163 = vpop.xlane.xlu0 %162
    %v164 = vrot.slane %v163, 4
    %v165 = vadd.f32 %v163, %v164
    %v166 = vrot.slane %v165, 2
    %v167 = vadd.f32 %v165, %v166
    %v168 = vrot.slane %v167, 1
    %v169 = vadd.f32 %v167, %v168
    %s170 = vtos %v169
    %v171 = vsel %vm158, %v154, 0.0
    %v172 = vsel %vm158, %v155, 0.0
    %v173 = vadd.f32 %v171, %v172
    %174 = vadd.xlane.f32.xlu0 %v173
    %v175 = vpop.xlane.xlu0 %174
    %v176 = vrot.slane %v175, 4
    %v177 = vadd.f32 %v175, %v176
    %v178 = vrot.slane %v177, 2
    %v179 = vadd.f32 %v177, %v178
    %v180 = vrot.slane %v179, 1
    %v181 = vadd.f32 %v179, %v180
    %s182 = vtos %v181
    %s183 = smax.f32 %s182, 1e-06
    %v184 = vstv %s183
    %v185 = vrcp.pop %v184
    %v186 = vmul.f32 %v184, %v185
    %v187 = vsub.f32 1.0, %v186
    %v188 = vmul.f32 %v185, %v187
    %v189 = vadd.f32 %v185, %v188
    %vm190 = vweird.f32 %v184
    %vm191 = vweird.f32 %v185
    %vm192 = vmor %vm190, %vm191
    %v193 = vsel %vm192, %v185, %v189
    %v194 = vand.u32 2147483647, %v184
    %vm195 = vcmp.eq.f32.partialorder %v194, 8.507059e+37
    %v196 = vand.u32 %v184, 2147483648
    %v197 = vor.u32 1.1754944e-38, %v196
    %v198 = vsel %vm195, %v197, %v193
    %s199 = vtos %v198
    %s200 = smul.f32 %s170, %s199
    %s201 = scalar_lea.smem [#allocation2], 0
    %202 = sst [smem:[%s201]] %s200
    // Predicated region
    $region30: #{forward.7} parent=1 // pred_check
      _
    $region31: #{forward.7} parent=1 // pred_check_branch
      %204 = sbr.rel (0) target = $region33
    $region32: #{forward.7} parent=1 // pred_region
      _
    $region33: #{forward.7} parent=1 // pred_fallthru
      _
    // Predicated region
    $region34: #{forward.7} parent=1 // pred_check
      _
    $region35: #{forward.7} parent=1 // pred_check_branch
      %206 = sbr.rel (0) target = $region37
    $region36: #{forward.7} parent=1 // pred_region
      %208 = vsyncadd [#allocation3], 0
      %s210 = sshll.u32 %s8, 4
      %s211 = int_to_ptr.hbm [resolvable:$true] %s210
      %213 = dma.smem_to_hbm [#allocation2], 16, %s211, [#allocation3]
    $region37: #{forward.7} parent=1 // pred_fallthru
      _
    // Predicated region
    $region38: #{forward.7} parent=1 // pred_check
      _
    $region39: #{forward.7} parent=1 // pred_check_branch
      %215 = sbr.rel (0) target = $region41
    $region40: #{forward.7} parent=1 // pred_region
      _
    $region41: #{forward.7} parent=1 // pred_fallthru
      _
    // Predicated region
    $region42: #{forward.7} parent=1 // pred_check
      _
    $region43: #{forward.7} parent=1 // pred_check_branch
      %217 = sbr.rel (0) target = $region45
    $region44: #{forward.7} parent=1 // pred_region
      %219 = dma.done [#allocation3], 16
    $region45: #{forward.7} parent=1 // pred_fallthru
      _
    %220 = sfence
    %221 = vsyncpa [#allocation3], 1

// kernel: forward.6
$region0: #{forward.6}
  #allocation0 [shape = 'u32[]', space=smem, size = 0x4, offset = 0x4, fixed_abs, tag = 'smem constant byte address 0x4 - core index']
  #allocation1 [shape = 'u32[72,128]{1,0:T(1,128)}', space=vmem, size = 0x9000, scoped, tag = 'internal scratch']
  %s0 = inlined_call_operand.vmem [shape: f32[2,9,16], index: 0, kind: input, shape index: {}]
  %s1 = inlined_call_operand.vmem [shape: f32[2,1,16], index: 1, kind: input, shape index: {}]
  %s2 = inlined_call_operand.vmem [shape: f32[2,1,16], index: 2, kind: input, shape index: {}]
  %s3 = inlined_call_operand.vmem [shape: f32[2,16,48], index: 3, kind: input, shape index: {}]
  %s4 = inlined_call_operand.vmem [shape: f32[2,1,48], index: 4, kind: input, shape index: {}]
  %s5 = inlined_call_operand.vmem [shape: f32[2,4,4,16], index: 5, kind: input, shape index: {}]
  %s6 = inlined_call_operand.vmem [shape: f32[2,1,16], index: 6, kind: input, shape index: {}]
  %s7 = inlined_call_operand.vmem [shape: f32[2,1,16], index: 7, kind: input, shape index: {}]
  %s8 = inlined_call_operand.vmem [shape: f32[2,1,16], index: 8, kind: input, shape index: {}]
  %s9 = inlined_call_operand.vmem [shape: f32[2,16,64], index: 9, kind: input, shape index: {}]
  %s10 = inlined_call_operand.vmem [shape: f32[2,1,64], index: 10, kind: input, shape index: {}]
  %s11 = inlined_call_operand.vmem [shape: f32[2,64,16], index: 11, kind: input, shape index: {}]
  %s12 = inlined_call_operand.vmem [shape: f32[2,1,16], index: 12, kind: input, shape index: {}]
  %s13 = inlined_call_operand.vmem [shape: f32[2,9,16], index: 13, kind: output, shape index: {}]
  %s14 = sld [smem:[#allocation0]]
  $region89: #{forward.6} parent=0
    _
  %s16 = ssub.s32 1, %s14
  %s17 = scalar_select 0, %s16, %s14
  loop: start=0, step=1, limit=6
  $region2: #{forward.6} parent=0 // loop_pre_header
    _
  $region3: #{forward.6} parent=0 // loop_header
    %s19 = sphi 0, %s23
    %p20 = scmp.ge.s32.totalorder %s19, 6
    %s26 = sphi 0, %s38
    %s27 = sphi 0, %s34
    %s28 = sphi 0, %s26
    %s29 = sphi 0, %s27
    %s30 = sphi 0, %s28
    %s31 = sphi 0, %s29
    %s41 = sphi 0, %s43
    %s44 = sphi 0, %s41
    %s45 = sphi 0, %s44
    %s61 = sphi 0, %s45
    %s67 = sphi 0, %s69
    %s70 = sphi 0, %s67
    %s71 = sphi 0, %s70
    %s87 = sphi 0, %s71
    %s93 = sphi 0, %s95
    %s96 = sphi 0, %s93
    %s97 = sphi 0, %s96
    %s113 = sphi 0, %s97
    %s119 = sphi 0, %s121
    %s122 = sphi 0, %s119
    %s123 = sphi 0, %s122
    %s139 = sphi 0, %s123
    %s145 = sphi 0, %s147
    %s148 = sphi 0, %s145
    %s149 = sphi 0, %s148
    %s165 = sphi 0, %s149
    %s171 = sphi 0, %s173
    %s174 = sphi 0, %s171
    %s175 = sphi 0, %s174
    %s191 = sphi 0, %s175
    %s197 = sphi 0, %s199
    %s200 = sphi 0, %s197
    %s201 = sphi 0, %s200
    %s217 = sphi 0, %s201
    %s223 = sphi 0, %s225
    %s226 = sphi 0, %s223
    %s227 = sphi 0, %s226
    %s243 = sphi 0, %s227
    %s249 = sphi 0, %s251
    %s252 = sphi 0, %s249
    %s253 = sphi 0, %s252
    %s269 = sphi 0, %s253
    %s275 = sphi 0, %s277
    %s278 = sphi 0, %s275
    %s279 = sphi 0, %s278
    %s295 = sphi 0, %s279
    %s301 = sphi 0, %s303
    %s304 = sphi 0, %s301
    %s305 = sphi 0, %s304
    %s321 = sphi 0, %s305
    %s327 = sphi 0, %s329
    %s330 = sphi 0, %s327
    %s331 = sphi 0, %s330
    %s347 = sphi 0, %s331
    %s353 = sphi 0, %s355
    %s356 = sphi 0, %s353
    %s357 = sphi 0, %s356
    %s373 = sphi 0, %s357
    %s379 = sphi 0, %s381
    %s382 = sphi 0, %s379
    %s383 = sphi 0, %s382
    %s399 = sphi 0, %s383
  $region4: #{forward.6} parent=0 // loop_header_branch
    %22 = sbr.rel (%p20) target = $region8
  $region5: #{forward.6} parent=0 // loop_body
    %s24 = ssub.s32 %s19, 1
    %s25 = ssub.s32 %s19, 2
    %s32 = sadd.s32 1, %s27
    %p33 = scmp.ge.s32.totalorder %s32, 2
    %s34 = scalar_select %p33, 0, %s32
    %s35 = sadd.s32 1, %s26
    %s36 = scalar_select %p33, %s35, %s26
    %p37 = scmp.ge.s32.totalorder %s36, 2
    %s38 = scalar_select %p37, 0, %s36
    %s39 = ssub.s32 %s26, %s38
    %p40 = scmp.eq.s32.totalorder %s39, 0
    %s42 = sadd.s32 %s41, 1
    %s43 = scalar_select %p40, %s41, %s42
    %p46 = pneg %p40
    %p47 = scmp.eq.s32.totalorder %s19, 3
    %p48 = por %p46, %p47
    %p49 = scmp.ne.s32.totalorder %s41, %s44
    %p50 = scmp.eq.s32.totalorder %s19, 0
    %p51 = por %p49, %p50
    %p52 = scmp.ne.s32.totalorder %s41, %s44
    %p53 = scmp.eq.s32.totalorder %s24, 3
    %p54 = por %p52, %p53
    %p55 = scmp.ne.s32.totalorder %s44, %s45
    %p56 = scmp.eq.s32.totalorder %s24, 0
    %p57 = por %p55, %p56
    %p58 = scmp.ne.s32.totalorder %s44, %s45
    %p59 = scmp.eq.s32.totalorder %s25, 3
    %p60 = por %p58, %p59
    %p62 = scmp.ne.s32.totalorder %s45, %s61
    %p63 = scmp.eq.s32.totalorder %s25, 0
    %p64 = por %p62, %p63
    %s65 = ssub.s32 %s27, %s34
    %p66 = scmp.eq.s32.totalorder %s65, 0
    %s68 = sadd.s32 %s67, 1
    %s69 = scalar_select %p66, %s67, %s68
    %p72 = pneg %p66
    %p73 = scmp.eq.s32.totalorder %s19, 3
    %p74 = por %p72, %p73
    %p75 = scmp.ne.s32.totalorder %s67, %s70
    %p76 = scmp.eq.s32.totalorder %s19, 0
    %p77 = por %p75, %p76
    %p78 = scmp.ne.s32.totalorder %s67, %s70
    %p79 = scmp.eq.s32.totalorder %s24, 3
    %p80 = por %p78, %p79
    %p81 = scmp.ne.s32.totalorder %s70, %s71
    %p82 = scmp.eq.s32.totalorder %s24, 0
    %p83 = por %p81, %p82
    %p84 = scmp.ne.s32.totalorder %s70, %s71
    %p85 = scmp.eq.s32.totalorder %s25, 3
    %p86 = por %p84, %p85
    %p88 = scmp.ne.s32.totalorder %s71, %s87
    %p89 = scmp.eq.s32.totalorder %s25, 0
    %p90 = por %p88, %p89
    %s91 = ssub.s32 %s27, %s34
    %p92 = scmp.eq.s32.totalorder %s91, 0
    %s94 = sadd.s32 %s93, 1
    %s95 = scalar_select %p92, %s93, %s94
    %p98 = pneg %p92
    %p99 = scmp.eq.s32.totalorder %s19, 3
    %p100 = por %p98, %p99
    %p101 = scmp.ne.s32.totalorder %s93, %s96
    %p102 = scmp.eq.s32.totalorder %s19, 0
    %p103 = por %p101, %p102
    %p104 = scmp.ne.s32.totalorder %s93, %s96
    %p105 = scmp.eq.s32.totalorder %s24, 3
    %p106 = por %p104, %p105
    %p107 = scmp.ne.s32.totalorder %s96, %s97
    %p108 = scmp.eq.s32.totalorder %s24, 0
    %p109 = por %p107, %p108
    %p110 = scmp.ne.s32.totalorder %s96, %s97
    %p111 = scmp.eq.s32.totalorder %s25, 3
    %p112 = por %p110, %p111
    %p114 = scmp.ne.s32.totalorder %s97, %s113
    %p115 = scmp.eq.s32.totalorder %s25, 0
    %p116 = por %p114, %p115
    %s117 = ssub.s32 %s27, %s34
    %p118 = scmp.eq.s32.totalorder %s117, 0
    %s120 = sadd.s32 %s119, 1
    %s121 = scalar_select %p118, %s119, %s120
    %p124 = pneg %p118
    %p125 = scmp.eq.s32.totalorder %s19, 3
    %p126 = por %p124, %p125
    %p127 = scmp.ne.s32.totalorder %s119, %s122
    %p128 = scmp.eq.s32.totalorder %s19, 0
    %p129 = por %p127, %p128
    %p130 = scmp.ne.s32.totalorder %s119, %s122
    %p131 = scmp.eq.s32.totalorder %s24, 3
    %p132 = por %p130, %p131
    %p133 = scmp.ne.s32.totalorder %s122, %s123
    %p134 = scmp.eq.s32.totalorder %s24, 0
    %p135 = por %p133, %p134
    %p136 = scmp.ne.s32.totalorder %s122, %s123
    %p137 = scmp.eq.s32.totalorder %s25, 3
    %p138 = por %p136, %p137
    %p140 = scmp.ne.s32.totalorder %s123, %s139
    %p141 = scmp.eq.s32.totalorder %s25, 0
    %p142 = por %p140, %p141
    %s143 = ssub.s32 %s27, %s34
    %p144 = scmp.eq.s32.totalorder %s143, 0
    %s146 = sadd.s32 %s145, 1
    %s147 = scalar_select %p144, %s145, %s146
    %p150 = pneg %p144
    %p151 = scmp.eq.s32.totalorder %s19, 3
    %p152 = por %p150, %p151
    %p153 = scmp.ne.s32.totalorder %s145, %s148
    %p154 = scmp.eq.s32.totalorder %s19, 0
    %p155 = por %p153, %p154
    %p156 = scmp.ne.s32.totalorder %s145, %s148
    %p157 = scmp.eq.s32.totalorder %s24, 3
    %p158 = por %p156, %p157
    %p159 = scmp.ne.s32.totalorder %s148, %s149
    %p160 = scmp.eq.s32.totalorder %s24, 0
    %p161 = por %p159, %p160
    %p162 = scmp.ne.s32.totalorder %s148, %s149
    %p163 = scmp.eq.s32.totalorder %s25, 3
    %p164 = por %p162, %p163
    %p166 = scmp.ne.s32.totalorder %s149, %s165
    %p167 = scmp.eq.s32.totalorder %s25, 0
    %p168 = por %p166, %p167
    %s169 = ssub.s32 %s27, %s34
    %p170 = scmp.eq.s32.totalorder %s169, 0
    %s172 = sadd.s32 %s171, 1
    %s173 = scalar_select %p170, %s171, %s172
    %p176 = pneg %p170
    %p177 = scmp.eq.s32.totalorder %s19, 3
    %p178 = por %p176, %p177
    %p179 = scmp.ne.s32.totalorder %s171, %s174
    %p180 = scmp.eq.s32.totalorder %s19, 0
    %p181 = por %p179, %p180
    %p182 = scmp.ne.s32.totalorder %s171, %s174
    %p183 = scmp.eq.s32.totalorder %s24, 3
    %p184 = por %p182, %p183
    %p185 = scmp.ne.s32.totalorder %s174, %s175
    %p186 = scmp.eq.s32.totalorder %s24, 0
    %p187 = por %p185, %p186
    %p188 = scmp.ne.s32.totalorder %s174, %s175
    %p189 = scmp.eq.s32.totalorder %s25, 3
    %p190 = por %p188, %p189
    %p192 = scmp.ne.s32.totalorder %s175, %s191
    %p193 = scmp.eq.s32.totalorder %s25, 0
    %p194 = por %p192, %p193
    %s195 = ssub.s32 %s27, %s34
    %p196 = scmp.eq.s32.totalorder %s195, 0
    %s198 = sadd.s32 %s197, 1
    %s199 = scalar_select %p196, %s197, %s198
    %p202 = pneg %p196
    %p203 = scmp.eq.s32.totalorder %s19, 3
    %p204 = por %p202, %p203
    %p205 = scmp.ne.s32.totalorder %s197, %s200
    %p206 = scmp.eq.s32.totalorder %s19, 0
    %p207 = por %p205, %p206
    %p208 = scmp.ne.s32.totalorder %s197, %s200
    %p209 = scmp.eq.s32.totalorder %s24, 3
    %p210 = por %p208, %p209
    %p211 = scmp.ne.s32.totalorder %s200, %s201
    %p212 = scmp.eq.s32.totalorder %s24, 0
    %p213 = por %p211, %p212
    %p214 = scmp.ne.s32.totalorder %s200, %s201
    %p215 = scmp.eq.s32.totalorder %s25, 3
    %p216 = por %p214, %p215
    %p218 = scmp.ne.s32.totalorder %s201, %s217
    %p219 = scmp.eq.s32.totalorder %s25, 0
    %p220 = por %p218, %p219
    %s221 = ssub.s32 %s27, %s34
    %p222 = scmp.eq.s32.totalorder %s221, 0
    %s224 = sadd.s32 %s223, 1
    %s225 = scalar_select %p222, %s223, %s224
    %p228 = pneg %p222
    %p229 = scmp.eq.s32.totalorder %s19, 3
    %p230 = por %p228, %p229
    %p231 = scmp.ne.s32.totalorder %s223, %s226
    %p232 = scmp.eq.s32.totalorder %s19, 0
    %p233 = por %p231, %p232
    %p234 = scmp.ne.s32.totalorder %s223, %s226
    %p235 = scmp.eq.s32.totalorder %s24, 3
    %p236 = por %p234, %p235
    %p237 = scmp.ne.s32.totalorder %s226, %s227
    %p238 = scmp.eq.s32.totalorder %s24, 0
    %p239 = por %p237, %p238
    %p240 = scmp.ne.s32.totalorder %s226, %s227
    %p241 = scmp.eq.s32.totalorder %s25, 3
    %p242 = por %p240, %p241
    %p244 = scmp.ne.s32.totalorder %s227, %s243
    %p245 = scmp.eq.s32.totalorder %s25, 0
    %p246 = por %p244, %p245
    %s247 = ssub.s32 %s27, %s34
    %p248 = scmp.eq.s32.totalorder %s247, 0
    %s250 = sadd.s32 %s249, 1
    %s251 = scalar_select %p248, %s249, %s250
    %p254 = pneg %p248
    %p255 = scmp.eq.s32.totalorder %s19, 3
    %p256 = por %p254, %p255
    %p257 = scmp.ne.s32.totalorder %s249, %s252
    %p258 = scmp.eq.s32.totalorder %s19, 0
    %p259 = por %p257, %p258
    %p260 = scmp.ne.s32.totalorder %s249, %s252
    %p261 = scmp.eq.s32.totalorder %s24, 3
    %p262 = por %p260, %p261
    %p263 = scmp.ne.s32.totalorder %s252, %s253
    %p264 = scmp.eq.s32.totalorder %s24, 0
    %p265 = por %p263, %p264
    %p266 = scmp.ne.s32.totalorder %s252, %s253
    %p267 = scmp.eq.s32.totalorder %s25, 3
    %p268 = por %p266, %p267
    %p270 = scmp.ne.s32.totalorder %s253, %s269
    %p271 = scmp.eq.s32.totalorder %s25, 0
    %p272 = por %p270, %p271
    %s273 = ssub.s32 %s27, %s34
    %p274 = scmp.eq.s32.totalorder %s273, 0
    %s276 = sadd.s32 %s275, 1
    %s277 = scalar_select %p274, %s275, %s276
    %p280 = pneg %p274
    %p281 = scmp.eq.s32.totalorder %s19, 3
    %p282 = por %p280, %p281
    %p283 = scmp.ne.s32.totalorder %s275, %s278
    %p284 = scmp.eq.s32.totalorder %s19, 0
    %p285 = por %p283, %p284
    %p286 = scmp.ne.s32.totalorder %s275, %s278
    %p287 = scmp.eq.s32.totalorder %s24, 3
    %p288 = por %p286, %p287
    %p289 = scmp.ne.s32.totalorder %s278, %s279
    %p290 = scmp.eq.s32.totalorder %s24, 0
    %p291 = por %p289, %p290
    %p292 = scmp.ne.s32.totalorder %s278, %s279
    %p293 = scmp.eq.s32.totalorder %s25, 3
    %p294 = por %p292, %p293
    %p296 = scmp.ne.s32.totalorder %s279, %s295
    %p297 = scmp.eq.s32.totalorder %s25, 0
    %p298 = por %p296, %p297
    %s299 = ssub.s32 %s27, %s34
    %p300 = scmp.eq.s32.totalorder %s299, 0
    %s302 = sadd.s32 %s301, 1
    %s303 = scalar_select %p300, %s301, %s302
    %p306 = pneg %p300
    %p307 = scmp.eq.s32.totalorder %s19, 3
    %p308 = por %p306, %p307
    %p309 = scmp.ne.s32.totalorder %s301, %s304
    %p310 = scmp.eq.s32.totalorder %s19, 0
    %p311 = por %p309, %p310
    %p312 = scmp.ne.s32.totalorder %s301, %s304
    %p313 = scmp.eq.s32.totalorder %s24, 3
    %p314 = por %p312, %p313
    %p315 = scmp.ne.s32.totalorder %s304, %s305
    %p316 = scmp.eq.s32.totalorder %s24, 0
    %p317 = por %p315, %p316
    %p318 = scmp.ne.s32.totalorder %s304, %s305
    %p319 = scmp.eq.s32.totalorder %s25, 3
    %p320 = por %p318, %p319
    %p322 = scmp.ne.s32.totalorder %s305, %s321
    %p323 = scmp.eq.s32.totalorder %s25, 0
    %p324 = por %p322, %p323
    %s325 = ssub.s32 %s27, %s34
    %p326 = scmp.eq.s32.totalorder %s325, 0
    %s328 = sadd.s32 %s327, 1
    %s329 = scalar_select %p326, %s327, %s328
    %p332 = pneg %p326
    %p333 = scmp.eq.s32.totalorder %s19, 3
    %p334 = por %p332, %p333
    %p335 = scmp.ne.s32.totalorder %s327, %s330
    %p336 = scmp.eq.s32.totalorder %s19, 0
    %p337 = por %p335, %p336
    %p338 = scmp.ne.s32.totalorder %s327, %s330
    %p339 = scmp.eq.s32.totalorder %s24, 3
    %p340 = por %p338, %p339
    %p341 = scmp.ne.s32.totalorder %s330, %s331
    %p342 = scmp.eq.s32.totalorder %s24, 0
    %p343 = por %p341, %p342
    %p344 = scmp.ne.s32.totalorder %s330, %s331
    %p345 = scmp.eq.s32.totalorder %s25, 3
    %p346 = por %p344, %p345
    %p348 = scmp.ne.s32.totalorder %s331, %s347
    %p349 = scmp.eq.s32.totalorder %s25, 0
    %p350 = por %p348, %p349
    %s351 = ssub.s32 %s27, %s34
    %p352 = scmp.eq.s32.totalorder %s351, 0
    %s354 = sadd.s32 %s353, 1
    %s355 = scalar_select %p352, %s353, %s354
    %p358 = pneg %p352
    %p359 = scmp.eq.s32.totalorder %s19, 3
    %p360 = por %p358, %p359
    %p361 = scmp.ne.s32.totalorder %s353, %s356
    %p362 = scmp.eq.s32.totalorder %s19, 0
    %p363 = por %p361, %p362
    %p364 = scmp.ne.s32.totalorder %s353, %s356
    %p365 = scmp.eq.s32.totalorder %s24, 3
    %p366 = por %p364, %p365
    %p367 = scmp.ne.s32.totalorder %s356, %s357
    %p368 = scmp.eq.s32.totalorder %s24, 0
    %p369 = por %p367, %p368
    %p370 = scmp.ne.s32.totalorder %s356, %s357
    %p371 = scmp.eq.s32.totalorder %s25, 3
    %p372 = por %p370, %p371
    %p374 = scmp.ne.s32.totalorder %s357, %s373
    %p375 = scmp.eq.s32.totalorder %s25, 0
    %p376 = por %p374, %p375
    %s377 = ssub.s32 %s26, %s38
    %p378 = scmp.eq.s32.totalorder %s377, 0
    %s380 = sadd.s32 %s379, 1
    %s381 = scalar_select %p378, %s379, %s380
    %p384 = pneg %p378
    %p385 = scmp.eq.s32.totalorder %s19, 3
    %p386 = por %p384, %p385
    %p387 = scmp.ne.s32.totalorder %s379, %s382
    %p388 = scmp.eq.s32.totalorder %s19, 0
    %p389 = por %p387, %p388
    %p390 = scmp.ne.s32.totalorder %s379, %s382
    %p391 = scmp.eq.s32.totalorder %s24, 3
    %p392 = por %p390, %p391
    %p393 = scmp.ne.s32.totalorder %s382, %s383
    %p394 = scmp.eq.s32.totalorder %s24, 0
    %p395 = por %p393, %p394
    %p396 = scmp.ne.s32.totalorder %s382, %s383
    %p397 = scmp.eq.s32.totalorder %s25, 3
    %p398 = por %p396, %p397
    %p400 = scmp.ne.s32.totalorder %s383, %s399
    %p401 = scmp.eq.s32.totalorder %s25, 0
    %p402 = por %p400, %p401
    %p403 = scmp.le.s32.totalorder 1, %s19
    %p404 = scmp.lt.s32.totalorder %s19, 5
    %p405 = pnand %p403, %p404
    %p406 = pneg %p405
    // Predicated region
    $region9: #{forward.6} parent=5 // pred_check
      _
    $region10: #{forward.6} parent=5 // pred_check_branch
      %408 = sbr.rel (%p405) target = $region12
    $region11: #{forward.6} parent=5 // pred_region
      %s409 = ssub.s32 %s19, 1
    $region12: #{forward.6} parent=5 // pred_fallthru
      _
    %p410 = scmp.lt.s32.totalorder %s19, 4
    // Predicated region
    $region13: #{forward.6} parent=5 // pred_check
      %p411 = pneg %p410
    $region14: #{forward.6} parent=5 // pred_check_branch
      %413 = sbr.rel (%p411) target = $region16
    $region15: #{forward.6} parent=5 // pred_region
      // Predicated region
      $region17: #{forward.6} parent=15 // pred_check
        %p414 = pneg %p51
      $region18: #{forward.6} parent=15 // pred_check_branch
        %416 = sbr.rel (%p414) target = $region20
      $region19: #{forward.6} parent=15 // pred_region
        %p417 = scmp.lt.s32.totalorder %s26, 1
        %s418 = scalar_select %p417, %s26, 1
        %s419 = smul.addr %s418, 2
        %s420 = smul.addr %s419, 8
        %s421 = scalar_lea.vmem %s0, %s420
      $region20: #{forward.6} parent=15 // pred_fallthru
        _
      // Predicated region
      $region21: #{forward.6} parent=15 // pred_check
        %p422 = pneg %p77
      $region22: #{forward.6} parent=15 // pred_check_branch
        %424 = sbr.rel (%p422) target = $region24
      $region23: #{forward.6} parent=15 // pred_region
        %p425 = scmp.lt.s32.totalorder %s27, 1
        %s426 = scalar_select %p425, %s27, 1
        %s427 = scalar_lea.vmem %s1, %s426
      $region24: #{forward.6} parent=15 // pred_fallthru
        _
      // Predicated region
      $region25: #{forward.6} parent=15 // pred_check
        %p428 = pneg %p103
      $region26: #{forward.6} parent=15 // pred_check_branch
        %430 = sbr.rel (%p428) target = $region28
      $region27: #{forward.6} parent=15 // pred_region
        %p431 = scmp.lt.s32.totalorder %s27, 1
        %s432 = scalar_select %p431, %s27, 1
        %s433 = scalar_lea.vmem %s2, %s432
      $region28: #{forward.6} parent=15 // pred_fallthru
        _
      // Predicated region
      $region29: #{forward.6} parent=15 // pred_check
        %p434 = pneg %p129
      $region30: #{forward.6} parent=15 // pred_check_branch
        %436 = sbr.rel (%p434) target = $region32
      $region31: #{forward.6} parent=15 // pred_region
        %p437 = scmp.lt.s32.totalorder %s27, 1
        %s438 = scalar_select %p437, %s27, 1
        %s439 = smul.addr %s438, 2
        %s440 = smul.addr %s439, 8
        %s441 = scalar_lea.vmem %s3, %s440
      $region32: #{forward.6} parent=15 // pred_fallthru
        _
      // Predicated region
      $region33: #{forward.6} parent=15 // pred_check
        %p442 = pneg %p155
      $region34: #{forward.6} parent=15 // pred_check_branch
        %444 = sbr.rel (%p442) target = $region36
      $region35: #{forward.6} parent=15 // pred_region
        %p445 = scmp.lt.s32.totalorder %s27, 1
        %s446 = scalar_select %p445, %s27, 1
        %s447 = scalar_lea.vmem %s4, %s446
      $region36: #{forward.6} parent=15 // pred_fallthru
        _
      // Predicated region
      $region37: #{forward.6} parent=15 // pred_check
        %p448 = pneg %p181
      $region38: #{forward.6} parent=15 // pred_check_branch
        %450 = sbr.rel (%p448) target = $region40
      $region39: #{forward.6} parent=15 // pred_region
        %p451 = scmp.lt.s32.totalorder %s27, 1
        %s452 = scalar_select %p451, %s27, 1
        %s453 = smul.addr %s452, 4
        %s454 = smul.addr %s453, 4
        %s455 = scalar_lea.vmem %s5, %s454
      $region40: #{forward.6} parent=15 // pred_fallthru
        _
      // Predicated region
      $region41: #{forward.6} parent=15 // pred_check
        %p456 = pneg %p207
      $region42: #{forward.6} parent=15 // pred_check_branch
        %458 = sbr.rel (%p456) target = $region44
      $region43: #{forward.6} parent=15 // pred_region
        %p459 = scmp.lt.s32.totalorder %s27, 1
        %s460 = scalar_select %p459, %s27, 1
        %s461 = scalar_lea.vmem %s6, %s460
      $region44: #{forward.6} parent=15 // pred_fallthru
        _
      // Predicated region
      $region45: #{forward.6} parent=15 // pred_check
        %p462 = pneg %p233
      $region46: #{forward.6} parent=15 // pred_check_branch
        %464 = sbr.rel (%p462) target = $region48
      $region47: #{forward.6} parent=15 // pred_region
        %p465 = scmp.lt.s32.totalorder %s27, 1
        %s466 = scalar_select %p465, %s27, 1
        %s467 = scalar_lea.vmem %s7, %s466
      $region48: #{forward.6} parent=15 // pred_fallthru
        _
      // Predicated region
      $region49: #{forward.6} parent=15 // pred_check
        %p468 = pneg %p259
      $region50: #{forward.6} parent=15 // pred_check_branch
        %470 = sbr.rel (%p468) target = $region52
      $region51: #{forward.6} parent=15 // pred_region
        %p471 = scmp.lt.s32.totalorder %s27, 1
        %s472 = scalar_select %p471, %s27, 1
        %s473 = scalar_lea.vmem %s8, %s472
      $region52: #{forward.6} parent=15 // pred_fallthru
        _
      // Predicated region
      $region53: #{forward.6} parent=15 // pred_check
        %p474 = pneg %p285
      $region54: #{forward.6} parent=15 // pred_check_branch
        %476 = sbr.rel (%p474) target = $region56
      $region55: #{forward.6} parent=15 // pred_region
        %p477 = scmp.lt.s32.totalorder %s27, 1
        %s478 = scalar_select %p477, %s27, 1
        %s479 = smul.addr %s478, 2
        %s480 = smul.addr %s479, 8
        %s481 = scalar_lea.vmem %s9, %s480
      $region56: #{forward.6} parent=15 // pred_fallthru
        _
      // Predicated region
      $region57: #{forward.6} parent=15 // pred_check
        %p482 = pneg %p311
      $region58: #{forward.6} parent=15 // pred_check_branch
        %484 = sbr.rel (%p482) target = $region60
      $region59: #{forward.6} parent=15 // pred_region
        %p485 = scmp.lt.s32.totalorder %s27, 1
        %s486 = scalar_select %p485, %s27, 1
        %s487 = scalar_lea.vmem %s10, %s486
      $region60: #{forward.6} parent=15 // pred_fallthru
        _
      // Predicated region
      $region61: #{forward.6} parent=15 // pred_check
        %p488 = pneg %p337
      $region62: #{forward.6} parent=15 // pred_check_branch
        %490 = sbr.rel (%p488) target = $region64
      $region63: #{forward.6} parent=15 // pred_region
        %p491 = scmp.lt.s32.totalorder %s27, 1
        %s492 = scalar_select %p491, %s27, 1
        %s493 = smul.addr %s492, 8
        %s494 = smul.addr %s493, 8
        %s495 = scalar_lea.vmem %s11, %s494
      $region64: #{forward.6} parent=15 // pred_fallthru
        _
      // Predicated region
      $region65: #{forward.6} parent=15 // pred_check
        %p496 = pneg %p363
      $region66: #{forward.6} parent=15 // pred_check_branch
        %498 = sbr.rel (%p496) target = $region68
      $region67: #{forward.6} parent=15 // pred_region
        %p499 = scmp.lt.s32.totalorder %s27, 1
        %s500 = scalar_select %p499, %s27, 1
        %s501 = scalar_lea.vmem %s12, %s500
      $region68: #{forward.6} parent=15 // pred_fallthru
        _
    $region16: #{forward.6} parent=5 // pred_fallthru
      _
    %p502 = scmp.le.s32.totalorder 1, %s19
    %p503 = scmp.lt.s32.totalorder %s19, 5
    %p504 = pnand %p502, %p503
    %p505 = pneg %p504
    // Predicated region
    $region69: #{forward.6} parent=5 // pred_check
      _
    $region70: #{forward.6} parent=5 // pred_check_branch
      %507 = sbr.rel (%p504) target = $region72
    $region71: #{forward.6} parent=5 // pred_region
      %s508 = ssub.s32 %s19, 1
      %p509 = scmp.lt.s32.totalorder %s28, 1
      %s510 = scalar_select %p509, %s28, 1
      %s511 = smul.addr %s510, 2
      %s512 = smul.addr %s511, 8
      %s513 = scalar_lea.vmem %s0, %s512
      %p514 = pneg %p57
      %p515 = pneg %p54
      %p516 = scmp.lt.s32.totalorder %s29, 1
      %s517 = scalar_select %p516, %s29, 1
      %s518 = scalar_lea.vmem %s1, %s517
      %p519 = pneg %p83
      %p520 = pneg %p80
      %p521 = scmp.lt.s32.totalorder %s29, 1
      %s522 = scalar_select %p521, %s29, 1
      %s523 = scalar_lea.vmem %s2, %s522
      %p524 = pneg %p109
      %p525 = pneg %p106
      %p526 = scmp.lt.s32.totalorder %s29, 1
      %s527 = scalar_select %p526, %s29, 1
      %s528 = smul.addr %s527, 2
      %s529 = smul.addr %s528, 8
      %s530 = scalar_lea.vmem %s3, %s529
      %p531 = pneg %p135
      %p532 = pneg %p132
      %p533 = scmp.lt.s32.totalorder %s29, 1
      %s534 = scalar_select %p533, %s29, 1
      %s535 = scalar_lea.vmem %s4, %s534
      %p536 = pneg %p161
      %p537 = pneg %p158
      %p538 = scmp.lt.s32.totalorder %s29, 1
      %s539 = scalar_select %p538, %s29, 1
      %s540 = smul.addr %s539, 4
      %s541 = smul.addr %s540, 4
      %s542 = scalar_lea.vmem %s5, %s541
      %p543 = pneg %p187
      %p544 = pneg %p184
      %p545 = scmp.lt.s32.totalorder %s29, 1
      %s546 = scalar_select %p545, %s29, 1
      %s547 = scalar_lea.vmem %s6, %s546
      %p548 = pneg %p213
      %p549 = pneg %p210
      %p550 = scmp.lt.s32.totalorder %s29, 1
      %s551 = scalar_select %p550, %s29, 1
      %s552 = scalar_lea.vmem %s7, %s551
      %p553 = pneg %p239
      %p554 = pneg %p236
      %p555 = scmp.lt.s32.totalorder %s29, 1
      %s556 = scalar_select %p555, %s29, 1
      %s557 = scalar_lea.vmem %s8, %s556
      %p558 = pneg %p265
      %p559 = pneg %p262
      %p560 = scmp.lt.s32.totalorder %s29, 1
      %s561 = scalar_select %p560, %s29, 1
      %s562 = smul.addr %s561, 2
      %s563 = smul.addr %s562, 8
      %s564 = scalar_lea.vmem %s9, %s563
      %p565 = pneg %p291
      %p566 = pneg %p288
      %p567 = scmp.lt.s32.totalorder %s29, 1
      %s568 = scalar_select %p567, %s29, 1
      %s569 = scalar_lea.vmem %s10, %s568
      %p570 = pneg %p317
      %p571 = pneg %p314
      %p572 = scmp.lt.s32.totalorder %s29, 1
      %s573 = scalar_select %p572, %s29, 1
      %s574 = smul.addr %s573, 8
      %s575 = smul.addr %s574, 8
      %s576 = scalar_lea.vmem %s11, %s575
      %p577 = pneg %p343
      %p578 = pneg %p340
      %p579 = scmp.lt.s32.totalorder %s29, 1
      %s580 = scalar_select %p579, %s29, 1
      %s581 = scalar_lea.vmem %s12, %s580
      %p582 = pneg %p369
      %p583 = pneg %p366
      %p584 = pneg %p395
      %p585 = pneg %p392
      %p586 = scmp.lt.s32.totalorder %s28, 1
      %s587 = scalar_select %p586, %s28, 1
      %s588 = smul.addr %s587, 2
      %s589 = smul.addr %s588, 8
      %s590 = scalar_lea.vmem %s13, %s589
      %p591 = scmp.lt.s32.totalorder %s28, 1
      %s592 = scalar_select %p591, %s28, 1
      %s593 = smul.addr %s592, 2
      %s594 = smul.addr %s593, 8
      %s595 = scalar_lea.vmem %s0, %s594
      %p596 = scmp.lt.s32.totalorder %s29, 1
      %s597 = scalar_select %p596, %s29, 1
      %s598 = scalar_lea.vmem %s1, %s597
      %p599 = scmp.lt.s32.totalorder %s29, 1
      %s600 = scalar_select %p599, %s29, 1
      %s601 = scalar_lea.vmem %s2, %s600
      %p602 = scmp.lt.s32.totalorder %s29, 1
      %s603 = scalar_select %p602, %s29, 1
      %s604 = smul.addr %s603, 2
      %s605 = smul.addr %s604, 8
      %s606 = scalar_lea.vmem %s3, %s605
      %p607 = scmp.lt.s32.totalorder %s29, 1
      %s608 = scalar_select %p607, %s29, 1
      %s609 = scalar_lea.vmem %s4, %s608
      %p610 = scmp.lt.s32.totalorder %s29, 1
      %s611 = scalar_select %p610, %s29, 1
      %s612 = smul.addr %s611, 4
      %s613 = smul.addr %s612, 4
      %s614 = scalar_lea.vmem %s5, %s613
      %p615 = scmp.lt.s32.totalorder %s29, 1
      %s616 = scalar_select %p615, %s29, 1
      %s617 = scalar_lea.vmem %s6, %s616
      %p618 = scmp.lt.s32.totalorder %s29, 1
      %s619 = scalar_select %p618, %s29, 1
      %s620 = scalar_lea.vmem %s7, %s619
      %p621 = scmp.lt.s32.totalorder %s29, 1
      %s622 = scalar_select %p621, %s29, 1
      %s623 = scalar_lea.vmem %s8, %s622
      %p624 = scmp.lt.s32.totalorder %s29, 1
      %s625 = scalar_select %p624, %s29, 1
      %s626 = smul.addr %s625, 2
      %s627 = smul.addr %s626, 8
      %s628 = scalar_lea.vmem %s9, %s627
      %p629 = scmp.lt.s32.totalorder %s29, 1
      %s630 = scalar_select %p629, %s29, 1
      %s631 = scalar_lea.vmem %s10, %s630
      %p632 = scmp.lt.s32.totalorder %s29, 1
      %s633 = scalar_select %p632, %s29, 1
      %s634 = smul.addr %s633, 8
      %s635 = smul.addr %s634, 8
      %s636 = scalar_lea.vmem %s11, %s635
      %p637 = scmp.lt.s32.totalorder %s29, 1
      %s638 = scalar_select %p637, %s29, 1
      %s639 = scalar_lea.vmem %s12, %s638
      %p640 = scmp.lt.s32.totalorder %s28, 1
      %s641 = scalar_select %p640, %s28, 1
      %s642 = smul.addr %s641, 2
      %s643 = smul.addr %s642, 8
      %s644 = scalar_lea.vmem %s13, %s643
      %p645 = scmp.eq.s32.totalorder %s29, 0
      // Predicated region
      $region73: #{forward.6} parent=71 // pred_check
        %p646 = pneg %p645
      $region74: #{forward.6} parent=71 // pred_check_branch
        %648 = sbr.rel (%p646) target = $region76
      $region75: #{forward.6} parent=71 // pred_region
        %v649 = vld [vmem:[%s595] sm:$0xff]
        %v650 = vld [vmem:[%s595 + $0x8] sm:$0x1]
        %vm651 = vcmask 130048
        %652 = vst.msk [vmem:[%s644] sm:$0xff] %vm651, %v649
        %vm653 = vcmask 122880
        %654 = vst.msk [vmem:[%s644 + $0x8] sm:$0x1] %vm653, %v650
      $region76: #{forward.6} parent=71 // pred_fallthru
        _
      %v655 = vld [vmem:[%s644] sm:$0xff]
      %v656 = vld [vmem:[%s644 + $0x8] sm:$0x1]
      %v657 = vld [vmem:[%s598] sm:$0x1]
      %v658 = vld [vmem:[%s601] sm:$0x1]
      %v659 = vld [vmem:[%s606] sm:$0xff]
      %v660 = vld [vmem:[%s606 + $0x8] sm:$0xff]
      %v661 = vld [vmem:[%s609] sm:$0x1]
      %v662 = vld [vmem:[%s614] sm:$0xf]
      %v663 = vld [vmem:[%s614 + $0x4] sm:$0xf]
      %v664 = vld [vmem:[%s614 + $0x8] sm:$0xf]
      %v665 = vld [vmem:[%s614 + $0xc] sm:$0xf]
      %v666 = vld [vmem:[%s617] sm:$0x1]
      %v667 = vld [vmem:[%s620] sm:$0x1]
      %v668 = vld [vmem:[%s623] sm:$0x1]
      %v669 = vld [vmem:[%s628] sm:$0xff]
      %v670 = vld [vmem:[%s628 + $0x8] sm:$0xff]
      %v671 = vld [vmem:[%s631] sm:$0x1]
      %v672 = vld [vmem:[%s636] sm:$0xff]
      %v673 = vld [vmem:[%s636 + $0x8] sm:$0xff]
      %v674 = vld [vmem:[%s636 + $0x10] sm:$0xff]
      %v675 = vld [vmem:[%s636 + $0x18] sm:$0xff]
      %v676 = vld [vmem:[%s636 + $0x20] sm:$0xff]
      %v677 = vld [vmem:[%s636 + $0x28] sm:$0xff]
      %v678 = vld [vmem:[%s636 + $0x30] sm:$0xff]
      %v679 = vld [vmem:[%s636 + $0x38] sm:$0xff]
      %v680 = vld [vmem:[%s639] sm:$0x1]
      %vm681 = vcmask 130048
      %v682 = vsel %vm681, %v655, 0.0
      %683 = vadd.xlane.f32.xlu0 %v682
      %v684 = vpop.xlane.xlu0 %683
      %vm685 = vcmask 122880
      %v686 = vsel %vm685, %v656, 0.0
      %687 = vadd.xlane.f32.xlu0 %v686
      %v688 = vpop.xlane.xlu0 %687
      %v689 = vrcp.pop 16.0
      %v690 = vmul.f32 16.0, %v689
      %v691 = vsub.f32 1.0, %v690
      %v692 = vmul.f32 %v689, %v691
      %v693 = vadd.f32 %v689, %v692
      %vm694 = vweird.f32 %v689
      %v695 = vsel %vm694, %v689, %v693
      %v696 = vmul.f32 %v684, %v695
      %v697 = vmul.f32 %v688, %v695
      %v698 = vsub.f32 %v655, %v696
      %v699 = vsub.f32 %v656, %v697
      %v700 = vmul.f32 %v698, %v698
      %v701 = vmul.f32 %v699, %v699
      %v702 = vsel %vm681, %v700, 0.0
      %703 = vadd.xlane.f32.xlu0 %v702
      %v704 = vpop.xlane.xlu0 %703
      %v705 = vsel %vm685, %v701, 0.0
      %706 = vadd.xlane.f32.xlu0 %v705
      %v707 = vpop.xlane.xlu0 %706
      %v708 = vmul.f32 %v704, %v695
      %v709 = vmul.f32 %v707, %v695
      %v710 = vadd.f32 %v708, 1e-05
      %v711 = vadd.f32 %v709, 1e-05
      %v712 = vrsqrt.pop %v710
      %v713 = vmul.f32 %v712, %v710
      %v714 = vmul.f32 %v713, %v712
      %v715 = vmul.f32 0.5, %v714
      %v716 = vsub.f32 1.5, %v715
      %v717 = vmul.f32 %v712, %v716
      %vm718 = vweird.f32 %v710
      %vm719 = vweird.f32 %v712
      %vm720 = vmor %vm718, %vm719
      %v721 = vsel %vm720, %v712, %v717
      %v722 = vrsqrt.pop %v711
      %v723 = vmul.f32 %v722, %v711
      %v724 = vmul.f32 %v723, %v722
      %v725 = vmul.f32 0.5, %v724
      %v726 = vsub.f32 1.5, %v725
      %v727 = vmul.f32 %v722, %v726
      %vm728 = vweird.f32 %v711
      %vm729 = vweird.f32 %v722
      %vm730 = vmor %vm728, %vm729
      %v731 = vsel %vm730, %v722, %v727
      %v732 = vmul.f32 %v698, %v721
      %v733 = vmul.f32 %v699, %v731
      %v735 = vperm.slane %v657, 0
      %v737 = vmul.f32 %v732, %v735
      %v738 = vmul.f32 %v733, %v735
      %v740 = vperm.slane %v658, 0
      %v742 = vadd.f32 %v737, %v740
      %v743 = vadd.f32 %v738, %v740
      %v745 = vperm.slane %v661, 0
      %v748 = vsel %vm681, %v742, 0
      %v751 = vsel %vm681, %v743, 0
      %753 = vmatpush.msra.mxu0 0.0
      %754 = vmatpush.msra.mxu0 0.0
      %755 = vmatpush.msra.mxu0 0.0
      %756 = vmatpush.msra.mxu0 0.0
      %757 = vmatpush.msra.mxu0 0.0
      %758 = vmatpush.msra.mxu0 0.0
      %759 = vmatpush.msra.mxu0 0.0
      %760 = vmatpush.msra.mxu0 0.0
      %761 = vmatpush.msra.mxu0 0.0
      %762 = vmatpush.msra.mxu0 0.0
      %763 = vmatpush.msra.mxu0 0.0
      %764 = vmatpush.msra.mxu0 0.0
      %765 = vmatpush.msra.mxu0 0.0
      %766 = vmatpush.msra.mxu0 0.0
      %767 = vmatpush.msra.mxu0 %v660
      %768 = vmatpush.msra.mxu0 %v659
      %769 = vmatmul.f32.gmra.mxu0 %v748
      %v770 = vpop.f32.mrf.mxu0
      %v771 = vadd.f32 %v745, %v770
      %772 = vmatmul.f32.gmra.mxu0 %v751
      %v773 = vpop.f32.mrf.mxu0
      %v774 = vadd.f32 %v745, %v773
      %775 = vdwg.mxu0
      %v776 = vmul.f32 %v771, 0.5
      %v777 = vmul.f32 %v774, 0.5
      %780 = vrot.lane.b32.xlu0 %v771, 112
      %v781 = vpop.permute.xlu0 %780
      %782 = vrot.lane.b32.xlu0 %v774, 112
      %v783 = vpop.permute.xlu0 %782
      %vm784 = vcmask 31744
      %v786 = vsel %vm784, %v776, 0
      %v789 = vsel %vm784, %v777, 0
      %v791 = vsel %vm784, %v781, 0
      %v793 = vsel %vm784, %v783, 0
      %795 = vmatpush.xpose.msra.mxu0 0.0
      %796 = vmatpush.xpose.msra.mxu0 0.0
      %797 = vmatpush.xpose.msra.mxu0 0.0
      %798 = vmatpush.xpose.msra.mxu0 0.0
      %799 = vmatpush.xpose.msra.mxu0 0.0
      %800 = vmatpush.xpose.msra.mxu0 0.0
      %801 = vmatpush.xpose.msra.mxu0 0.0
      %802 = vmatpush.xpose.msra.mxu0 0.0
      %803 = vmatpush.xpose.msra.mxu0 0.0
      %804 = vmatpush.xpose.msra.mxu0 0.0
      %805 = vmatpush.xpose.msra.mxu0 0.0
      %806 = vmatpush.xpose.msra.mxu0 0.0
      %807 = vmatpush.xpose.msra.mxu0 0.0
      %808 = vmatpush.xpose.msra.mxu0 0.0
      %809 = vmatpush.xpose.msra.mxu0 %v793
      %810 = vmatpush.xpose.msra.mxu0 %v791
      %811 = vmatmul.f32.gmra.mxu0 %v786
      %v812 = vpop.f32.mrf.mxu0
      %v813 = vadd.f32 0.0, %v812
      %814 = vmatmul.f32.gmra.mxu0 %v789
      %v815 = vpop.f32.mrf.mxu0
      %v816 = vadd.f32 0.0, %v815
      %817 = vdwg.mxu0
      %vm818 = vcmask 72704
      %v819 = vsel %vm818, %v813, -inf
      %820 = vmax.xlane.f32.xlu0 %v819
      %v821 = vpop.xlane.xlu0 %820
      %vm822 = vcmask 65536
      %v823 = vsel %vm822, %v816, -inf
      %824 = vmax.xlane.f32.xlu0 %v823
      %v825 = vpop.xlane.xlu0 %824
      %v826 = vsub.f32 %v813, %v821
      %v827 = vsub.f32 %v816, %v825
      %v828 = vmul.f32 %v826, 1.442695
      %v829 = vpow.pop %v828
      %v830 = vmul.f32 %v827, 1.442695
      %v831 = vpow.pop %v830
      %v832 = vsel %vm818, %v829, 0.0
      %833 = vadd.xlane.f32.xlu0 %v832
      %v834 = vpop.xlane.xlu0 %833
      %v835 = vsel %vm822, %v831, 0.0
      %836 = vadd.xlane.f32.xlu0 %v835
      %v837 = vpop.xlane.xlu0 %836
      %v838 = vrcp.pop %v834
      %v839 = vmul.f32 %v834, %v838
      %v840 = vsub.f32 1.0, %v839
      %v841 = vmul.f32 %v838, %v840
      %v842 = vadd.f32 %v838, %v841
      %vm843 = vweird.f32 %v834
      %vm844 = vweird.f32 %v838
      %vm845 = vmor %vm843, %vm844
      %v846 = vsel %vm845, %v838, %v842
      %v847 = vand.u32 2147483647, %v834
      %vm848 = vcmp.eq.f32.partialorder %v847, 8.507059e+37
      %v849 = vand.u32 %v834, 2147483648
      %v850 = vor.u32 1.1754944e-38, %v849
      %v851 = vsel %vm848, %v850, %v846
      %v852 = vmul.f32 %v829, %v851
      %v853 = vrcp.pop %v837
      %v854 = vmul.f32 %v837, %v853
      %v855 = vsub.f32 1.0, %v854
      %v856 = vmul.f32 %v853, %v855
      %v857 = vadd.f32 %v853, %v856
      %vm858 = vweird.f32 %v837
      %vm859 = vweird.f32 %v853
      %vm860 = vmor %vm858, %vm859
      %v861 = vsel %vm860, %v853, %v857
      %v862 = vand.u32 2147483647, %v837
      %vm863 = vcmp.eq.f32.partialorder %v862, 8.507059e+37
      %v864 = vand.u32 %v837, 2147483648
      %v865 = vor.u32 1.1754944e-38, %v864
      %v866 = vsel %vm863, %v865, %v861
      %v867 = vmul.f32 %v831, %v866
      %868 = vrot.lane.b32.xlu0 %v771, 96
      %v869 = vpop.permute.xlu0 %868
      %870 = vrot.lane.b32.xlu0 %v774, 96
      %v871 = vpop.permute.xlu0 %870
      %v874 = vsel %vm818, %v852, 0
      %v877 = vsel %vm818, %v867, 0
      %vm879 = vcmask 1040384
      %v880 = vsel %vm879, %v871, 0
      %882 = vmatpush.msra.mxu0 0.0
      %883 = vmatpush.msra.mxu0 0.0
      %884 = vmatpush.msra.mxu0 0.0
      %885 = vmatpush.msra.mxu0 0.0
      %886 = vmatpush.msra.mxu0 0.0
      %887 = vmatpush.msra.mxu0 0.0
      %888 = vmatpush.msra.mxu0 0.0
      %889 = vmatpush.msra.mxu0 0.0
      %890 = vmatpush.msra.mxu0 0.0
      %891 = vmatpush.msra.mxu0 0.0
      %892 = vmatpush.msra.mxu0 0.0
      %893 = vmatpush.msra.mxu0 0.0
      %894 = vmatpush.msra.mxu0 0.0
      %895 = vmatpush.msra.mxu0 0.0
      %896 = vmatpush.msra.mxu0 %v880
      %897 = vmatpush.msra.mxu0 %v869
      %898 = vmatmul.f32.gmra.mxu0 %v874
      %v899 = vpop.f32.mrf.mxu0
      %v900 = vadd.f32 0.0, %v899
      %901 = vmatmul.f32.gmra.mxu0 %v877
      %v902 = vpop.f32.mrf.mxu0
      %v903 = vadd.f32 0.0, %v902
      %904 = vdwg.mxu0
      %905 = vrot.lane.b32.xlu0 %v776, 124
      %v906 = vpop.permute.xlu0 %905
      %907 = vrot.lane.b32.xlu0 %v777, 124
      %v908 = vpop.permute.xlu0 %907
      %909 = vrot.lane.b32.xlu0 %v771, 108
      %v910 = vpop.permute.xlu0 %909
      %911 = vrot.lane.b32.xlu0 %v774, 108
      %v912 = vpop.permute.xlu0 %911
      %v913 = vsel %vm784, %v906, 0
      %v915 = vsel %vm784, %v908, 0
      %v917 = vsel %vm784, %v910, 0
      %v919 = vsel %vm784, %v912, 0
      %921 = vmatpush.xpose.msra.mxu0 0.0
      %922 = vmatpush.xpose.msra.mxu0 0.0
      %923 = vmatpush.xpose.msra.mxu0 0.0
      %924 = vmatpush.xpose.msra.mxu0 0.0
      %925 = vmatpush.xpose.msra.mxu0 0.0
      %926 = vmatpush.xpose.msra.mxu0 0.0
      %927 = vmatpush.xpose.msra.mxu0 0.0
      %928 = vmatpush.xpose.msra.mxu0 0.0
      %929 = vmatpush.xpose.msra.mxu0 0.0
      %930 = vmatpush.xpose.msra.mxu0 0.0
      %931 = vmatpush.xpose.msra.mxu0 0.0
      %932 = vmatpush.xpose.msra.mxu0 0.0
      %933 = vmatpush.xpose.msra.mxu0 0.0
      %934 = vmatpush.xpose.msra.mxu0 0.0
      %935 = vmatpush.xpose.msra.mxu0 %v919
      %936 = vmatpush.xpose.msra.mxu0 %v917
      %937 = vmatmul.f32.gmra.mxu0 %v913
      %v938 = vpop.f32.mrf.mxu0
      %v939 = vadd.f32 0.0, %v938
      %940 = vmatmul.f32.gmra.mxu0 %v915
      %v941 = vpop.f32.mrf.mxu0
      %v942 = vadd.f32 0.0, %v941
      %943 = vdwg.mxu0
      %v944 = vsel %vm818, %v939, -inf
      %945 = vmax.xlane.f32.xlu0 %v944
      %v946 = vpop.xlane.xlu0 %945
      %v947 = vsel %vm822, %v942, -inf
      %948 = vmax.xlane.f32.xlu0 %v947
      %v949 = vpop.xlane.xlu0 %948
      %v950 = vsub.f32 %v939, %v946
      %v951 = vsub.f32 %v942, %v949
      %v952 = vmul.f32 %v950, 1.442695
      %v953 = vpow.pop %v952
      %v954 = vmul.f32 %v951, 1.442695
      %v955 = vpow.pop %v954
      %v956 = vsel %vm818, %v953, 0.0
      %957 = vadd.xlane.f32.xlu0 %v956
      %v958 = vpop.xlane.xlu0 %957
      %v959 = vsel %vm822, %v955, 0.0
      %960 = vadd.xlane.f32.xlu0 %v959
      %v961 = vpop.xlane.xlu0 %960
      %v962 = vrcp.pop %v958
      %v963 = vmul.f32 %v958, %v962
      %v964 = vsub.f32 1.0, %v963
      %v965 = vmul.f32 %v962, %v964
      %v966 = vadd.f32 %v962, %v965
      %vm967 = vweird.f32 %v958
      %vm968 = vweird.f32 %v962
      %vm969 = vmor %vm967, %vm968
      %v970 = vsel %vm969, %v962, %v966
      %v971 = vand.u32 2147483647, %v958
      %vm972 = vcmp.eq.f32.partialorder %v971, 8.507059e+37
      %v973 = vand.u32 %v958, 2147483648
      %v974 = vor.u32 1.1754944e-38, %v973
      %v975 = vsel %vm972, %v974, %v970
      %v976 = vmul.f32 %v953, %v975
      %v977 = vrcp.pop %v961
      %v978 = vmul.f32 %v961, %v977
      %v979 = vsub.f32 1.0, %v978
      %v980 = vmul.f32 %v977, %v979
      %v981 = vadd.f32 %v977, %v980
      %vm982 = vweird.f32 %v961
      %vm983 = vweird.f32 %v977
      %vm984 = vmor %vm982, %vm983
      %v985 = vsel %vm984, %v977, %v981
      %v986 = vand.u32 2147483647, %v961
      %vm987 = vcmp.eq.f32.partialorder %v986, 8.507059e+37
      %v988 = vand.u32 %v961, 2147483648
      %v989 = vor.u32 1.1754944e-38, %v988
      %v990 = vsel %vm987, %v989, %v985
      %v991 = vmul.f32 %v955, %v990
      %992 = vrot.lane.b32.xlu0 %v771, 92
      %v993 = vpop.permute.xlu0 %992
      %994 = vrot.lane.b32.xlu0 %v774, 92
      %v995 = vpop.permute.xlu0 %994
      %v998 = vsel %vm818, %v976, 0
      %v1001 = vsel %vm818, %v991, 0
      %v1003 = vsel %vm879, %v995, 0
      %1005 = vmatpush.msra.mxu0 0.0
      %1006 = vmatpush.msra.mxu0 0.0
      %1007 = vmatpush.msra.mxu0 0.0
      %1008 = vmatpush.msra.mxu0 0.0
      %1009 = vmatpush.msra.mxu0 0.0
      %1010 = vmatpush.msra.mxu0 0.0
      %1011 = vmatpush.msra.mxu0 0.0
      %1012 = vmatpush.msra.mxu0 0.0
      %1013 = vmatpush.msra.mxu0 0.0
      %1014 = vmatpush.msra.mxu0 0.0
      %1015 = vmatpush.msra.mxu0 0.0
      %1016 = vmatpush.msra.mxu0 0.0
      %1017 = vmatpush.msra.mxu0 0.0
      %1018 = vmatpush.msra.mxu0 0.0
      %1019 = vmatpush.msra.mxu0 %v1003
      %1020 = vmatpush.msra.mxu0 %v993
      %1021 = vmatmul.f32.gmra.mxu0 %v998
      %v1022 = vpop.f32.mrf.mxu0
      %v1023 = vadd.f32 0.0, %v1022
      %1024 = vmatmul.f32.gmra.mxu0 %v1001
      %v1025 = vpop.f32.mrf.mxu0
      %v1026 = vadd.f32 0.0, %v1025
      %1027 = vdwg.mxu0
      %v1029 = vsel %vm784, %v1023, 0
      %v1032 = vsel %vm784, %v1026, 0
      %vm1034 = vcmask 1043456
      %v1036 = vsel %vm1034, %v663, 0
      %1038 = vmatpush.msra.mxu0 0.0
      %1039 = vmatpush.msra.mxu0 0.0
      %1040 = vmatpush.msra.mxu0 0.0
      %1041 = vmatpush.msra.mxu0 0.0
      %1042 = vmatpush.msra.mxu0 0.0
      %1043 = vmatpush.msra.mxu0 0.0
      %1044 = vmatpush.msra.mxu0 0.0
      %1045 = vmatpush.msra.mxu0 0.0
      %1046 = vmatpush.msra.mxu0 0.0
      %1047 = vmatpush.msra.mxu0 0.0
      %1048 = vmatpush.msra.mxu0 0.0
      %1049 = vmatpush.msra.mxu0 0.0
      %1050 = vmatpush.msra.mxu0 0.0
      %1051 = vmatpush.msra.mxu0 0.0
      %1052 = vmatpush.msra.mxu0 0.0
      %1053 = vmatpush.msra.mxu0 %v1036
      %1054 = vmatmul.f32.gmra.mxu0 %v1029
      %v1055 = vpop.f32.mrf.mxu0
      %v1056 = vadd.f32 0.0, %v1055
      %1057 = vmatmul.f32.gmra.mxu0 %v1032
      %v1058 = vpop.f32.mrf.mxu0
      %v1059 = vadd.f32 0.0, %v1058
      %1060 = vdwg.mxu0
      %v1062 = vsel %vm784, %v900, 0
      %v1065 = vsel %vm784, %v903, 0
      %v1068 = vsel %vm1034, %v662, 0
      %1070 = vmatpush.msra.mxu0 0.0
      %1071 = vmatpush.msra.mxu0 0.0
      %1072 = vmatpush.msra.mxu0 0.0
      %1073 = vmatpush.msra.mxu0 0.0
      %1074 = vmatpush.msra.mxu0 0.0
      %1075 = vmatpush.msra.mxu0 0.0
      %1076 = vmatpush.msra.mxu0 0.0
      %1077 = vmatpush.msra.mxu0 0.0
      %1078 = vmatpush.msra.mxu0 0.0
      %1079 = vmatpush.msra.mxu0 0.0
      %1080 = vmatpush.msra.mxu0 0.0
      %1081 = vmatpush.msra.mxu0 0.0
      %1082 = vmatpush.msra.mxu0 0.0
      %1083 = vmatpush.msra.mxu0 0.0
      %1084 = vmatpush.msra.mxu0 0.0
      %1085 = vmatpush.msra.mxu0 %v1068
      %1086 = vmatmul.f32.gmra.mxu0 %v1062
      %v1087 = vpop.f32.mrf.mxu0
      %v1088 = vadd.f32 %v1056, %v1087
      %1089 = vmatmul.f32.gmra.mxu0 %v1065
      %v1090 = vpop.f32.mrf.mxu0
      %v1091 = vadd.f32 %v1059, %v1090
      %1092 = vdwg.mxu0
      %1093 = vrot.lane.b32.xlu0 %v776, 120
      %v1094 = vpop.permute.xlu0 %1093
      %1095 = vrot.lane.b32.xlu0 %v777, 120
      %v1096 = vpop.permute.xlu0 %1095
      %1097 = vrot.lane.b32.xlu0 %v771, 104
      %v1098 = vpop.permute.xlu0 %1097
      %1099 = vrot.lane.b32.xlu0 %v774, 104
      %v1100 = vpop.permute.xlu0 %1099
      %v1101 = vsel %vm784, %v1094, 0
      %v1103 = vsel %vm784, %v1096, 0
      %v1105 = vsel %vm784, %v1098, 0
      %v1107 = vsel %vm784, %v1100, 0
      %1109 = vmatpush.xpose.msra.mxu0 0.0
      %1110 = vmatpush.xpose.msra.mxu0 0.0
      %1111 = vmatpush.xpose.msra.mxu0 0.0
      %1112 = vmatpush.xpose.msra.mxu0 0.0
      %1113 = vmatpush.xpose.msra.mxu0 0.0
      %1114 = vmatpush.xpose.msra.mxu0 0.0
      %1115 = vmatpush.xpose.msra.mxu0 0.0
      %1116 = vmatpush.xpose.msra.mxu0 0.0
      %1117 = vmatpush.xpose.msra.mxu0 0.0
      %1118 = vmatpush.xpose.msra.mxu0 0.0
      %1119 = vmatpush.xpose.msra.mxu0 0.0
      %1120 = vmatpush.xpose.msra.mxu0 0.0
      %1121 = vmatpush.xpose.msra.mxu0 0.0
      %1122 = vmatpush.xpose.msra.mxu0 0.0
      %1123 = vmatpush.xpose.msra.mxu0 %v1107
      %1124 = vmatpush.xpose.msra.mxu0 %v1105
      %1125 = vmatmul.f32.gmra.mxu0 %v1101
      %v1126 = vpop.f32.mrf.mxu0
      %v1127 = vadd.f32 0.0, %v1126
      %1128 = vmatmul.f32.gmra.mxu0 %v1103
      %v1129 = vpop.f32.mrf.mxu0
      %v1130 = vadd.f32 0.0, %v1129
      %1131 = vdwg.mxu0
      %v1132 = vsel %vm818, %v1127, -inf
      %1133 = vmax.xlane.f32.xlu0 %v1132
      %v1134 = vpop.xlane.xlu0 %1133
      %v1135 = vsel %vm822, %v1130, -inf
      %1136 = vmax.xlane.f32.xlu0 %v1135
      %v1137 = vpop.xlane.xlu0 %1136
      %v1138 = vsub.f32 %v1127, %v1134
      %v1139 = vsub.f32 %v1130, %v1137
      %v1140 = vmul.f32 %v1138, 1.442695
      %v1141 = vpow.pop %v1140
      %v1142 = vmul.f32 %v1139, 1.442695
      %v1143 = vpow.pop %v1142
      %v1144 = vsel %vm818, %v1141, 0.0
      %1145 = vadd.xlane.f32.xlu0 %v1144
      %v1146 = vpop.xlane.xlu0 %1145
      %v1147 = vsel %vm822, %v1143, 0.0
      %1148 = vadd.xlane.f32.xlu0 %v1147
      %v1149 = vpop.xlane.xlu0 %1148
      %v1150 = vrcp.pop %v1146
      %v1151 = vmul.f32 %v1146, %v1150
      %v1152 = vsub.f32 1.0, %v1151
      %v1153 = vmul.f32 %v1150, %v1152
      %v1154 = vadd.f32 %v1150, %v1153
      %vm1155 = vweird.f32 %v1146
      %vm1156 = vweird.f32 %v1150
      %vm1157 = vmor %vm1155, %vm1156
      %v1158 = vsel %vm1157, %v1150, %v1154
      %v1159 = vand.u32 2147483647, %v1146
      %vm1160 = vcmp.eq.f32.partialorder %v1159, 8.507059e+37
      %v1161 = vand.u32 %v1146, 2147483648
      %v1162 = vor.u32 1.1754944e-38, %v1161
      %v1163 = vsel %vm1160, %v1162, %v1158
      %v1164 = vmul.f32 %v1141, %v1163
      %v1165 = vrcp.pop %v1149
      %v1166 = vmul.f32 %v1149, %v1165
      %v1167 = vsub.f32 1.0, %v1166
      %v1168 = vmul.f32 %v1165, %v1167
      %v1169 = vadd.f32 %v1165, %v1168
      %vm1170 = vweird.f32 %v1149
      %vm1171 = vweird.f32 %v1165
      %vm1172 = vmor %vm1170, %vm1171
      %v1173 = vsel %vm1172, %v1165, %v1169
      %v1174 = vand.u32 2147483647, %v1149
      %vm1175 = vcmp.eq.f32.partialorder %v1174, 8.507059e+37
      %v1176 = vand.u32 %v1149, 2147483648
      %v1177 = vor.u32 1.1754944e-38, %v1176
      %v1178 = vsel %vm1175, %v1177, %v1173
      %v1179 = vmul.f32 %v1143, %v1178
      %1180 = vrot.lane.b32.xlu0 %v771, 88
      %v1181 = vpop.permute.xlu0 %1180
      %1182 = vrot.lane.b32.xlu0 %v774, 88
      %v1183 = vpop.permute.xlu0 %1182
      %v1186 = vsel %vm818, %v1164, 0
      %v1189 = vsel %vm818, %v1179, 0
      %v1191 = vsel %vm879, %v1183, 0
      %1193 = vmatpush.msra.mxu0 0.0
      %1194 = vmatpush.msra.mxu0 0.0
      %1195 = vmatpush.msra.mxu0 0.0
      %1196 = vmatpush.msra.mxu0 0.0
      %1197 = vmatpush.msra.mxu0 0.0
      %1198 = vmatpush.msra.mxu0 0.0
      %1199 = vmatpush.msra.mxu0 0.0
      %1200 = vmatpush.msra.mxu0 0.0
      %1201 = vmatpush.msra.mxu0 0.0
      %1202 = vmatpush.msra.mxu0 0.0
      %1203 = vmatpush.msra.mxu0 0.0
      %1204 = vmatpush.msra.mxu0 0.0
      %1205 = vmatpush.msra.mxu0 0.0
      %1206 = vmatpush.msra.mxu0 0.0
      %1207 = vmatpush.msra.mxu0 %v1191
      %1208 = vmatpush.msra.mxu0 %v1181
      %1209 = vmatmul.f32.gmra.mxu0 %v1186
      %v1210 = vpop.f32.mrf.mxu0
      %v1211 = vadd.f32 0.0, %v1210
      %1212 = vmatmul.f32.gmra.mxu0 %v1189
      %v1213 = vpop.f32.mrf.mxu0
      %v1214 = vadd.f32 0.0, %v1213
      %1215 = vdwg.mxu0
      %v1217 = vsel %vm784, %v1211, 0
      %v1220 = vsel %vm784, %v1214, 0
      %v1223 = vsel %vm1034, %v664, 0
      %1225 = vmatpush.msra.mxu0 0.0
      %1226 = vmatpush.msra.mxu0 0.0
      %1227 = vmatpush.msra.mxu0 0.0
      %1228 = vmatpush.msra.mxu0 0.0
      %1229 = vmatpush.msra.mxu0 0.0
      %1230 = vmatpush.msra.mxu0 0.0
      %1231 = vmatpush.msra.mxu0 0.0
      %1232 = vmatpush.msra.mxu0 0.0
      %1233 = vmatpush.msra.mxu0 0.0
      %1234 = vmatpush.msra.mxu0 0.0
      %1235 = vmatpush.msra.mxu0 0.0
      %1236 = vmatpush.msra.mxu0 0.0
      %1237 = vmatpush.msra.mxu0 0.0
      %1238 = vmatpush.msra.mxu0 0.0
      %1239 = vmatpush.msra.mxu0 0.0
      %1240 = vmatpush.msra.mxu0 %v1223
      %1241 = vmatmul.f32.gmra.mxu0 %v1217
      %v1242 = vpop.f32.mrf.mxu0
      %v1243 = vadd.f32 0.0, %v1242
      %1244 = vmatmul.f32.gmra.mxu0 %v1220
      %v1245 = vpop.f32.mrf.mxu0
      %v1246 = vadd.f32 0.0, %v1245
      %1247 = vdwg.mxu0
      %v1248 = vadd.f32 %v1088, %v1243
      %v1249 = vadd.f32 %v1091, %v1246
      %1250 = vrot.lane.b32.xlu0 %v776, 116
      %v1251 = vpop.permute.xlu0 %1250
      %1252 = vrot.lane.b32.xlu0 %v777, 116
      %v1253 = vpop.permute.xlu0 %1252
      %1254 = vrot.lane.b32.xlu0 %v771, 100
      %v1255 = vpop.permute.xlu0 %1254
      %1256 = vrot.lane.b32.xlu0 %v774, 100
      %v1257 = vpop.permute.xlu0 %1256
      %v1258 = vsel %vm784, %v1251, 0
      %v1260 = vsel %vm784, %v1253, 0
      %v1262 = vsel %vm784, %v1255, 0
      %v1264 = vsel %vm784, %v1257, 0
      %1266 = vmatpush.xpose.msra.mxu0 0.0
      %1267 = vmatpush.xpose.msra.mxu0 0.0
      %1268 = vmatpush.xpose.msra.mxu0 0.0
      %1269 = vmatpush.xpose.msra.mxu0 0.0
      %1270 = vmatpush.xpose.msra.mxu0 0.0
      %1271 = vmatpush.xpose.msra.mxu0 0.0
      %1272 = vmatpush.xpose.msra.mxu0 0.0
      %1273 = vmatpush.xpose.msra.mxu0 0.0
      %1274 = vmatpush.xpose.msra.mxu0 0.0
      %1275 = vmatpush.xpose.msra.mxu0 0.0
      %1276 = vmatpush.xpose.msra.mxu0 0.0
      %1277 = vmatpush.xpose.msra.mxu0 0.0
      %1278 = vmatpush.xpose.msra.mxu0 0.0
      %1279 = vmatpush.xpose.msra.mxu0 0.0
      %1280 = vmatpush.xpose.msra.mxu0 %v1264
      %1281 = vmatpush.xpose.msra.mxu0 %v1262
      %1282 = vmatmul.f32.gmra.mxu0 %v1258
      %v1283 = vpop.f32.mrf.mxu0
      %v1284 = vadd.f32 0.0, %v1283
      %1285 = vmatmul.f32.gmra.mxu0 %v1260
      %v1286 = vpop.f32.mrf.mxu0
      %v1287 = vadd.f32 0.0, %v1286
      %1288 = vdwg.mxu0
      %v1289 = vsel %vm818, %v1284, -inf
      %1290 = vmax.xlane.f32.xlu0 %v1289
      %v1291 = vpop.xlane.xlu0 %1290
      %v1292 = vsel %vm822, %v1287, -inf
      %1293 = vmax.xlane.f32.xlu0 %v1292
      %v1294 = vpop.xlane.xlu0 %1293
      %v1295 = vsub.f32 %v1284, %v1291
      %v1296 = vsub.f32 %v1287, %v1294
      %v1297 = vmul.f32 %v1295, 1.442695
      %v1298 = vpow.pop %v1297
      %v1299 = vmul.f32 %v1296, 1.442695
      %v1300 = vpow.pop %v1299
      %v1301 = vsel %vm818, %v1298, 0.0
      %1302 = vadd.xlane.f32.xlu0 %v1301
      %v1303 = vpop.xlane.xlu0 %1302
      %v1304 = vsel %vm822, %v1300, 0.0
      %1305 = vadd.xlane.f32.xlu0 %v1304
      %v1306 = vpop.xlane.xlu0 %1305
      %v1307 = vrcp.pop %v1303
      %v1308 = vmul.f32 %v1303, %v1307
      %v1309 = vsub.f32 1.0, %v1308
      %v1310 = vmul.f32 %v1307, %v1309
      %v1311 = vadd.f32 %v1307, %v1310
      %vm1312 = vweird.f32 %v1303
      %vm1313 = vweird.f32 %v1307
      %vm1314 = vmor %vm1312, %vm1313
      %v1315 = vsel %vm1314, %v1307, %v1311
      %v1316 = vand.u32 2147483647, %v1303
      %vm1317 = vcmp.eq.f32.partialorder %v1316, 8.507059e+37
      %v1318 = vand.u32 %v1303, 2147483648
      %v1319 = vor.u32 1.1754944e-38, %v1318
      %v1320 = vsel %vm1317, %v1319, %v1315
      %v1321 = vmul.f32 %v1298, %v1320
      %v1322 = vrcp.pop %v1306
      %v1323 = vmul.f32 %v1306, %v1322
      %v1324 = vsub.f32 1.0, %v1323
      %v1325 = vmul.f32 %v1322, %v1324
      %v1326 = vadd.f32 %v1322, %v1325
      %vm1327 = vweird.f32 %v1306
      %vm1328 = vweird.f32 %v1322
      %vm1329 = vmor %vm1327, %vm1328
      %v1330 = vsel %vm1329, %v1322, %v1326
      %v1331 = vand.u32 2147483647, %v1306
      %vm1332 = vcmp.eq.f32.partialorder %v1331, 8.507059e+37
      %v1333 = vand.u32 %v1306, 2147483648
      %v1334 = vor.u32 1.1754944e-38, %v1333
      %v1335 = vsel %vm1332, %v1334, %v1330
      %v1336 = vmul.f32 %v1300, %v1335
      %1337 = vrot.lane.b32.xlu0 %v771, 84
      %v1338 = vpop.permute.xlu0 %1337
      %1339 = vrot.lane.b32.xlu0 %v774, 84
      %v1340 = vpop.permute.xlu0 %1339
      %v1343 = vsel %vm818, %v1321, 0
      %v1346 = vsel %vm818, %v1336, 0
      %v1348 = vsel %vm879, %v1340, 0
      %1350 = vmatpush.msra.mxu0 0.0
      %1351 = vmatpush.msra.mxu0 0.0
      %1352 = vmatpush.msra.mxu0 0.0
      %1353 = vmatpush.msra.mxu0 0.0
      %1354 = vmatpush.msra.mxu0 0.0
      %1355 = vmatpush.msra.mxu0 0.0
      %1356 = vmatpush.msra.mxu0 0.0
      %1357 = vmatpush.msra.mxu0 0.0
      %1358 = vmatpush.msra.mxu0 0.0
      %1359 = vmatpush.msra.mxu0 0.0
      %1360 = vmatpush.msra.mxu0 0.0
      %1361 = vmatpush.msra.mxu0 0.0
      %1362 = vmatpush.msra.mxu0 0.0
      %1363 = vmatpush.msra.mxu0 0.0
      %1364 = vmatpush.msra.mxu0 %v1348
      %1365 = vmatpush.msra.mxu0 %v1338
      %1366 = vmatmul.f32.gmra.mxu0 %v1343
      %v1367 = vpop.f32.mrf.mxu0
      %v1368 = vadd.f32 0.0, %v1367
      %1369 = vmatmul.f32.gmra.mxu0 %v1346
      %v1370 = vpop.f32.mrf.mxu0
      %v1371 = vadd.f32 0.0, %v1370
      %1372 = vdwg.mxu0
      %v1374 = vsel %vm784, %v1368, 0
      %v1377 = vsel %vm784, %v1371, 0
      %v1380 = vsel %vm1034, %v665, 0
      %1382 = vmatpush.msra.mxu0 0.0
      %1383 = vmatpush.msra.mxu0 0.0
      %1384 = vmatpush.msra.mxu0 0.0
      %1385 = vmatpush.msra.mxu0 0.0
      %1386 = vmatpush.msra.mxu0 0.0
      %1387 = vmatpush.msra.mxu0 0.0
      %1388 = vmatpush.msra.mxu0 0.0
      %1389 = vmatpush.msra.mxu0 0.0
      %1390 = vmatpush.msra.mxu0 0.0
      %1391 = vmatpush.msra.mxu0 0.0
      %1392 = vmatpush.msra.mxu0 0.0
      %1393 = vmatpush.msra.mxu0 0.0
      %1394 = vmatpush.msra.mxu0 0.0
      %1395 = vmatpush.msra.mxu0 0.0
      %1396 = vmatpush.msra.mxu0 0.0
      %1397 = vmatpush.msra.mxu0 %v1380
      %1398 = vmatmul.f32.gmra.mxu0 %v1374
      %v1399 = vpop.f32.mrf.mxu0
      %v1400 = vadd.f32 0.0, %v1399
      %1401 = vmatmul.f32.gmra.mxu0 %v1377
      %v1402 = vpop.f32.mrf.mxu0
      %v1403 = vadd.f32 0.0, %v1402
      %1404 = vdwg.mxu0
      %v1405 = vadd.f32 %v1248, %v1400
      %v1406 = vadd.f32 %v1249, %v1403
      %v1407 = vadd.f32 %v655, %v1405
      %v1408 = vadd.f32 %v656, %v1406
      %v1410 = vperm.slane %v666, 0
      %v1412 = vadd.f32 %v1407, %v1410
      %v1413 = vadd.f32 %v1408, %v1410
      %v1414 = vsel %vm681, %v1412, 0.0
      %1415 = vadd.xlane.f32.xlu0 %v1414
      %v1416 = vpop.xlane.xlu0 %1415
      %v1417 = vsel %vm685, %v1413, 0.0
      %1418 = vadd.xlane.f32.xlu0 %v1417
      %v1419 = vpop.xlane.xlu0 %1418
      %v1420 = vmul.f32 %v1416, %v695
      %v1421 = vmul.f32 %v1419, %v695
      %v1422 = vsub.f32 %v1412, %v1420
      %v1423 = vsub.f32 %v1413, %v1421
      %v1424 = vmul.f32 %v1422, %v1422
      %v1425 = vmul.f32 %v1423, %v1423
      %v1426 = vsel %vm681, %v1424, 0.0
      %1427 = vadd.xlane.f32.xlu0 %v1426
      %v1428 = vpop.xlane.xlu0 %1427
      %v1429 = vsel %vm685, %v1425, 0.0
      %1430 = vadd.xlane.f32.xlu0 %v1429
      %v1431 = vpop.xlane.xlu0 %1430
      %v1432 = vmul.f32 %v1428, %v695
      %v1433 = vmul.f32 %v1431, %v695
      %v1434 = vadd.f32 %v1432, 1e-05
      %v1435 = vadd.f32 %v1433, 1e-05
      %v1436 = vrsqrt.pop %v1434
      %v1437 = vmul.f32 %v1436, %v1434
      %v1438 = vmul.f32 %v1437, %v1436
      %v1439 = vmul.f32 0.5, %v1438
      %v1440 = vsub.f32 1.5, %v1439
      %v1441 = vmul.f32 %v1436, %v1440
      %vm1442 = vweird.f32 %v1434
      %vm1443 = vweird.f32 %v1436
      %vm1444 = vmor %vm1442, %vm1443
      %v1445 = vsel %vm1444, %v1436, %v1441
      %v1446 = vrsqrt.pop %v1435
      %v1447 = vmul.f32 %v1446, %v1435
      %v1448 = vmul.f32 %v1447, %v1446
      %v1449 = vmul.f32 0.5, %v1448
      %v1450 = vsub.f32 1.5, %v1449
      %v1451 = vmul.f32 %v1446, %v1450
      %vm1452 = vweird.f32 %v1435
      %vm1453 = vweird.f32 %v1446
      %vm1454 = vmor %vm1452, %vm1453
      %v1455 = vsel %vm1454, %v1446, %v1451
      %v1456 = vmul.f32 %v1422, %v1445
      %v1457 = vmul.f32 %v1423, %v1455
      %v1459 = vperm.slane %v667, 0
      %v1461 = vmul.f32 %v1456, %v1459
      %v1462 = vmul.f32 %v1457, %v1459
      %v1464 = vperm.slane %v668, 0
      %v1466 = vadd.f32 %v1461, %v1464
      %v1467 = vadd.f32 %v1462, %v1464
      %v1469 = vperm.slane %v671, 0
      %v1472 = vsel %vm681, %v1466, 0
      %v1475 = vsel %vm681, %v1467, 0
      %1477 = vmatpush.msra.mxu0 0.0
      %1478 = vmatpush.msra.mxu0 0.0
      %1479 = vmatpush.msra.mxu0 0.0
      %1480 = vmatpush.msra.mxu0 0.0
      %1481 = vmatpush.msra.mxu0 0.0
      %1482 = vmatpush.msra.mxu0 0.0
      %1483 = vmatpush.msra.mxu0 0.0
      %1484 = vmatpush.msra.mxu0 0.0
      %1485 = vmatpush.msra.mxu0 0.0
      %1486 = vmatpush.msra.mxu0 0.0
      %1487 = vmatpush.msra.mxu0 0.0
      %1488 = vmatpush.msra.mxu0 0.0
      %1489 = vmatpush.msra.mxu0 0.0
      %1490 = vmatpush.msra.mxu0 0.0
      %1491 = vmatpush.msra.mxu0 %v670
      %1492 = vmatpush.msra.mxu0 %v669
      %1493 = vmatmul.f32.gmra.mxu0 %v1472
      %v1494 = vpop.f32.mrf.mxu0
      %v1495 = vadd.f32 %v1469, %v1494
      %1496 = vmatmul.f32.gmra.mxu0 %v1475
      %v1497 = vpop.f32.mrf.mxu0
      %v1498 = vadd.f32 %v1469, %v1497
      %1499 = vdwg.mxu0
      %v1500 = vmul.f32 %v1495, 0.5
      %v1501 = vmul.f32 %v1498, 0.5
      %v1502 = vmul.f32 %v1495, 0.70710677
      %v1503 = vmul.f32 %v1498, 0.70710677
      %v1504 = vand.u32 2147483647, %v1502
      %v1505 = vand.u32 2147483647, %v1503
      %v1506 = vmul.f32 %v1504, 0.3275911
      %v1507 = vmul.f32 %v1505, 0.3275911
      %v1508 = vadd.f32 %v1506, 1.0
      %v1509 = vadd.f32 %v1507, 1.0
      %v1510 = vrcp.pop %v1508
      %v1511 = vmul.f32 %v1508, %v1510
      %v1512 = vsub.f32 1.0, %v1511
      %v1513 = vmul.f32 %v1510, %v1512
      %v1514 = vadd.f32 %v1510, %v1513
      %vm1515 = vweird.f32 %v1508
      %vm1516 = vweird.f32 %v1510
      %vm1517 = vmor %vm1515, %vm1516
      %v1518 = vsel %vm1517, %v1510, %v1514
      %v1519 = vand.u32 2147483647, %v1508
      %vm1520 = vcmp.eq.f32.partialorder %v1519, 8.507059e+37
      %v1521 = vand.u32 %v1508, 2147483648
      %v1522 = vor.u32 1.1754944e-38, %v1521
      %v1523 = vsel %vm1520, %v1522, %v1518
      %v1524 = vmul.f32 1.0, %v1523
      %v1525 = vrcp.pop %v1509
      %v1526 = vmul.f32 %v1509, %v1525
      %v1527 = vsub.f32 1.0, %v1526
      %v1528 = vmul.f32 %v1525, %v1527
      %v1529 = vadd.f32 %v1525, %v1528
      %vm1530 = vweird.f32 %v1509
      %vm1531 = vweird.f32 %v1525
      %vm1532 = vmor %vm1530, %vm1531
      %v1533 = vsel %vm1532, %v1525, %v1529
      %v1534 = vand.u32 2147483647, %v1509
      %vm1535 = vcmp.eq.f32.partialorder %v1534, 8.507059e+37
      %v1536 = vand.u32 %v1509, 2147483648
      %v1537 = vor.u32 1.1754944e-38, %v1536
      %v1538 = vsel %vm1535, %v1537, %v1533
      %v1539 = vmul.f32 1.0, %v1538
      %v1540 = vmul.f32 %v1524, 1.0614054
      %v1541 = vmul.f32 %v1539, 1.0614054
      %v1542 = vadd.f32 %v1540, -1.4531521
      %v1543 = vadd.f32 %v1541, -1.4531521
      %v1544 = vmul.f32 %v1542, %v1524
      %v1545 = vmul.f32 %v1543, %v1539
      %v1546 = vadd.f32 %v1544, 1.4214138
      %v1547 = vadd.f32 %v1545, 1.4214138
      %v1548 = vmul.f32 %v1546, %v1524
      %v1549 = vmul.f32 %v1547, %v1539
      %v1550 = vadd.f32 %v1548, -0.28449672
      %v1551 = vadd.f32 %v1549, -0.28449672
      %v1552 = vmul.f32 %v1550, %v1524
      %v1553 = vmul.f32 %v1551, %v1539
      %v1554 = vadd.f32 %v1552, 0.2548296
      %v1555 = vadd.f32 %v1553, 0.2548296
      %v1556 = vmul.f32 %v1554, %v1524
      %v1557 = vmul.f32 %v1555, %v1539
      %v1558 = vsub.f32 0.0, %v1504
      %v1559 = vsub.f32 0.0, %v1505
      %v1560 = vmul.f32 %v1558, %v1504
      %v1561 = vmul.f32 %v1559, %v1505
      %v1562 = vmul.f32 %v1560, 1.442695
      %v1563 = vpow.pop %v1562
      %v1564 = vmul.f32 %v1561, 1.442695
      %v1565 = vpow.pop %v1564
      %v1566 = vmul.f32 %v1556, %v1563
      %v1567 = vmul.f32 %v1557, %v1565
      %v1568 = vsub.f32 1.0, %v1566
      %v1569 = vsub.f32 1.0, %v1567
      %vm1570 = vcmp.ge.f32.partialorder %v1502, 0.0
      %vm1571 = vcmp.ge.f32.partialorder %v1503, 0.0
      %v1572 = vsub.f32 0.0, %v1568
      %v1573 = vsub.f32 0.0, %v1569
      %v1574 = vsel %vm1570, %v1568, %v1572
      %v1575 = vsel %vm1571, %v1569, %v1573
      %v1576 = vadd.f32 %v1574, 1.0
      %v1577 = vadd.f32 %v1575, 1.0
      %v1578 = vmul.f32 %v1500, %v1576
      %v1579 = vmul.f32 %v1501, %v1577
      %vm1580 = vcmask 523264
      %v1582 = vsel %vm1580, %v1578, 0
      %v1585 = vsel %vm1580, %v1579, 0
      %1587 = vmatpush.msra.mxu0 0.0
      %1588 = vmatpush.msra.mxu0 0.0
      %1589 = vmatpush.msra.mxu0 0.0
      %1590 = vmatpush.msra.mxu0 0.0
      %1591 = vmatpush.msra.mxu0 0.0
      %1592 = vmatpush.msra.mxu0 0.0
      %1593 = vmatpush.msra.mxu0 0.0
      %1594 = vmatpush.msra.mxu0 0.0
      %1595 = vmatpush.msra.mxu0 %v679
      %1596 = vmatpush.msra.mxu0 %v678
      %1597 = vmatpush.msra.mxu0 %v677
      %1598 = vmatpush.msra.mxu0 %v676
      %1599 = vmatpush.msra.mxu0 %v675
      %1600 = vmatpush.msra.mxu0 %v674
      %1601 = vmatpush.msra.mxu0 %v673
      %1602 = vmatpush.msra.mxu0 %v672
      %1603 = vmatmul.f32.gmra.mxu0 %v1582
      %v1604 = vpop.f32.mrf.mxu0
      %v1605 = vadd.f32 0.0, %v1604
      %1606 = vmatmul.f32.gmra.mxu0 %v1585
      %v1607 = vpop.f32.mrf.mxu0
      %v1608 = vadd.f32 0.0, %v1607
      %1609 = vdwg.mxu0
      %v1610 = vadd.f32 %v1412, %v1605
      %v1611 = vadd.f32 %v1413, %v1608
      %v1613 = vperm.slane %v680, 0
      %v1615 = vadd.f32 %v1610, %v1613
      %v1616 = vadd.f32 %v1611, %v1613
      %1617 = vst.msk [vmem:[%s644] sm:$0xff] %vm681, %v1615
      %1618 = vst.msk [vmem:[%s644 + $0x8] sm:$0x1] %vm685, %v1616
      %p1619 = scmp.lt.s32.totalorder %s28, 1
      %s1620 = scalar_select %p1619, %s28, 1
      %s1621 = smul.addr %s1620, 2
      %s1622 = smul.addr %s1621, 8
      %s1623 = scalar_lea.vmem %s13, %s1622
      // Predicated region
      $region77: #{forward.6} parent=71 // pred_check
        %p1624 = pneg %p392
      $region78: #{forward.6} parent=71 // pred_check_branch
        %1626 = sbr.rel (%p1624) target = $region80
      $region79: #{forward.6} parent=71 // pred_region
        _
      $region80: #{forward.6} parent=71 // pred_fallthru
        _
    $region72: #{forward.6} parent=5 // pred_fallthru
      _
    %p1627 = scmp.le.s32.totalorder 2, %s19
    // Predicated region
    $region81: #{forward.6} parent=5 // pred_check
      %p1628 = pneg %p1627
    $region82: #{forward.6} parent=5 // pred_check_branch
      %1630 = sbr.rel (%p1628) target = $region84
    $region83: #{forward.6} parent=5 // pred_region
      %s1631 = ssub.s32 %s19, 2
      // Predicated region
      $region85: #{forward.6} parent=83 // pred_check
        %p1632 = pneg %p398
      $region86: #{forward.6} parent=83 // pred_check_branch
        %1634 = sbr.rel (%p1632) target = $region88
      $region87: #{forward.6} parent=83 // pred_region
        %p1635 = scmp.lt.s32.totalorder %s30, 1
        %s1636 = scalar_select %p1635, %s30, 1
        %s1637 = smul.addr %s1636, 2
        %s1638 = smul.addr %s1637, 8
        %s1639 = scalar_lea.vmem %s13, %s1638
      $region88: #{forward.6} parent=83 // pred_fallthru
        _
    $region84: #{forward.6} parent=5 // pred_fallthru
      _
  $region6: #{forward.6} parent=0 // loop_footer
    %s23 = sadd.s32 1, %s19
  $region7: #{forward.6} parent=0 // loop_footer_branch
    %18 = sbr.rel target = $region3
  $region8: #{forward.6} parent=0 // loop_exit
    _

</llo_original>
